<compile_context>
chip_gen: v5e
topology: v5e:2x2
jax: 0.10.0
libtpu: 0.0.40
codegen_flags: <defaults>
</compile_context>

<pallas_src>
import jax
import jax.numpy as jnp
from jax.experimental import pallas as pl
from jax.experimental.pallas import tpu as pltpu

HIDDEN = 10            # conv out channels / hidden_units
OUT = 10               # output_shape
H = W = 28             # input spatial
KH = KW = 3            # conv kernel
OH = OW = 26           # conv output spatial (VALID, stride 1)
K = HIDDEN * OH * OW   # 6760 true flattened features

PW = 32                # padded row width shared by input and conv output
PH = H + 1             # one extra zero row keeps the last shifted slice in bounds
XF = PH * PW           # 928: flattened padded input length per image
PP = OH * PW           # 832: flattened padded conv-output length per channel
                       # (columns 26..31 of every conv-output row are garbage and
                       #  are killed by zero rows in the padded FC weight)


def fused_kernel(x_ref, wt_ref, cb_ref, wfc_ref, fb_ref, o_ref):
    """Fused conv3x3 + ReLU + flatten + Linear for one batch tile.

    x_ref:   (B_TILE, 928)       VMEM  zero-padded images (29x32 rows, flattened)
    wt_ref:  (9, HIDDEN)         SMEM  conv taps, wt[di*3+dj, c]
    cb_ref:  (HIDDEN,)           SMEM  conv bias
    wfc_ref: (HIDDEN, 832, OUT)  VMEM  permuted + zero-padded fc weight
    fb_ref:  (1, OUT)            VMEM  fc bias
    o_ref:   (B_TILE, OUT)       VMEM
    """
    b_tile = x_ref.shape[0]

    # 9 shifted "im2col" views.  Input rows and conv-output rows share the same
    # row stride (PW=32), so each tap is a single contiguous static slice.
    patches = [x_ref[:, di * PW + dj: di * PW + dj + PP]
               for di in range(KH) for dj in range(KW)]          # 9 x (B_TILE, 832)

    y = jnp.broadcast_to(fb_ref[...], (b_tile, OUT))             # (B_TILE, OUT) f32
    for c in range(HIDDEN):                                      # static loop, 10 ch
        # 9-tap shift-add conv (VPU), lane-dense 832-wide accumulator.
        acc = cb_ref[c] + wt_ref[0, c] * patches[0]
        for t in range(1, KH * KW):
            acc = acc + wt_ref[t, c] * patches[t]
        act = jnp.maximum(acc, 0.0)                              # ReLU, (B_TILE, 832)
        # FC contribution of this channel: MXU matmul, M=B_TILE, K=832, N=10.
        y = y + jnp.dot(act, wfc_ref[c], preferred_element_type=jnp.float32)
    o_ref[...] = y


def _prepare_weights(conv_w, conv_b, fc_w_t, fc_b):
    """One-time host-side weight layout prep matching the kernel's data layout."""
    # conv taps: (9, HIDDEN) with taps[di*3+dj, c] = conv_w[c, 0, di, dj]
    w_taps = conv_w.reshape(HIDDEN, KH * KW).T
    # fc weight rows are in torch flatten order: feature = c*676 + i*26 + j.
    # Re-lay them as c*832 + i*32 + j and zero the 6 padded columns per row so
    # the kernel's garbage columns contribute exactly 0.
    wfc = fc_w_t.reshape(HIDDEN, OH, OW, OUT)
    wfc = jnp.pad(wfc, ((0, 0), (0, 0), (0, PW - OW), (0, 0)))
    wfc = wfc.reshape(HIDDEN, PP, OUT)
    return w_taps, conv_b, wfc, fc_b.reshape(1, OUT)


def my_model1_forward(x, conv_w, conv_b, fc_w_t, fc_b):
    n = x.shape[0]
    b_tile = n if n <= 256 else 256
    n_pad = ((n + b_tile - 1) // b_tile) * b_tile

    # Lane-dense input layout: zero-pad each 28x28 image to 29x32 and flatten.
    x_img = x.reshape(n, H, W)
    x_img = jnp.pad(x_img, ((0, n_pad - n), (0, PH - H), (0, PW - W)))
    x_flat = x_img.reshape(n_pad, XF)

    w_taps, cb, wfc, fb = _prepare_weights(conv_w, conv_b, fc_w_t, fc_b)

    out = pl.pallas_call(
        fused_kernel,
        out_shape=jax.ShapeDtypeStruct((n_pad, OUT), jnp.float32),
        grid=(n_pad // b_tile,),
        in_specs=[
            pl.BlockSpec((b_tile, XF), lambda i: (i, 0)),                 # images
            pl.BlockSpec(memory_space=pltpu.MemorySpace.SMEM),            # conv taps
            pl.BlockSpec(memory_space=pltpu.MemorySpace.SMEM),            # conv bias
            pl.BlockSpec((HIDDEN, PP, OUT), lambda i: (0, 0, 0)),         # fc weight
            pl.BlockSpec((1, OUT), lambda i: (0, 0)),                     # fc bias
        ],
        out_specs=pl.BlockSpec((b_tile, OUT), lambda i: (i, 0)),
        compiler_params=pltpu.CompilerParams(
            dimension_semantics=("parallel",),
            vmem_limit_bytes=32 * 1024 * 1024,
        ),
    )(x_flat, w_taps, cb, wfc, fb)
    return out[:n]


def _reference(x, conv_w, conv_b, fc_w_t, fc_b):
    y = jax.lax.conv_general_dilated(
        x, conv_w, window_strides=(1, 1), padding="VALID",
        dimension_numbers=("NCHW", "OIHW", "NCHW"),
        precision=jax.lax.Precision.HIGHEST,
    ) + conv_b.reshape(1, -1, 1, 1)
    y = jnp.maximum(y, 0.0).reshape(x.shape[0], -1)
    return jnp.dot(y, fc_w_t, precision=jax.lax.Precision.HIGHEST) + fc_b[None, :]


if __name__ == "__main__":
    key = jax.random.PRNGKey(0)
    k_x, k_cw, k_cb, k_fw, k_fb = jax.random.split(key, 5)

    N = 2
    x = jax.random.normal(k_x, (N, 1, H, W), dtype=jnp.float32)

    # Deterministic parameter init (shapes from MyModel1.__init__).
    conv_w = jax.random.normal(k_cw, (HIDDEN, 1, KH, KW), dtype=jnp.float32) * (1.0 / 3.0)
    conv_b = jax.random.normal(k_cb, (HIDDEN,), dtype=jnp.float32) * 0.1
    # torch Linear weight is (OUT, K); we keep its transpose (K, OUT).
    fc_w_t = jax.random.normal(k_fw, (K, OUT), dtype=jnp.float32) * (1.0 / jnp.sqrt(K))
    fc_b = jax.random.normal(k_fb, (OUT,), dtype=jnp.float32) * 0.1

    fwd = jax.jit(my_model1_forward)
    out = jax.block_until_ready(fwd(x, conv_w, conv_b, fc_w_t, fc_b))
    assert out.shape == (N, OUT) and out.dtype == jnp.float32

    ref = _reference(x, conv_w, conv_b, fc_w_t, fc_b)
    max_diff = jnp.max(jnp.abs(out - ref))
    if not jnp.allclose(out, ref, rtol=1e-4, atol=1e-4):
        raise AssertionError(f"mismatch: max abs diff {max_diff}")

    print("KERNEL_OK")
</pallas_src>

<mosaic_0001>
module attributes {stable_mosaic.version = 11 : i64} {
  func.func @fused_kernel(%arg0: i32, %arg1: memref<2x928xf32, #tpu.memory_space<vmem>>, %arg2: memref<9x10xf32, #tpu.memory_space<smem>>, %arg3: memref<10xf32, #tpu.memory_space<smem>>, %arg4: memref<10x832x10xf32, #tpu.memory_space<vmem>>, %arg5: memref<1x10xf32, #tpu.memory_space<vmem>>, %arg6: memref<2x10xf32, #tpu.memory_space<vmem>>) attributes {dimension_semantics = [#tpu.dimension_semantics<parallel>], iteration_bounds = array<i64: 1>, scalar_prefetch = 0 : i64, scratch_operands = 0 : i64, tpu.core_type = #tpu.core_type<tc>, window_params = [{transform_indices = @transform_0, window_bounds = array<i64: 2, 928>}, {transform_indices = @transform_1, window_bounds = array<i64: 9, 10>}, {transform_indices = @transform_2, window_bounds = array<i64: 10>}, {pipeline_mode = #tpu.pipeline_mode<synchronous>, transform_indices = @transform_3, window_bounds = array<i64: 10, 832, 10>}, {pipeline_mode = #tpu.pipeline_mode<synchronous>, transform_indices = @transform_4, window_bounds = array<i64: 1, 10>}, {transform_indices = @transform_5, window_bounds = array<i64: 2, 10>}]} {
    %c0 = arith.constant 0 : index
    %c0_0 = arith.constant 0 : index
    %0 = vector.load %arg1[%c0, %c0_0] : memref<2x928xf32, #tpu.memory_space<vmem>>, vector<2x832xf32>
    %c0_1 = arith.constant 0 : index
    %c1 = arith.constant 1 : index
    %1 = vector.load %arg1[%c0_1, %c1] : memref<2x928xf32, #tpu.memory_space<vmem>>, vector<2x832xf32>
    %c0_2 = arith.constant 0 : index
    %c2 = arith.constant 2 : index
    %2 = vector.load %arg1[%c0_2, %c2] : memref<2x928xf32, #tpu.memory_space<vmem>>, vector<2x832xf32>
    %c0_3 = arith.constant 0 : index
    %c32 = arith.constant 32 : index
    %3 = vector.load %arg1[%c0_3, %c32] : memref<2x928xf32, #tpu.memory_space<vmem>>, vector<2x832xf32>
    %c0_4 = arith.constant 0 : index
    %c33 = arith.constant 33 : index
    %4 = vector.load %arg1[%c0_4, %c33] : memref<2x928xf32, #tpu.memory_space<vmem>>, vector<2x832xf32>
    %c0_5 = arith.constant 0 : index
    %c34 = arith.constant 34 : index
    %5 = vector.load %arg1[%c0_5, %c34] : memref<2x928xf32, #tpu.memory_space<vmem>>, vector<2x832xf32>
    %c0_6 = arith.constant 0 : index
    %c64 = arith.constant 64 : index
    %6 = vector.load %arg1[%c0_6, %c64] : memref<2x928xf32, #tpu.memory_space<vmem>>, vector<2x832xf32>
    %c0_7 = arith.constant 0 : index
    %c65 = arith.constant 65 : index
    %7 = vector.load %arg1[%c0_7, %c65] : memref<2x928xf32, #tpu.memory_space<vmem>>, vector<2x832xf32>
    %c0_8 = arith.constant 0 : index
    %c66 = arith.constant 66 : index
    %8 = vector.load %arg1[%c0_8, %c66] : memref<2x928xf32, #tpu.memory_space<vmem>>, vector<2x832xf32>
    %c0_9 = arith.constant 0 : index
    %c0_10 = arith.constant 0 : index
    %9 = vector.load %arg5[%c0_9, %c0_10] : memref<1x10xf32, #tpu.memory_space<vmem>>, vector<1x10xf32>
    %10 = vector.shape_cast %9 : vector<1x10xf32> to vector<1x10xf32>
    %11 = vector.broadcast %10 : vector<1x10xf32> to vector<2x10xf32>
    %c0_11 = arith.constant 0 : index
    %12 = memref.load %arg3[%c0_11] : memref<10xf32, #tpu.memory_space<smem>>
    %c0_12 = arith.constant 0 : index
    %c0_13 = arith.constant 0 : index
    %13 = memref.load %arg2[%c0_12, %c0_13] : memref<9x10xf32, #tpu.memory_space<smem>>
    %14 = vector.broadcast %13 : f32 to vector<2x832xf32>
    %15 = arith.mulf %14, %0 : vector<2x832xf32>
    %16 = vector.broadcast %12 : f32 to vector<2x832xf32>
    %17 = arith.addf %16, %15 : vector<2x832xf32>
    %c1_14 = arith.constant 1 : index
    %c0_15 = arith.constant 0 : index
    %18 = memref.load %arg2[%c1_14, %c0_15] : memref<9x10xf32, #tpu.memory_space<smem>>
    %19 = vector.broadcast %18 : f32 to vector<2x832xf32>
    %20 = arith.mulf %19, %1 : vector<2x832xf32>
    %21 = arith.addf %17, %20 : vector<2x832xf32>
    %c2_16 = arith.constant 2 : index
    %c0_17 = arith.constant 0 : index
    %22 = memref.load %arg2[%c2_16, %c0_17] : memref<9x10xf32, #tpu.memory_space<smem>>
    %23 = vector.broadcast %22 : f32 to vector<2x832xf32>
    %24 = arith.mulf %23, %2 : vector<2x832xf32>
    %25 = arith.addf %21, %24 : vector<2x832xf32>
    %c3 = arith.constant 3 : index
    %c0_18 = arith.constant 0 : index
    %26 = memref.load %arg2[%c3, %c0_18] : memref<9x10xf32, #tpu.memory_space<smem>>
    %27 = vector.broadcast %26 : f32 to vector<2x832xf32>
    %28 = arith.mulf %27, %3 : vector<2x832xf32>
    %29 = arith.addf %25, %28 : vector<2x832xf32>
    %c4 = arith.constant 4 : index
    %c0_19 = arith.constant 0 : index
    %30 = memref.load %arg2[%c4, %c0_19] : memref<9x10xf32, #tpu.memory_space<smem>>
    %31 = vector.broadcast %30 : f32 to vector<2x832xf32>
    %32 = arith.mulf %31, %4 : vector<2x832xf32>
    %33 = arith.addf %29, %32 : vector<2x832xf32>
    %c5 = arith.constant 5 : index
    %c0_20 = arith.constant 0 : index
    %34 = memref.load %arg2[%c5, %c0_20] : memref<9x10xf32, #tpu.memory_space<smem>>
    %35 = vector.broadcast %34 : f32 to vector<2x832xf32>
    %36 = arith.mulf %35, %5 : vector<2x832xf32>
    %37 = arith.addf %33, %36 : vector<2x832xf32>
    %c6 = arith.constant 6 : index
    %c0_21 = arith.constant 0 : index
    %38 = memref.load %arg2[%c6, %c0_21] : memref<9x10xf32, #tpu.memory_space<smem>>
    %39 = vector.broadcast %38 : f32 to vector<2x832xf32>
    %40 = arith.mulf %39, %6 : vector<2x832xf32>
    %41 = arith.addf %37, %40 : vector<2x832xf32>
    %c7 = arith.constant 7 : index
    %c0_22 = arith.constant 0 : index
    %42 = memref.load %arg2[%c7, %c0_22] : memref<9x10xf32, #tpu.memory_space<smem>>
    %43 = vector.broadcast %42 : f32 to vector<2x832xf32>
    %44 = arith.mulf %43, %7 : vector<2x832xf32>
    %45 = arith.addf %41, %44 : vector<2x832xf32>
    %c8 = arith.constant 8 : index
    %c0_23 = arith.constant 0 : index
    %46 = memref.load %arg2[%c8, %c0_23] : memref<9x10xf32, #tpu.memory_space<smem>>
    %47 = vector.broadcast %46 : f32 to vector<2x832xf32>
    %48 = arith.mulf %47, %8 : vector<2x832xf32>
    %49 = arith.addf %45, %48 : vector<2x832xf32>
    %cst = arith.constant 0.000000e+00 : f32
    %50 = vector.broadcast %cst : f32 to vector<2x832xf32>
    %51 = arith.maximumf %49, %50 : vector<2x832xf32>
    %c0_24 = arith.constant 0 : index
    %c0_25 = arith.constant 0 : index
    %c0_26 = arith.constant 0 : index
    %52 = vector.load %arg4[%c0_24, %c0_25, %c0_26] : memref<10x832x10xf32, #tpu.memory_space<vmem>>, vector<1x832x10xf32>
    %53 = vector.shape_cast %52 : vector<1x832x10xf32> to vector<832x10xf32>
    %cst_27 = arith.constant dense<0.000000e+00> : vector<2x10xf32>
    %54 = tpu.matmul %51, %53, %cst_27 {dimension_numbers = #tpu.dot_dimension_numbers<[1], [0], [0], [1], [0, 0, 1, 1], [], []>} : vector<2x832xf32>, vector<832x10xf32>, vector<2x10xf32> -> vector<2x10xf32>
    %55 = arith.addf %11, %54 : vector<2x10xf32>
    %c1_28 = arith.constant 1 : index
    %56 = memref.load %arg3[%c1_28] : memref<10xf32, #tpu.memory_space<smem>>
    %c0_29 = arith.constant 0 : index
    %c1_30 = arith.constant 1 : index
    %57 = memref.load %arg2[%c0_29, %c1_30] : memref<9x10xf32, #tpu.memory_space<smem>>
    %58 = vector.broadcast %57 : f32 to vector<2x832xf32>
    %59 = arith.mulf %58, %0 : vector<2x832xf32>
    %60 = vector.broadcast %56 : f32 to vector<2x832xf32>
    %61 = arith.addf %60, %59 : vector<2x832xf32>
    %c1_31 = arith.constant 1 : index
    %c1_32 = arith.constant 1 : index
    %62 = memref.load %arg2[%c1_31, %c1_32] : memref<9x10xf32, #tpu.memory_space<smem>>
    %63 = vector.broadcast %62 : f32 to vector<2x832xf32>
    %64 = arith.mulf %63, %1 : vector<2x832xf32>
    %65 = arith.addf %61, %64 : vector<2x832xf32>
    %c2_33 = arith.constant 2 : index
    %c1_34 = arith.constant 1 : index
    %66 = memref.load %arg2[%c2_33, %c1_34] : memref<9x10xf32, #tpu.memory_space<smem>>
    %67 = vector.broadcast %66 : f32 to vector<2x832xf32>
    %68 = arith.mulf %67, %2 : vector<2x832xf32>
    %69 = arith.addf %65, %68 : vector<2x832xf32>
    %c3_35 = arith.constant 3 : index
    %c1_36 = arith.constant 1 : index
    %70 = memref.load %arg2[%c3_35, %c1_36] : memref<9x10xf32, #tpu.memory_space<smem>>
    %71 = vector.broadcast %70 : f32 to vector<2x832xf32>
    %72 = arith.mulf %71, %3 : vector<2x832xf32>
    %73 = arith.addf %69, %72 : vector<2x832xf32>
    %c4_37 = arith.constant 4 : index
    %c1_38 = arith.constant 1 : index
    %74 = memref.load %arg2[%c4_37, %c1_38] : memref<9x10xf32, #tpu.memory_space<smem>>
    %75 = vector.broadcast %74 : f32 to vector<2x832xf32>
    %76 = arith.mulf %75, %4 : vector<2x832xf32>
    %77 = arith.addf %73, %76 : vector<2x832xf32>
    %c5_39 = arith.constant 5 : index
    %c1_40 = arith.constant 1 : index
    %78 = memref.load %arg2[%c5_39, %c1_40] : memref<9x10xf32, #tpu.memory_space<smem>>
    %79 = vector.broadcast %78 : f32 to vector<2x832xf32>
    %80 = arith.mulf %79, %5 : vector<2x832xf32>
    %81 = arith.addf %77, %80 : vector<2x832xf32>
    %c6_41 = arith.constant 6 : index
    %c1_42 = arith.constant 1 : index
    %82 = memref.load %arg2[%c6_41, %c1_42] : memref<9x10xf32, #tpu.memory_space<smem>>
    %83 = vector.broadcast %82 : f32 to vector<2x832xf32>
    %84 = arith.mulf %83, %6 : vector<2x832xf32>
    %85 = arith.addf %81, %84 : vector<2x832xf32>
    %c7_43 = arith.constant 7 : index
    %c1_44 = arith.constant 1 : index
    %86 = memref.load %arg2[%c7_43, %c1_44] : memref<9x10xf32, #tpu.memory_space<smem>>
    %87 = vector.broadcast %86 : f32 to vector<2x832xf32>
    %88 = arith.mulf %87, %7 : vector<2x832xf32>
    %89 = arith.addf %85, %88 : vector<2x832xf32>
    %c8_45 = arith.constant 8 : index
    %c1_46 = arith.constant 1 : index
    %90 = memref.load %arg2[%c8_45, %c1_46] : memref<9x10xf32, #tpu.memory_space<smem>>
    %91 = vector.broadcast %90 : f32 to vector<2x832xf32>
    %92 = arith.mulf %91, %8 : vector<2x832xf32>
    %93 = arith.addf %89, %92 : vector<2x832xf32>
    %cst_47 = arith.constant 0.000000e+00 : f32
    %94 = vector.broadcast %cst_47 : f32 to vector<2x832xf32>
    %95 = arith.maximumf %93, %94 : vector<2x832xf32>
    %c1_48 = arith.constant 1 : index
    %c0_49 = arith.constant 0 : index
    %c0_50 = arith.constant 0 : index
    %96 = vector.load %arg4[%c1_48, %c0_49, %c0_50] : memref<10x832x10xf32, #tpu.memory_space<vmem>>, vector<1x832x10xf32>
    %97 = vector.shape_cast %96 : vector<1x832x10xf32> to vector<832x10xf32>
    %cst_51 = arith.constant dense<0.000000e+00> : vector<2x10xf32>
    %98 = tpu.matmul %95, %97, %cst_51 {dimension_numbers = #tpu.dot_dimension_numbers<[1], [0], [0], [1], [0, 0, 1, 1], [], []>} : vector<2x832xf32>, vector<832x10xf32>, vector<2x10xf32> -> vector<2x10xf32>
    %99 = arith.addf %55, %98 : vector<2x10xf32>
    %c2_52 = arith.constant 2 : index
    %100 = memref.load %arg3[%c2_52] : memref<10xf32, #tpu.memory_space<smem>>
    %c0_53 = arith.constant 0 : index
    %c2_54 = arith.constant 2 : index
    %101 = memref.load %arg2[%c0_53, %c2_54] : memref<9x10xf32, #tpu.memory_space<smem>>
    %102 = vector.broadcast %101 : f32 to vector<2x832xf32>
    %103 = arith.mulf %102, %0 : vector<2x832xf32>
    %104 = vector.broadcast %100 : f32 to vector<2x832xf32>
    %105 = arith.addf %104, %103 : vector<2x832xf32>
    %c1_55 = arith.constant 1 : index
    %c2_56 = arith.constant 2 : index
    %106 = memref.load %arg2[%c1_55, %c2_56] : memref<9x10xf32, #tpu.memory_space<smem>>
    %107 = vector.broadcast %106 : f32 to vector<2x832xf32>
    %108 = arith.mulf %107, %1 : vector<2x832xf32>
    %109 = arith.addf %105, %108 : vector<2x832xf32>
    %c2_57 = arith.constant 2 : index
    %c2_58 = arith.constant 2 : index
    %110 = memref.load %arg2[%c2_57, %c2_58] : memref<9x10xf32, #tpu.memory_space<smem>>
    %111 = vector.broadcast %110 : f32 to vector<2x832xf32>
    %112 = arith.mulf %111, %2 : vector<2x832xf32>
    %113 = arith.addf %109, %112 : vector<2x832xf32>
    %c3_59 = arith.constant 3 : index
    %c2_60 = arith.constant 2 : index
    %114 = memref.load %arg2[%c3_59, %c2_60] : memref<9x10xf32, #tpu.memory_space<smem>>
    %115 = vector.broadcast %114 : f32 to vector<2x832xf32>
    %116 = arith.mulf %115, %3 : vector<2x832xf32>
    %117 = arith.addf %113, %116 : vector<2x832xf32>
    %c4_61 = arith.constant 4 : index
    %c2_62 = arith.constant 2 : index
    %118 = memref.load %arg2[%c4_61, %c2_62] : memref<9x10xf32, #tpu.memory_space<smem>>
    %119 = vector.broadcast %118 : f32 to vector<2x832xf32>
    %120 = arith.mulf %119, %4 : vector<2x832xf32>
    %121 = arith.addf %117, %120 : vector<2x832xf32>
    %c5_63 = arith.constant 5 : index
    %c2_64 = arith.constant 2 : index
    %122 = memref.load %arg2[%c5_63, %c2_64] : memref<9x10xf32, #tpu.memory_space<smem>>
    %123 = vector.broadcast %122 : f32 to vector<2x832xf32>
    %124 = arith.mulf %123, %5 : vector<2x832xf32>
    %125 = arith.addf %121, %124 : vector<2x832xf32>
    %c6_65 = arith.constant 6 : index
    %c2_66 = arith.constant 2 : index
    %126 = memref.load %arg2[%c6_65, %c2_66] : memref<9x10xf32, #tpu.memory_space<smem>>
    %127 = vector.broadcast %126 : f32 to vector<2x832xf32>
    %128 = arith.mulf %127, %6 : vector<2x832xf32>
    %129 = arith.addf %125, %128 : vector<2x832xf32>
    %c7_67 = arith.constant 7 : index
    %c2_68 = arith.constant 2 : index
    %130 = memref.load %arg2[%c7_67, %c2_68] : memref<9x10xf32, #tpu.memory_space<smem>>
    %131 = vector.broadcast %130 : f32 to vector<2x832xf32>
    %132 = arith.mulf %131, %7 : vector<2x832xf32>
    %133 = arith.addf %129, %132 : vector<2x832xf32>
    %c8_69 = arith.constant 8 : index
    %c2_70 = arith.constant 2 : index
    %134 = memref.load %arg2[%c8_69, %c2_70] : memref<9x10xf32, #tpu.memory_space<smem>>
    %135 = vector.broadcast %134 : f32 to vector<2x832xf32>
    %136 = arith.mulf %135, %8 : vector<2x832xf32>
    %137 = arith.addf %133, %136 : vector<2x832xf32>
    %cst_71 = arith.constant 0.000000e+00 : f32
    %138 = vector.broadcast %cst_71 : f32 to vector<2x832xf32>
    %139 = arith.maximumf %137, %138 : vector<2x832xf32>
    %c2_72 = arith.constant 2 : index
    %c0_73 = arith.constant 0 : index
    %c0_74 = arith.constant 0 : index
    %140 = vector.load %arg4[%c2_72, %c0_73, %c0_74] : memref<10x832x10xf32, #tpu.memory_space<vmem>>, vector<1x832x10xf32>
    %141 = vector.shape_cast %140 : vector<1x832x10xf32> to vector<832x10xf32>
    %cst_75 = arith.constant dense<0.000000e+00> : vector<2x10xf32>
    %142 = tpu.matmul %139, %141, %cst_75 {dimension_numbers = #tpu.dot_dimension_numbers<[1], [0], [0], [1], [0, 0, 1, 1], [], []>} : vector<2x832xf32>, vector<832x10xf32>, vector<2x10xf32> -> vector<2x10xf32>
    %143 = arith.addf %99, %142 : vector<2x10xf32>
    %c3_76 = arith.constant 3 : index
    %144 = memref.load %arg3[%c3_76] : memref<10xf32, #tpu.memory_space<smem>>
    %c0_77 = arith.constant 0 : index
    %c3_78 = arith.constant 3 : index
    %145 = memref.load %arg2[%c0_77, %c3_78] : memref<9x10xf32, #tpu.memory_space<smem>>
    %146 = vector.broadcast %145 : f32 to vector<2x832xf32>
    %147 = arith.mulf %146, %0 : vector<2x832xf32>
    %148 = vector.broadcast %144 : f32 to vector<2x832xf32>
    %149 = arith.addf %148, %147 : vector<2x832xf32>
    %c1_79 = arith.constant 1 : index
    %c3_80 = arith.constant 3 : index
    %150 = memref.load %arg2[%c1_79, %c3_80] : memref<9x10xf32, #tpu.memory_space<smem>>
    %151 = vector.broadcast %150 : f32 to vector<2x832xf32>
    %152 = arith.mulf %151, %1 : vector<2x832xf32>
    %153 = arith.addf %149, %152 : vector<2x832xf32>
    %c2_81 = arith.constant 2 : index
    %c3_82 = arith.constant 3 : index
    %154 = memref.load %arg2[%c2_81, %c3_82] : memref<9x10xf32, #tpu.memory_space<smem>>
    %155 = vector.broadcast %154 : f32 to vector<2x832xf32>
    %156 = arith.mulf %155, %2 : vector<2x832xf32>
    %157 = arith.addf %153, %156 : vector<2x832xf32>
    %c3_83 = arith.constant 3 : index
    %c3_84 = arith.constant 3 : index
    %158 = memref.load %arg2[%c3_83, %c3_84] : memref<9x10xf32, #tpu.memory_space<smem>>
    %159 = vector.broadcast %158 : f32 to vector<2x832xf32>
    %160 = arith.mulf %159, %3 : vector<2x832xf32>
    %161 = arith.addf %157, %160 : vector<2x832xf32>
    %c4_85 = arith.constant 4 : index
    %c3_86 = arith.constant 3 : index
    %162 = memref.load %arg2[%c4_85, %c3_86] : memref<9x10xf32, #tpu.memory_space<smem>>
    %163 = vector.broadcast %162 : f32 to vector<2x832xf32>
    %164 = arith.mulf %163, %4 : vector<2x832xf32>
    %165 = arith.addf %161, %164 : vector<2x832xf32>
    %c5_87 = arith.constant 5 : index
    %c3_88 = arith.constant 3 : index
    %166 = memref.load %arg2[%c5_87, %c3_88] : memref<9x10xf32, #tpu.memory_space<smem>>
    %167 = vector.broadcast %166 : f32 to vector<2x832xf32>
    %168 = arith.mulf %167, %5 : vector<2x832xf32>
    %169 = arith.addf %165, %168 : vector<2x832xf32>
    %c6_89 = arith.constant 6 : index
    %c3_90 = arith.constant 3 : index
    %170 = memref.load %arg2[%c6_89, %c3_90] : memref<9x10xf32, #tpu.memory_space<smem>>
    %171 = vector.broadcast %170 : f32 to vector<2x832xf32>
    %172 = arith.mulf %171, %6 : vector<2x832xf32>
    %173 = arith.addf %169, %172 : vector<2x832xf32>
    %c7_91 = arith.constant 7 : index
    %c3_92 = arith.constant 3 : index
    %174 = memref.load %arg2[%c7_91, %c3_92] : memref<9x10xf32, #tpu.memory_space<smem>>
    %175 = vector.broadcast %174 : f32 to vector<2x832xf32>
    %176 = arith.mulf %175, %7 : vector<2x832xf32>
    %177 = arith.addf %173, %176 : vector<2x832xf32>
    %c8_93 = arith.constant 8 : index
    %c3_94 = arith.constant 3 : index
    %178 = memref.load %arg2[%c8_93, %c3_94] : memref<9x10xf32, #tpu.memory_space<smem>>
    %179 = vector.broadcast %178 : f32 to vector<2x832xf32>
    %180 = arith.mulf %179, %8 : vector<2x832xf32>
    %181 = arith.addf %177, %180 : vector<2x832xf32>
    %cst_95 = arith.constant 0.000000e+00 : f32
    %182 = vector.broadcast %cst_95 : f32 to vector<2x832xf32>
    %183 = arith.maximumf %181, %182 : vector<2x832xf32>
    %c3_96 = arith.constant 3 : index
    %c0_97 = arith.constant 0 : index
    %c0_98 = arith.constant 0 : index
    %184 = vector.load %arg4[%c3_96, %c0_97, %c0_98] : memref<10x832x10xf32, #tpu.memory_space<vmem>>, vector<1x832x10xf32>
    %185 = vector.shape_cast %184 : vector<1x832x10xf32> to vector<832x10xf32>
    %cst_99 = arith.constant dense<0.000000e+00> : vector<2x10xf32>
    %186 = tpu.matmul %183, %185, %cst_99 {dimension_numbers = #tpu.dot_dimension_numbers<[1], [0], [0], [1], [0, 0, 1, 1], [], []>} : vector<2x832xf32>, vector<832x10xf32>, vector<2x10xf32> -> vector<2x10xf32>
    %187 = arith.addf %143, %186 : vector<2x10xf32>
    %c4_100 = arith.constant 4 : index
    %188 = memref.load %arg3[%c4_100] : memref<10xf32, #tpu.memory_space<smem>>
    %c0_101 = arith.constant 0 : index
    %c4_102 = arith.constant 4 : index
    %189 = memref.load %arg2[%c0_101, %c4_102] : memref<9x10xf32, #tpu.memory_space<smem>>
    %190 = vector.broadcast %189 : f32 to vector<2x832xf32>
    %191 = arith.mulf %190, %0 : vector<2x832xf32>
    %192 = vector.broadcast %188 : f32 to vector<2x832xf32>
    %193 = arith.addf %192, %191 : vector<2x832xf32>
    %c1_103 = arith.constant 1 : index
    %c4_104 = arith.constant 4 : index
    %194 = memref.load %arg2[%c1_103, %c4_104] : memref<9x10xf32, #tpu.memory_space<smem>>
    %195 = vector.broadcast %194 : f32 to vector<2x832xf32>
    %196 = arith.mulf %195, %1 : vector<2x832xf32>
    %197 = arith.addf %193, %196 : vector<2x832xf32>
    %c2_105 = arith.constant 2 : index
    %c4_106 = arith.constant 4 : index
    %198 = memref.load %arg2[%c2_105, %c4_106] : memref<9x10xf32, #tpu.memory_space<smem>>
    %199 = vector.broadcast %198 : f32 to vector<2x832xf32>
    %200 = arith.mulf %199, %2 : vector<2x832xf32>
    %201 = arith.addf %197, %200 : vector<2x832xf32>
    %c3_107 = arith.constant 3 : index
    %c4_108 = arith.constant 4 : index
    %202 = memref.load %arg2[%c3_107, %c4_108] : memref<9x10xf32, #tpu.memory_space<smem>>
    %203 = vector.broadcast %202 : f32 to vector<2x832xf32>
    %204 = arith.mulf %203, %3 : vector<2x832xf32>
    %205 = arith.addf %201, %204 : vector<2x832xf32>
    %c4_109 = arith.constant 4 : index
    %c4_110 = arith.constant 4 : index
    %206 = memref.load %arg2[%c4_109, %c4_110] : memref<9x10xf32, #tpu.memory_space<smem>>
    %207 = vector.broadcast %206 : f32 to vector<2x832xf32>
    %208 = arith.mulf %207, %4 : vector<2x832xf32>
    %209 = arith.addf %205, %208 : vector<2x832xf32>
    %c5_111 = arith.constant 5 : index
    %c4_112 = arith.constant 4 : index
    %210 = memref.load %arg2[%c5_111, %c4_112] : memref<9x10xf32, #tpu.memory_space<smem>>
    %211 = vector.broadcast %210 : f32 to vector<2x832xf32>
    %212 = arith.mulf %211, %5 : vector<2x832xf32>
    %213 = arith.addf %209, %212 : vector<2x832xf32>
    %c6_113 = arith.constant 6 : index
    %c4_114 = arith.constant 4 : index
    %214 = memref.load %arg2[%c6_113, %c4_114] : memref<9x10xf32, #tpu.memory_space<smem>>
    %215 = vector.broadcast %214 : f32 to vector<2x832xf32>
    %216 = arith.mulf %215, %6 : vector<2x832xf32>
    %217 = arith.addf %213, %216 : vector<2x832xf32>
    %c7_115 = arith.constant 7 : index
    %c4_116 = arith.constant 4 : index
    %218 = memref.load %arg2[%c7_115, %c4_116] : memref<9x10xf32, #tpu.memory_space<smem>>
    %219 = vector.broadcast %218 : f32 to vector<2x832xf32>
    %220 = arith.mulf %219, %7 : vector<2x832xf32>
    %221 = arith.addf %217, %220 : vector<2x832xf32>
    %c8_117 = arith.constant 8 : index
    %c4_118 = arith.constant 4 : index
    %222 = memref.load %arg2[%c8_117, %c4_118] : memref<9x10xf32, #tpu.memory_space<smem>>
    %223 = vector.broadcast %222 : f32 to vector<2x832xf32>
    %224 = arith.mulf %223, %8 : vector<2x832xf32>
    %225 = arith.addf %221, %224 : vector<2x832xf32>
    %cst_119 = arith.constant 0.000000e+00 : f32
    %226 = vector.broadcast %cst_119 : f32 to vector<2x832xf32>
    %227 = arith.maximumf %225, %226 : vector<2x832xf32>
    %c4_120 = arith.constant 4 : index
    %c0_121 = arith.constant 0 : index
    %c0_122 = arith.constant 0 : index
    %228 = vector.load %arg4[%c4_120, %c0_121, %c0_122] : memref<10x832x10xf32, #tpu.memory_space<vmem>>, vector<1x832x10xf32>
    %229 = vector.shape_cast %228 : vector<1x832x10xf32> to vector<832x10xf32>
    %cst_123 = arith.constant dense<0.000000e+00> : vector<2x10xf32>
    %230 = tpu.matmul %227, %229, %cst_123 {dimension_numbers = #tpu.dot_dimension_numbers<[1], [0], [0], [1], [0, 0, 1, 1], [], []>} : vector<2x832xf32>, vector<832x10xf32>, vector<2x10xf32> -> vector<2x10xf32>
    %231 = arith.addf %187, %230 : vector<2x10xf32>
    %c5_124 = arith.constant 5 : index
    %232 = memref.load %arg3[%c5_124] : memref<10xf32, #tpu.memory_space<smem>>
    %c0_125 = arith.constant 0 : index
    %c5_126 = arith.constant 5 : index
    %233 = memref.load %arg2[%c0_125, %c5_126] : memref<9x10xf32, #tpu.memory_space<smem>>
    %234 = vector.broadcast %233 : f32 to vector<2x832xf32>
    %235 = arith.mulf %234, %0 : vector<2x832xf32>
    %236 = vector.broadcast %232 : f32 to vector<2x832xf32>
    %237 = arith.addf %236, %235 : vector<2x832xf32>
    %c1_127 = arith.constant 1 : index
    %c5_128 = arith.constant 5 : index
    %238 = memref.load %arg2[%c1_127, %c5_128] : memref<9x10xf32, #tpu.memory_space<smem>>
    %239 = vector.broadcast %238 : f32 to vector<2x832xf32>
    %240 = arith.mulf %239, %1 : vector<2x832xf32>
    %241 = arith.addf %237, %240 : vector<2x832xf32>
    %c2_129 = arith.constant 2 : index
    %c5_130 = arith.constant 5 : index
    %242 = memref.load %arg2[%c2_129, %c5_130] : memref<9x10xf32, #tpu.memory_space<smem>>
    %243 = vector.broadcast %242 : f32 to vector<2x832xf32>
    %244 = arith.mulf %243, %2 : vector<2x832xf32>
    %245 = arith.addf %241, %244 : vector<2x832xf32>
    %c3_131 = arith.constant 3 : index
    %c5_132 = arith.constant 5 : index
    %246 = memref.load %arg2[%c3_131, %c5_132] : memref<9x10xf32, #tpu.memory_space<smem>>
    %247 = vector.broadcast %246 : f32 to vector<2x832xf32>
    %248 = arith.mulf %247, %3 : vector<2x832xf32>
    %249 = arith.addf %245, %248 : vector<2x832xf32>
    %c4_133 = arith.constant 4 : index
    %c5_134 = arith.constant 5 : index
    %250 = memref.load %arg2[%c4_133, %c5_134] : memref<9x10xf32, #tpu.memory_space<smem>>
    %251 = vector.broadcast %250 : f32 to vector<2x832xf32>
    %252 = arith.mulf %251, %4 : vector<2x832xf32>
    %253 = arith.addf %249, %252 : vector<2x832xf32>
    %c5_135 = arith.constant 5 : index
    %c5_136 = arith.constant 5 : index
    %254 = memref.load %arg2[%c5_135, %c5_136] : memref<9x10xf32, #tpu.memory_space<smem>>
    %255 = vector.broadcast %254 : f32 to vector<2x832xf32>
    %256 = arith.mulf %255, %5 : vector<2x832xf32>
    %257 = arith.addf %253, %256 : vector<2x832xf32>
    %c6_137 = arith.constant 6 : index
    %c5_138 = arith.constant 5 : index
    %258 = memref.load %arg2[%c6_137, %c5_138] : memref<9x10xf32, #tpu.memory_space<smem>>
    %259 = vector.broadcast %258 : f32 to vector<2x832xf32>
    %260 = arith.mulf %259, %6 : vector<2x832xf32>
    %261 = arith.addf %257, %260 : vector<2x832xf32>
    %c7_139 = arith.constant 7 : index
    %c5_140 = arith.constant 5 : index
    %262 = memref.load %arg2[%c7_139, %c5_140] : memref<9x10xf32, #tpu.memory_space<smem>>
    %263 = vector.broadcast %262 : f32 to vector<2x832xf32>
    %264 = arith.mulf %263, %7 : vector<2x832xf32>
    %265 = arith.addf %261, %264 : vector<2x832xf32>
    %c8_141 = arith.constant 8 : index
    %c5_142 = arith.constant 5 : index
    %266 = memref.load %arg2[%c8_141, %c5_142] : memref<9x10xf32, #tpu.memory_space<smem>>
    %267 = vector.broadcast %266 : f32 to vector<2x832xf32>
    %268 = arith.mulf %267, %8 : vector<2x832xf32>
    %269 = arith.addf %265, %268 : vector<2x832xf32>
    %cst_143 = arith.constant 0.000000e+00 : f32
    %270 = vector.broadcast %cst_143 : f32 to vector<2x832xf32>
    %271 = arith.maximumf %269, %270 : vector<2x832xf32>
    %c5_144 = arith.constant 5 : index
    %c0_145 = arith.constant 0 : index
    %c0_146 = arith.constant 0 : index
    %272 = vector.load %arg4[%c5_144, %c0_145, %c0_146] : memref<10x832x10xf32, #tpu.memory_space<vmem>>, vector<1x832x10xf32>
    %273 = vector.shape_cast %272 : vector<1x832x10xf32> to vector<832x10xf32>
    %cst_147 = arith.constant dense<0.000000e+00> : vector<2x10xf32>
    %274 = tpu.matmul %271, %273, %cst_147 {dimension_numbers = #tpu.dot_dimension_numbers<[1], [0], [0], [1], [0, 0, 1, 1], [], []>} : vector<2x832xf32>, vector<832x10xf32>, vector<2x10xf32> -> vector<2x10xf32>
    %275 = arith.addf %231, %274 : vector<2x10xf32>
    %c6_148 = arith.constant 6 : index
    %276 = memref.load %arg3[%c6_148] : memref<10xf32, #tpu.memory_space<smem>>
    %c0_149 = arith.constant 0 : index
    %c6_150 = arith.constant 6 : index
    %277 = memref.load %arg2[%c0_149, %c6_150] : memref<9x10xf32, #tpu.memory_space<smem>>
    %278 = vector.broadcast %277 : f32 to vector<2x832xf32>
    %279 = arith.mulf %278, %0 : vector<2x832xf32>
    %280 = vector.broadcast %276 : f32 to vector<2x832xf32>
    %281 = arith.addf %280, %279 : vector<2x832xf32>
    %c1_151 = arith.constant 1 : index
    %c6_152 = arith.constant 6 : index
    %282 = memref.load %arg2[%c1_151, %c6_152] : memref<9x10xf32, #tpu.memory_space<smem>>
    %283 = vector.broadcast %282 : f32 to vector<2x832xf32>
    %284 = arith.mulf %283, %1 : vector<2x832xf32>
    %285 = arith.addf %281, %284 : vector<2x832xf32>
    %c2_153 = arith.constant 2 : index
    %c6_154 = arith.constant 6 : index
    %286 = memref.load %arg2[%c2_153, %c6_154] : memref<9x10xf32, #tpu.memory_space<smem>>
    %287 = vector.broadcast %286 : f32 to vector<2x832xf32>
    %288 = arith.mulf %287, %2 : vector<2x832xf32>
    %289 = arith.addf %285, %288 : vector<2x832xf32>
    %c3_155 = arith.constant 3 : index
    %c6_156 = arith.constant 6 : index
    %290 = memref.load %arg2[%c3_155, %c6_156] : memref<9x10xf32, #tpu.memory_space<smem>>
    %291 = vector.broadcast %290 : f32 to vector<2x832xf32>
    %292 = arith.mulf %291, %3 : vector<2x832xf32>
    %293 = arith.addf %289, %292 : vector<2x832xf32>
    %c4_157 = arith.constant 4 : index
    %c6_158 = arith.constant 6 : index
    %294 = memref.load %arg2[%c4_157, %c6_158] : memref<9x10xf32, #tpu.memory_space<smem>>
    %295 = vector.broadcast %294 : f32 to vector<2x832xf32>
    %296 = arith.mulf %295, %4 : vector<2x832xf32>
    %297 = arith.addf %293, %296 : vector<2x832xf32>
    %c5_159 = arith.constant 5 : index
    %c6_160 = arith.constant 6 : index
    %298 = memref.load %arg2[%c5_159, %c6_160] : memref<9x10xf32, #tpu.memory_space<smem>>
    %299 = vector.broadcast %298 : f32 to vector<2x832xf32>
    %300 = arith.mulf %299, %5 : vector<2x832xf32>
    %301 = arith.addf %297, %300 : vector<2x832xf32>
    %c6_161 = arith.constant 6 : index
    %c6_162 = arith.constant 6 : index
    %302 = memref.load %arg2[%c6_161, %c6_162] : memref<9x10xf32, #tpu.memory_space<smem>>
    %303 = vector.broadcast %302 : f32 to vector<2x832xf32>
    %304 = arith.mulf %303, %6 : vector<2x832xf32>
    %305 = arith.addf %301, %304 : vector<2x832xf32>
    %c7_163 = arith.constant 7 : index
    %c6_164 = arith.constant 6 : index
    %306 = memref.load %arg2[%c7_163, %c6_164] : memref<9x10xf32, #tpu.memory_space<smem>>
    %307 = vector.broadcast %306 : f32 to vector<2x832xf32>
    %308 = arith.mulf %307, %7 : vector<2x832xf32>
    %309 = arith.addf %305, %308 : vector<2x832xf32>
    %c8_165 = arith.constant 8 : index
    %c6_166 = arith.constant 6 : index
    %310 = memref.load %arg2[%c8_165, %c6_166] : memref<9x10xf32, #tpu.memory_space<smem>>
    %311 = vector.broadcast %310 : f32 to vector<2x832xf32>
    %312 = arith.mulf %311, %8 : vector<2x832xf32>
    %313 = arith.addf %309, %312 : vector<2x832xf32>
    %cst_167 = arith.constant 0.000000e+00 : f32
    %314 = vector.broadcast %cst_167 : f32 to vector<2x832xf32>
    %315 = arith.maximumf %313, %314 : vector<2x832xf32>
    %c6_168 = arith.constant 6 : index
    %c0_169 = arith.constant 0 : index
    %c0_170 = arith.constant 0 : index
    %316 = vector.load %arg4[%c6_168, %c0_169, %c0_170] : memref<10x832x10xf32, #tpu.memory_space<vmem>>, vector<1x832x10xf32>
    %317 = vector.shape_cast %316 : vector<1x832x10xf32> to vector<832x10xf32>
    %cst_171 = arith.constant dense<0.000000e+00> : vector<2x10xf32>
    %318 = tpu.matmul %315, %317, %cst_171 {dimension_numbers = #tpu.dot_dimension_numbers<[1], [0], [0], [1], [0, 0, 1, 1], [], []>} : vector<2x832xf32>, vector<832x10xf32>, vector<2x10xf32> -> vector<2x10xf32>
    %319 = arith.addf %275, %318 : vector<2x10xf32>
    %c7_172 = arith.constant 7 : index
    %320 = memref.load %arg3[%c7_172] : memref<10xf32, #tpu.memory_space<smem>>
    %c0_173 = arith.constant 0 : index
    %c7_174 = arith.constant 7 : index
    %321 = memref.load %arg2[%c0_173, %c7_174] : memref<9x10xf32, #tpu.memory_space<smem>>
    %322 = vector.broadcast %321 : f32 to vector<2x832xf32>
    %323 = arith.mulf %322, %0 : vector<2x832xf32>
    %324 = vector.broadcast %320 : f32 to vector<2x832xf32>
    %325 = arith.addf %324, %323 : vector<2x832xf32>
    %c1_175 = arith.constant 1 : index
    %c7_176 = arith.constant 7 : index
    %326 = memref.load %arg2[%c1_175, %c7_176] : memref<9x10xf32, #tpu.memory_space<smem>>
    %327 = vector.broadcast %326 : f32 to vector<2x832xf32>
    %328 = arith.mulf %327, %1 : vector<2x832xf32>
    %329 = arith.addf %325, %328 : vector<2x832xf32>
    %c2_177 = arith.constant 2 : index
    %c7_178 = arith.constant 7 : index
    %330 = memref.load %arg2[%c2_177, %c7_178] : memref<9x10xf32, #tpu.memory_space<smem>>
    %331 = vector.broadcast %330 : f32 to vector<2x832xf32>
    %332 = arith.mulf %331, %2 : vector<2x832xf32>
    %333 = arith.addf %329, %332 : vector<2x832xf32>
    %c3_179 = arith.constant 3 : index
    %c7_180 = arith.constant 7 : index
    %334 = memref.load %arg2[%c3_179, %c7_180] : memref<9x10xf32, #tpu.memory_space<smem>>
    %335 = vector.broadcast %334 : f32 to vector<2x832xf32>
    %336 = arith.mulf %335, %3 : vector<2x832xf32>
    %337 = arith.addf %333, %336 : vector<2x832xf32>
    %c4_181 = arith.constant 4 : index
    %c7_182 = arith.constant 7 : index
    %338 = memref.load %arg2[%c4_181, %c7_182] : memref<9x10xf32, #tpu.memory_space<smem>>
    %339 = vector.broadcast %338 : f32 to vector<2x832xf32>
    %340 = arith.mulf %339, %4 : vector<2x832xf32>
    %341 = arith.addf %337, %340 : vector<2x832xf32>
    %c5_183 = arith.constant 5 : index
    %c7_184 = arith.constant 7 : index
    %342 = memref.load %arg2[%c5_183, %c7_184] : memref<9x10xf32, #tpu.memory_space<smem>>
    %343 = vector.broadcast %342 : f32 to vector<2x832xf32>
    %344 = arith.mulf %343, %5 : vector<2x832xf32>
    %345 = arith.addf %341, %344 : vector<2x832xf32>
    %c6_185 = arith.constant 6 : index
    %c7_186 = arith.constant 7 : index
    %346 = memref.load %arg2[%c6_185, %c7_186] : memref<9x10xf32, #tpu.memory_space<smem>>
    %347 = vector.broadcast %346 : f32 to vector<2x832xf32>
    %348 = arith.mulf %347, %6 : vector<2x832xf32>
    %349 = arith.addf %345, %348 : vector<2x832xf32>
    %c7_187 = arith.constant 7 : index
    %c7_188 = arith.constant 7 : index
    %350 = memref.load %arg2[%c7_187, %c7_188] : memref<9x10xf32, #tpu.memory_space<smem>>
    %351 = vector.broadcast %350 : f32 to vector<2x832xf32>
    %352 = arith.mulf %351, %7 : vector<2x832xf32>
    %353 = arith.addf %349, %352 : vector<2x832xf32>
    %c8_189 = arith.constant 8 : index
    %c7_190 = arith.constant 7 : index
    %354 = memref.load %arg2[%c8_189, %c7_190] : memref<9x10xf32, #tpu.memory_space<smem>>
    %355 = vector.broadcast %354 : f32 to vector<2x832xf32>
    %356 = arith.mulf %355, %8 : vector<2x832xf32>
    %357 = arith.addf %353, %356 : vector<2x832xf32>
    %cst_191 = arith.constant 0.000000e+00 : f32
    %358 = vector.broadcast %cst_191 : f32 to vector<2x832xf32>
    %359 = arith.maximumf %357, %358 : vector<2x832xf32>
    %c7_192 = arith.constant 7 : index
    %c0_193 = arith.constant 0 : index
    %c0_194 = arith.constant 0 : index
    %360 = vector.load %arg4[%c7_192, %c0_193, %c0_194] : memref<10x832x10xf32, #tpu.memory_space<vmem>>, vector<1x832x10xf32>
    %361 = vector.shape_cast %360 : vector<1x832x10xf32> to vector<832x10xf32>
    %cst_195 = arith.constant dense<0.000000e+00> : vector<2x10xf32>
    %362 = tpu.matmul %359, %361, %cst_195 {dimension_numbers = #tpu.dot_dimension_numbers<[1], [0], [0], [1], [0, 0, 1, 1], [], []>} : vector<2x832xf32>, vector<832x10xf32>, vector<2x10xf32> -> vector<2x10xf32>
    %363 = arith.addf %319, %362 : vector<2x10xf32>
    %c8_196 = arith.constant 8 : index
    %364 = memref.load %arg3[%c8_196] : memref<10xf32, #tpu.memory_space<smem>>
    %c0_197 = arith.constant 0 : index
    %c8_198 = arith.constant 8 : index
    %365 = memref.load %arg2[%c0_197, %c8_198] : memref<9x10xf32, #tpu.memory_space<smem>>
    %366 = vector.broadcast %365 : f32 to vector<2x832xf32>
    %367 = arith.mulf %366, %0 : vector<2x832xf32>
    %368 = vector.broadcast %364 : f32 to vector<2x832xf32>
    %369 = arith.addf %368, %367 : vector<2x832xf32>
    %c1_199 = arith.constant 1 : index
    %c8_200 = arith.constant 8 : index
    %370 = memref.load %arg2[%c1_199, %c8_200] : memref<9x10xf32, #tpu.memory_space<smem>>
    %371 = vector.broadcast %370 : f32 to vector<2x832xf32>
    %372 = arith.mulf %371, %1 : vector<2x832xf32>
    %373 = arith.addf %369, %372 : vector<2x832xf32>
    %c2_201 = arith.constant 2 : index
    %c8_202 = arith.constant 8 : index
    %374 = memref.load %arg2[%c2_201, %c8_202] : memref<9x10xf32, #tpu.memory_space<smem>>
    %375 = vector.broadcast %374 : f32 to vector<2x832xf32>
    %376 = arith.mulf %375, %2 : vector<2x832xf32>
    %377 = arith.addf %373, %376 : vector<2x832xf32>
    %c3_203 = arith.constant 3 : index
    %c8_204 = arith.constant 8 : index
    %378 = memref.load %arg2[%c3_203, %c8_204] : memref<9x10xf32, #tpu.memory_space<smem>>
    %379 = vector.broadcast %378 : f32 to vector<2x832xf32>
    %380 = arith.mulf %379, %3 : vector<2x832xf32>
    %381 = arith.addf %377, %380 : vector<2x832xf32>
    %c4_205 = arith.constant 4 : index
    %c8_206 = arith.constant 8 : index
    %382 = memref.load %arg2[%c4_205, %c8_206] : memref<9x10xf32, #tpu.memory_space<smem>>
    %383 = vector.broadcast %382 : f32 to vector<2x832xf32>
    %384 = arith.mulf %383, %4 : vector<2x832xf32>
    %385 = arith.addf %381, %384 : vector<2x832xf32>
    %c5_207 = arith.constant 5 : index
    %c8_208 = arith.constant 8 : index
    %386 = memref.load %arg2[%c5_207, %c8_208] : memref<9x10xf32, #tpu.memory_space<smem>>
    %387 = vector.broadcast %386 : f32 to vector<2x832xf32>
    %388 = arith.mulf %387, %5 : vector<2x832xf32>
    %389 = arith.addf %385, %388 : vector<2x832xf32>
    %c6_209 = arith.constant 6 : index
    %c8_210 = arith.constant 8 : index
    %390 = memref.load %arg2[%c6_209, %c8_210] : memref<9x10xf32, #tpu.memory_space<smem>>
    %391 = vector.broadcast %390 : f32 to vector<2x832xf32>
    %392 = arith.mulf %391, %6 : vector<2x832xf32>
    %393 = arith.addf %389, %392 : vector<2x832xf32>
    %c7_211 = arith.constant 7 : index
    %c8_212 = arith.constant 8 : index
    %394 = memref.load %arg2[%c7_211, %c8_212] : memref<9x10xf32, #tpu.memory_space<smem>>
    %395 = vector.broadcast %394 : f32 to vector<2x832xf32>
    %396 = arith.mulf %395, %7 : vector<2x832xf32>
    %397 = arith.addf %393, %396 : vector<2x832xf32>
    %c8_213 = arith.constant 8 : index
    %c8_214 = arith.constant 8 : index
    %398 = memref.load %arg2[%c8_213, %c8_214] : memref<9x10xf32, #tpu.memory_space<smem>>
    %399 = vector.broadcast %398 : f32 to vector<2x832xf32>
    %400 = arith.mulf %399, %8 : vector<2x832xf32>
    %401 = arith.addf %397, %400 : vector<2x832xf32>
    %cst_215 = arith.constant 0.000000e+00 : f32
    %402 = vector.broadcast %cst_215 : f32 to vector<2x832xf32>
    %403 = arith.maximumf %401, %402 : vector<2x832xf32>
    %c8_216 = arith.constant 8 : index
    %c0_217 = arith.constant 0 : index
    %c0_218 = arith.constant 0 : index
    %404 = vector.load %arg4[%c8_216, %c0_217, %c0_218] : memref<10x832x10xf32, #tpu.memory_space<vmem>>, vector<1x832x10xf32>
    %405 = vector.shape_cast %404 : vector<1x832x10xf32> to vector<832x10xf32>
    %cst_219 = arith.constant dense<0.000000e+00> : vector<2x10xf32>
    %406 = tpu.matmul %403, %405, %cst_219 {dimension_numbers = #tpu.dot_dimension_numbers<[1], [0], [0], [1], [0, 0, 1, 1], [], []>} : vector<2x832xf32>, vector<832x10xf32>, vector<2x10xf32> -> vector<2x10xf32>
    %407 = arith.addf %363, %406 : vector<2x10xf32>
    %c9 = arith.constant 9 : index
    %408 = memref.load %arg3[%c9] : memref<10xf32, #tpu.memory_space<smem>>
    %c0_220 = arith.constant 0 : index
    %c9_221 = arith.constant 9 : index
    %409 = memref.load %arg2[%c0_220, %c9_221] : memref<9x10xf32, #tpu.memory_space<smem>>
    %410 = vector.broadcast %409 : f32 to vector<2x832xf32>
    %411 = arith.mulf %410, %0 : vector<2x832xf32>
    %412 = vector.broadcast %408 : f32 to vector<2x832xf32>
    %413 = arith.addf %412, %411 : vector<2x832xf32>
    %c1_222 = arith.constant 1 : index
    %c9_223 = arith.constant 9 : index
    %414 = memref.load %arg2[%c1_222, %c9_223] : memref<9x10xf32, #tpu.memory_space<smem>>
    %415 = vector.broadcast %414 : f32 to vector<2x832xf32>
    %416 = arith.mulf %415, %1 : vector<2x832xf32>
    %417 = arith.addf %413, %416 : vector<2x832xf32>
    %c2_224 = arith.constant 2 : index
    %c9_225 = arith.constant 9 : index
    %418 = memref.load %arg2[%c2_224, %c9_225] : memref<9x10xf32, #tpu.memory_space<smem>>
    %419 = vector.broadcast %418 : f32 to vector<2x832xf32>
    %420 = arith.mulf %419, %2 : vector<2x832xf32>
    %421 = arith.addf %417, %420 : vector<2x832xf32>
    %c3_226 = arith.constant 3 : index
    %c9_227 = arith.constant 9 : index
    %422 = memref.load %arg2[%c3_226, %c9_227] : memref<9x10xf32, #tpu.memory_space<smem>>
    %423 = vector.broadcast %422 : f32 to vector<2x832xf32>
    %424 = arith.mulf %423, %3 : vector<2x832xf32>
    %425 = arith.addf %421, %424 : vector<2x832xf32>
    %c4_228 = arith.constant 4 : index
    %c9_229 = arith.constant 9 : index
    %426 = memref.load %arg2[%c4_228, %c9_229] : memref<9x10xf32, #tpu.memory_space<smem>>
    %427 = vector.broadcast %426 : f32 to vector<2x832xf32>
    %428 = arith.mulf %427, %4 : vector<2x832xf32>
    %429 = arith.addf %425, %428 : vector<2x832xf32>
    %c5_230 = arith.constant 5 : index
    %c9_231 = arith.constant 9 : index
    %430 = memref.load %arg2[%c5_230, %c9_231] : memref<9x10xf32, #tpu.memory_space<smem>>
    %431 = vector.broadcast %430 : f32 to vector<2x832xf32>
    %432 = arith.mulf %431, %5 : vector<2x832xf32>
    %433 = arith.addf %429, %432 : vector<2x832xf32>
    %c6_232 = arith.constant 6 : index
    %c9_233 = arith.constant 9 : index
    %434 = memref.load %arg2[%c6_232, %c9_233] : memref<9x10xf32, #tpu.memory_space<smem>>
    %435 = vector.broadcast %434 : f32 to vector<2x832xf32>
    %436 = arith.mulf %435, %6 : vector<2x832xf32>
    %437 = arith.addf %433, %436 : vector<2x832xf32>
    %c7_234 = arith.constant 7 : index
    %c9_235 = arith.constant 9 : index
    %438 = memref.load %arg2[%c7_234, %c9_235] : memref<9x10xf32, #tpu.memory_space<smem>>
    %439 = vector.broadcast %438 : f32 to vector<2x832xf32>
    %440 = arith.mulf %439, %7 : vector<2x832xf32>
    %441 = arith.addf %437, %440 : vector<2x832xf32>
    %c8_236 = arith.constant 8 : index
    %c9_237 = arith.constant 9 : index
    %442 = memref.load %arg2[%c8_236, %c9_237] : memref<9x10xf32, #tpu.memory_space<smem>>
    %443 = vector.broadcast %442 : f32 to vector<2x832xf32>
    %444 = arith.mulf %443, %8 : vector<2x832xf32>
    %445 = arith.addf %441, %444 : vector<2x832xf32>
    %cst_238 = arith.constant 0.000000e+00 : f32
    %446 = vector.broadcast %cst_238 : f32 to vector<2x832xf32>
    %447 = arith.maximumf %445, %446 : vector<2x832xf32>
    %c9_239 = arith.constant 9 : index
    %c0_240 = arith.constant 0 : index
    %c0_241 = arith.constant 0 : index
    %448 = vector.load %arg4[%c9_239, %c0_240, %c0_241] : memref<10x832x10xf32, #tpu.memory_space<vmem>>, vector<1x832x10xf32>
    %449 = vector.shape_cast %448 : vector<1x832x10xf32> to vector<832x10xf32>
    %cst_242 = arith.constant dense<0.000000e+00> : vector<2x10xf32>
    %450 = tpu.matmul %447, %449, %cst_242 {dimension_numbers = #tpu.dot_dimension_numbers<[1], [0], [0], [1], [0, 0, 1, 1], [], []>} : vector<2x832xf32>, vector<832x10xf32>, vector<2x10xf32> -> vector<2x10xf32>
    %451 = arith.addf %407, %450 : vector<2x10xf32>
    %c0_243 = arith.constant 0 : index
    %c0_244 = arith.constant 0 : index
    %452 = vector.load %arg6[%c0_243, %c0_244] : memref<2x10xf32, #tpu.memory_space<vmem>>, vector<2x10xf32>
    tpu.vector_store %arg6[%c0_243, %c0_244], %451 {strides = array<i32>} : memref<2x10xf32, #tpu.memory_space<vmem>>, vector<2x10xf32>,
    return
  }
  func.func @transform_0(%arg0: i32) -> (i32, i32) {
    %c0_i32 = arith.constant 0 : i32
    %c0_i32_0 = arith.constant 0 : i32
    return %arg0, %c0_i32 : i32, i32
  }
  func.func @transform_1(%arg0: i32) -> (i32, i32) {
    %c0_i32 = arith.constant 0 : i32
    %c0_i32_0 = arith.constant 0 : i32
    %c0_i32_1 = arith.constant 0 : i32
    return %c0_i32, %c0_i32_0 : i32, i32
  }
  func.func @transform_2(%arg0: i32) -> i32 {
    %c0_i32 = arith.constant 0 : i32
    %c0_i32_0 = arith.constant 0 : i32
    return %c0_i32 : i32
  }
  func.func @transform_3(%arg0: i32) -> (i32, i32, i32) {
    %c0_i32 = arith.constant 0 : i32
    %c0_i32_0 = arith.constant 0 : i32
    %c0_i32_1 = arith.constant 0 : i32
    %c0_i32_2 = arith.constant 0 : i32
    return %c0_i32, %c0_i32_0, %c0_i32_1 : i32, i32, i32
  }
  func.func @transform_4(%arg0: i32) -> (i32, i32) {
    %c0_i32 = arith.constant 0 : i32
    %c0_i32_0 = arith.constant 0 : i32
    %c0_i32_1 = arith.constant 0 : i32
    return %c0_i32, %c0_i32_0 : i32, i32
  }
  func.func @transform_5(%arg0: i32) -> (i32, i32) {
    %c0_i32 = arith.constant 0 : i32
    %c0_i32_0 = arith.constant 0 : i32
    return %arg0, %c0_i32 : i32, i32
  }
}

</mosaic_0001>

<llo_original>
// kernel: my_model1_forward.1
$region0: #{my_model1_forward.1}
  #allocation0 [shape = 'u32[]', space=smem, size = 0x4, offset = 0x4, fixed_abs, tag = 'smem constant byte address 0x4 - core index']
  #allocation1 [shape = 'u32[72,128]{1,0:T(1,128)}', space=vmem, size = 0x9000, scoped, tag = 'internal scratch']
  %s0 = inlined_call_operand.vmem [shape: f32[2,928], index: 0, kind: input, shape index: {}]
  %s1 = inlined_call_operand.vmem [shape: f32[9,10], index: 1, kind: input, shape index: {}]
  %s2 = inlined_call_operand.vmem [shape: f32[10], index: 2, kind: input, shape index: {}]
  %s3 = inlined_call_operand.vmem [shape: f32[10,832,10], index: 3, kind: input, shape index: {}]
  %s4 = inlined_call_operand.vmem [shape: f32[1,10], index: 4, kind: input, shape index: {}]
  %s5 = inlined_call_operand.hbm [shape: f32[2,10], index: 5, kind: output, shape index: {}]
  %s6 = sld [smem:[#allocation0]]
  $region38: #{my_model1_forward.1} parent=0
    _
  %s8 = ssub.s32 1, %s6
  %s9 = scalar_select 0, %s8, %s6
  $region1: #{my_model1_forward.1} parent=0
    #allocation2 [shape = 'u8[8192]{0}', space=smem, size = 0x2000, scoped, tag = 'input window, operand 1, single buffered']
    #allocation3 [shape = 's32[1]{0}', space=sflag, size = 0x4, scoped, tag = 'scoped memory for my_model1_forward.1']
    #allocation4 [shape = 's32[1]{0}', space=sflag, size = 0x4, scoped, tag = 'scoped memory for my_model1_forward.1']
    #allocation5 [shape = 'u8[512]{0}', space=smem, size = 0x200, scoped, tag = 'input window, operand 2, single buffered']
    #allocation6 [shape = 's32[1]{0}', space=sflag, size = 0x4, scoped, tag = 'scoped memory for my_model1_forward.1']
    #allocation7 [shape = 'u8[1024]{0}', space=vmem, size = 0x400, scoped, tag = 'output window, operand 0, single buffered']
    %10 = vsyncpa [#allocation4], 0
    %11 = vsyncpa [#allocation6], 0
    %12 = vsyncpa [#allocation3], 0
    // Predicated region
    $region2: #{my_model1_forward.1} parent=1 // pred_check
      _
    $region3: #{my_model1_forward.1} parent=1 // pred_check_branch
      %14 = sbr.rel (0) target = $region5
    $region4: #{my_model1_forward.1} parent=1 // pred_region
      _
    $region5: #{my_model1_forward.1} parent=1 // pred_fallthru
      _
    // Predicated region
    $region6: #{my_model1_forward.1} parent=1 // pred_check
      _
    $region7: #{my_model1_forward.1} parent=1 // pred_check_branch
      %16 = sbr.rel (0) target = $region9
    $region8: #{my_model1_forward.1} parent=1 // pred_region
      %18 = vsyncadd [#allocation4], 0
      %s19 = sshll.u32 %s1, 4
      %s20 = int_to_ptr.vmem [resolvable:$true] %s19
      %25 = dma.vmem_to_smem %s20, 256, [#allocation2], [#allocation4], 128, 128, 8
    $region9: #{my_model1_forward.1} parent=1 // pred_fallthru
      _
    // Predicated region
    $region10: #{my_model1_forward.1} parent=1 // pred_check
      _
    $region11: #{my_model1_forward.1} parent=1 // pred_check_branch
      %27 = sbr.rel (0) target = $region13
    $region12: #{my_model1_forward.1} parent=1 // pred_region
      %29 = vsyncadd [#allocation6], 0
      %s31 = sshll.u32 %s2, 4
      %s32 = int_to_ptr.vmem [resolvable:$true] %s31
      %34 = dma.vmem_to_smem %s32, 16, [#allocation5], [#allocation6]
    $region13: #{my_model1_forward.1} parent=1 // pred_fallthru
      _
    // Predicated region
    $region14: #{my_model1_forward.1} parent=1 // pred_check
      _
    $region15: #{my_model1_forward.1} parent=1 // pred_check_branch
      %36 = sbr.rel (0) target = $region17
    $region16: #{my_model1_forward.1} parent=1 // pred_region
      _
    $region17: #{my_model1_forward.1} parent=1 // pred_fallthru
      _
    // Predicated region
    $region18: #{my_model1_forward.1} parent=1 // pred_check
      _
    $region19: #{my_model1_forward.1} parent=1 // pred_check_branch
      %38 = sbr.rel (0) target = $region21
    $region20: #{my_model1_forward.1} parent=1 // pred_region
      _
    $region21: #{my_model1_forward.1} parent=1 // pred_fallthru
      _
    // Predicated region
    $region22: #{my_model1_forward.1} parent=1 // pred_check
      _
    $region23: #{my_model1_forward.1} parent=1 // pred_check_branch
      %40 = sbr.rel (0) target = $region25
    $region24: #{my_model1_forward.1} parent=1 // pred_region
      %42 = dma.done [#allocation4], 256
    $region25: #{my_model1_forward.1} parent=1 // pred_fallthru
      _
    // Predicated region
    $region26: #{my_model1_forward.1} parent=1 // pred_check
      _
    $region27: #{my_model1_forward.1} parent=1 // pred_check_branch
      %44 = sbr.rel (0) target = $region29
    $region28: #{my_model1_forward.1} parent=1 // pred_region
      %46 = dma.done [#allocation6], 16
    $region29: #{my_model1_forward.1} parent=1 // pred_fallthru
      _
    %47 = sfence
    %v48 = vld [vmem:[%s0] sm:$0xff]
    %v49 = vld [vmem:[%s0 + $0x8] sm:$0x3f]
    %v50 = vld [vmem:[%s0 + $0x8] sm:$0xff]
    %v51 = vld [vmem:[%s4] sm:$0x1]
    %v53 = vperm.slane %v51, 0
    %s55 = sld [smem:[#allocation5]]
    %s56 = sld [smem:[#allocation2]]
    %v57 = vstv %s56
    %v58 = vmul.f32 %v57, %v48
    %v59 = vmul.f32 %v57, %v49
    %v60 = vstv %s55
    %v61 = vadd.f32 %v60, %v58
    %v62 = vadd.f32 %v60, %v59
    %s63 = sld [smem:[#allocation2 + $0x80]]
    %v64 = vstv %s63
    %v65 = vmul.f32 %v64, %v48
    %v66 = vmul.f32 %v64, %v49
    %69 = vrot.lane.b32.xlu0 %v65, 127
    %v70 = vpop.permute.xlu0 %69
    %71 = vrot.lane.b32.xlu0 %v66, 127
    %v72 = vpop.permute.xlu0 %71
    %v73 = vrot.slane %v70, 2
    %v74 = vrot.slane %v72, 2
    %vm75 = vcmask 1045504
    %v76 = vsel %vm75, %v73, %v74
    %vm77 = vcmask 1039360
    %v78 = vsel %vm77, %v70, %v76
    %v79 = vsel %vm77, %v72, %v74
    %v82 = vadd.f32 %v61, %v78
    %v83 = vadd.f32 %v62, %v79
    %s84 = sld [smem:[#allocation2 + $0x100]]
    %v85 = vstv %s84
    %v86 = vmul.f32 %v85, %v48
    %v87 = vmul.f32 %v85, %v49
    %90 = vrot.lane.b32.xlu0 %v86, 126
    %v91 = vpop.permute.xlu0 %90
    %92 = vrot.lane.b32.xlu0 %v87, 126
    %v93 = vpop.permute.xlu0 %92
    %v94 = vrot.slane %v91, 2
    %v95 = vrot.slane %v93, 2
    %v96 = vsel %vm75, %v94, %v95
    %vm97 = vcmask 1031168
    %v98 = vsel %vm97, %v91, %v96
    %v99 = vsel %vm97, %v93, %v95
    %v102 = vadd.f32 %v82, %v98
    %v103 = vadd.f32 %v83, %v99
    %s104 = sld [smem:[#allocation2 + $0x180]]
    %v105 = vstv %s104
    %v106 = vmul.f32 %v105, %v48
    %v107 = vmul.f32 %v105, %v49
    %110 = vrot.lane.b32.xlu0 %v106, 96
    %v111 = vpop.permute.xlu0 %110
    %112 = vrot.lane.b32.xlu0 %v107, 96
    %v113 = vpop.permute.xlu0 %112
    %v114 = vrot.slane %v111, 2
    %v115 = vrot.slane %v113, 2
    %v116 = vsel %vm75, %v114, %v115
    %vm117 = vcmask 785408
    %v118 = vsel %vm117, %v111, %v116
    %v119 = vsel %vm117, %v113, %v115
    %v122 = vadd.f32 %v102, %v118
    %v123 = vadd.f32 %v103, %v119
    %s124 = sld [smem:[#allocation2 + $0x200]]
    %v125 = vstv %s124
    %v126 = vmul.f32 %v125, %v48
    %v127 = vmul.f32 %v125, %v49
    %130 = vrot.lane.b32.xlu0 %v126, 95
    %v131 = vpop.permute.xlu0 %130
    %132 = vrot.lane.b32.xlu0 %v127, 95
    %v133 = vpop.permute.xlu0 %132
    %v134 = vrot.slane %v131, 2
    %v135 = vrot.slane %v133, 2
    %v136 = vsel %vm75, %v134, %v135
    %vm137 = vcmask 777216
    %v138 = vsel %vm137, %v131, %v136
    %v139 = vsel %vm137, %v133, %v135
    %v142 = vadd.f32 %v122, %v138
    %v143 = vadd.f32 %v123, %v139
    %s144 = sld [smem:[#allocation2 + $0x280]]
    %v145 = vstv %s144
    %v146 = vmul.f32 %v145, %v48
    %v147 = vmul.f32 %v145, %v49
    %150 = vrot.lane.b32.xlu0 %v146, 94
    %v151 = vpop.permute.xlu0 %150
    %152 = vrot.lane.b32.xlu0 %v147, 94
    %v153 = vpop.permute.xlu0 %152
    %v154 = vrot.slane %v151, 2
    %v155 = vrot.slane %v153, 2
    %v156 = vsel %vm75, %v154, %v155
    %vm157 = vcmask 769024
    %v158 = vsel %vm157, %v151, %v156
    %v159 = vsel %vm157, %v153, %v155
    %v162 = vadd.f32 %v142, %v158
    %v163 = vadd.f32 %v143, %v159
    %s164 = sld [smem:[#allocation2 + $0x300]]
    %v165 = vstv %s164
    %v166 = vmul.f32 %v165, %v48
    %v167 = vmul.f32 %v165, %v49
    %170 = vrot.lane.b32.xlu0 %v166, 64
    %v171 = vpop.permute.xlu0 %170
    %172 = vrot.lane.b32.xlu0 %v167, 64
    %v173 = vpop.permute.xlu0 %172
    %v174 = vrot.slane %v171, 2
    %v175 = vrot.slane %v173, 2
    %v176 = vsel %vm75, %v174, %v175
    %vm177 = vcmask 523264
    %v178 = vsel %vm177, %v171, %v176
    %v179 = vsel %vm177, %v173, %v175
    %v182 = vadd.f32 %v162, %v178
    %v183 = vadd.f32 %v163, %v179
    %s184 = sld [smem:[#allocation2 + $0x380]]
    %v185 = vstv %s184
    %v186 = vmul.f32 %v185, %v48
    %v187 = vmul.f32 %v185, %v50
    %190 = vrot.lane.b32.xlu0 %v186, 63
    %v191 = vpop.permute.xlu0 %190
    %192 = vrot.lane.b32.xlu0 %v187, 63
    %v193 = vpop.permute.xlu0 %192
    %v194 = vrot.slane %v191, 2
    %v195 = vrot.slane %v193, 2
    %v196 = vsel %vm75, %v194, %v195
    %vm197 = vcmask 515072
    %v198 = vsel %vm197, %v191, %v196
    %v199 = vsel %vm197, %v193, %v195
    %v202 = vadd.f32 %v182, %v198
    %v203 = vadd.f32 %v183, %v199
    %s204 = sld [smem:[#allocation2 + $0x400]]
    %v205 = vstv %s204
    %v206 = vmul.f32 %v205, %v48
    %v207 = vmul.f32 %v205, %v50
    %210 = vrot.lane.b32.xlu0 %v206, 62
    %v211 = vpop.permute.xlu0 %210
    %212 = vrot.lane.b32.xlu0 %v207, 62
    %v213 = vpop.permute.xlu0 %212
    %v214 = vrot.slane %v211, 2
    %v215 = vrot.slane %v213, 2
    %v216 = vsel %vm75, %v214, %v215
    %vm217 = vcmask 506880
    %v218 = vsel %vm217, %v211, %v216
    %v219 = vsel %vm217, %v213, %v215
    %v222 = vadd.f32 %v202, %v218
    %v223 = vadd.f32 %v203, %v219
    %v224 = vmax.f32 %v222, 0.0
    %v225 = vmax.f32 %v223, 0.0
    %v226 = vld [vmem:[%s3] sm:$0xff]
    %v227 = vld [vmem:[%s3 + $0x8] sm:$0xff]
    %v228 = vld [vmem:[%s3 + $0x10] sm:$0xff]
    %v229 = vld [vmem:[%s3 + $0x18] sm:$0xff]
    %v230 = vld [vmem:[%s3 + $0x20] sm:$0xff]
    %v231 = vld [vmem:[%s3 + $0x28] sm:$0xff]
    %v232 = vld [vmem:[%s3 + $0x30] sm:$0xff]
    %v233 = vld [vmem:[%s3 + $0x38] sm:$0xff]
    %v234 = vld [vmem:[%s3 + $0x40] sm:$0xff]
    %v235 = vld [vmem:[%s3 + $0x48] sm:$0xff]
    %v236 = vld [vmem:[%s3 + $0x50] sm:$0xff]
    %v237 = vld [vmem:[%s3 + $0x58] sm:$0xff]
    %v238 = vld [vmem:[%s3 + $0x60] sm:$0xff]
    %v239 = vld [vmem:[%s3 + $0x68] sm:$0xff]
    %v240 = vld [vmem:[%s3 + $0x70] sm:$0xff]
    %v241 = vld [vmem:[%s3 + $0x78] sm:$0xff]
    %v242 = vld [vmem:[%s3 + $0x80] sm:$0xff]
    %v243 = vld [vmem:[%s3 + $0x88] sm:$0xff]
    %v244 = vld [vmem:[%s3 + $0x90] sm:$0xff]
    %v245 = vld [vmem:[%s3 + $0x98] sm:$0xff]
    %v246 = vld [vmem:[%s3 + $0xa0] sm:$0xff]
    %v247 = vld [vmem:[%s3 + $0xa8] sm:$0xff]
    %v248 = vld [vmem:[%s3 + $0xb0] sm:$0xff]
    %v249 = vld [vmem:[%s3 + $0xb8] sm:$0xff]
    %v250 = vld [vmem:[%s3 + $0xc0] sm:$0xff]
    %v251 = vld [vmem:[%s3 + $0xc8] sm:$0xff]
    %v252 = vld [vmem:[%s3 + $0xd0] sm:$0xff]
    %v253 = vld [vmem:[%s3 + $0xd8] sm:$0xff]
    %v254 = vld [vmem:[%s3 + $0xe0] sm:$0xff]
    %v255 = vld [vmem:[%s3 + $0xe8] sm:$0xff]
    %v256 = vld [vmem:[%s3 + $0xf0] sm:$0xff]
    %v257 = vld [vmem:[%s3 + $0xf8] sm:$0xff]
    %v258 = vld [vmem:[%s3 + $0x100] sm:$0xff]
    %v259 = vld [vmem:[%s3 + $0x108] sm:$0xff]
    %v260 = vld [vmem:[%s3 + $0x110] sm:$0xff]
    %v261 = vld [vmem:[%s3 + $0x118] sm:$0xff]
    %v262 = vld [vmem:[%s3 + $0x120] sm:$0xff]
    %v263 = vld [vmem:[%s3 + $0x128] sm:$0xff]
    %v264 = vld [vmem:[%s3 + $0x130] sm:$0xff]
    %v265 = vld [vmem:[%s3 + $0x138] sm:$0xff]
    %v266 = vld [vmem:[%s3 + $0x140] sm:$0xff]
    %v267 = vld [vmem:[%s3 + $0x148] sm:$0xff]
    %v268 = vld [vmem:[%s3 + $0x150] sm:$0xff]
    %v269 = vld [vmem:[%s3 + $0x158] sm:$0xff]
    %v270 = vld [vmem:[%s3 + $0x160] sm:$0xff]
    %v271 = vld [vmem:[%s3 + $0x168] sm:$0xff]
    %v272 = vld [vmem:[%s3 + $0x170] sm:$0xff]
    %v273 = vld [vmem:[%s3 + $0x178] sm:$0xff]
    %v274 = vld [vmem:[%s3 + $0x180] sm:$0xff]
    %v275 = vld [vmem:[%s3 + $0x188] sm:$0xff]
    %v276 = vld [vmem:[%s3 + $0x190] sm:$0xff]
    %v277 = vld [vmem:[%s3 + $0x198] sm:$0xff]
    %v278 = vld [vmem:[%s3 + $0x1a0] sm:$0xff]
    %v279 = vld [vmem:[%s3 + $0x1a8] sm:$0xff]
    %v280 = vld [vmem:[%s3 + $0x1b0] sm:$0xff]
    %v281 = vld [vmem:[%s3 + $0x1b8] sm:$0xff]
    %v282 = vld [vmem:[%s3 + $0x1c0] sm:$0xff]
    %v283 = vld [vmem:[%s3 + $0x1c8] sm:$0xff]
    %v284 = vld [vmem:[%s3 + $0x1d0] sm:$0xff]
    %v285 = vld [vmem:[%s3 + $0x1d8] sm:$0xff]
    %v286 = vld [vmem:[%s3 + $0x1e0] sm:$0xff]
    %v287 = vld [vmem:[%s3 + $0x1e8] sm:$0xff]
    %v288 = vld [vmem:[%s3 + $0x1f0] sm:$0xff]
    %v289 = vld [vmem:[%s3 + $0x1f8] sm:$0xff]
    %v290 = vld [vmem:[%s3 + $0x200] sm:$0xff]
    %v291 = vld [vmem:[%s3 + $0x208] sm:$0xff]
    %v292 = vld [vmem:[%s3 + $0x210] sm:$0xff]
    %v293 = vld [vmem:[%s3 + $0x218] sm:$0xff]
    %v294 = vld [vmem:[%s3 + $0x220] sm:$0xff]
    %v295 = vld [vmem:[%s3 + $0x228] sm:$0xff]
    %v296 = vld [vmem:[%s3 + $0x230] sm:$0xff]
    %v297 = vld [vmem:[%s3 + $0x238] sm:$0xff]
    %v298 = vld [vmem:[%s3 + $0x240] sm:$0xff]
    %v299 = vld [vmem:[%s3 + $0x248] sm:$0xff]
    %v300 = vld [vmem:[%s3 + $0x250] sm:$0xff]
    %v301 = vld [vmem:[%s3 + $0x258] sm:$0xff]
    %v302 = vld [vmem:[%s3 + $0x260] sm:$0xff]
    %v303 = vld [vmem:[%s3 + $0x268] sm:$0xff]
    %v304 = vld [vmem:[%s3 + $0x270] sm:$0xff]
    %v305 = vld [vmem:[%s3 + $0x278] sm:$0xff]
    %v306 = vld [vmem:[%s3 + $0x280] sm:$0xff]
    %v307 = vld [vmem:[%s3 + $0x288] sm:$0xff]
    %v308 = vld [vmem:[%s3 + $0x290] sm:$0xff]
    %v309 = vld [vmem:[%s3 + $0x298] sm:$0xff]
    %v310 = vld [vmem:[%s3 + $0x2a0] sm:$0xff]
    %v311 = vld [vmem:[%s3 + $0x2a8] sm:$0xff]
    %v312 = vld [vmem:[%s3 + $0x2b0] sm:$0xff]
    %v313 = vld [vmem:[%s3 + $0x2b8] sm:$0xff]
    %v314 = vld [vmem:[%s3 + $0x2c0] sm:$0xff]
    %v315 = vld [vmem:[%s3 + $0x2c8] sm:$0xff]
    %v316 = vld [vmem:[%s3 + $0x2d0] sm:$0xff]
    %v317 = vld [vmem:[%s3 + $0x2d8] sm:$0xff]
    %v318 = vld [vmem:[%s3 + $0x2e0] sm:$0xff]
    %v319 = vld [vmem:[%s3 + $0x2e8] sm:$0xff]
    %v320 = vld [vmem:[%s3 + $0x2f0] sm:$0xff]
    %v321 = vld [vmem:[%s3 + $0x2f8] sm:$0xff]
    %v322 = vld [vmem:[%s3 + $0x300] sm:$0xff]
    %v323 = vld [vmem:[%s3 + $0x308] sm:$0xff]
    %v324 = vld [vmem:[%s3 + $0x310] sm:$0xff]
    %v325 = vld [vmem:[%s3 + $0x318] sm:$0xff]
    %v326 = vld [vmem:[%s3 + $0x320] sm:$0xff]
    %v327 = vld [vmem:[%s3 + $0x328] sm:$0xff]
    %v328 = vld [vmem:[%s3 + $0x330] sm:$0xff]
    %v329 = vld [vmem:[%s3 + $0x338] sm:$0xff]
    %332 = vst [vmem:[#allocation1] ss:$4 sm:$0xff] %v224
    %s333 = scalar_lea.vmem [#allocation1], 32
    %334 = vst [vmem:[%s333] ss:$4 sm:$0xff] %v225
    %v335 = vld.sshfl [vmem:[#allocation1] sm:$0xff pattern:$0x73625140]
    %v336 = vld.sshfl [vmem:[#allocation1 + $0x8] sm:$0xff pattern:$0x73625140]
    %v337 = vld.sshfl [vmem:[#allocation1 + $0x10] sm:$0xff pattern:$0x73625140]
    %v338 = vld.sshfl [vmem:[#allocation1 + $0x18] sm:$0xff pattern:$0x73625140]
    %v339 = vld.sshfl [vmem:[#allocation1 + $0x20] sm:$0xff pattern:$0x73625140]
    %v340 = vld.sshfl [vmem:[#allocation1 + $0x28] sm:$0xff pattern:$0x73625140]
    %v341 = vld.sshfl [vmem:[#allocation1 + $0x30] sm:$0xff pattern:$0x73625140]
    %v348 = vsel %vm177, %v341, 0
    %350 = vmatpush.msra.mxu0 %v241
    %351 = vmatpush.msra.mxu0 %v240
    %352 = vmatpush.msra.mxu0 %v239
    %353 = vmatpush.msra.mxu0 %v238
    %354 = vmatpush.msra.mxu0 %v237
    %355 = vmatpush.msra.mxu0 %v236
    %356 = vmatpush.msra.mxu0 %v235
    %357 = vmatpush.msra.mxu0 %v234
    %358 = vmatpush.msra.mxu0 %v233
    %359 = vmatpush.msra.mxu0 %v232
    %360 = vmatpush.msra.mxu0 %v231
    %361 = vmatpush.msra.mxu0 %v230
    %362 = vmatpush.msra.mxu0 %v229
    %363 = vmatpush.msra.mxu0 %v228
    %364 = vmatpush.msra.mxu0 %v227
    %365 = vmatpush.msra.mxu0 %v226
    %366 = vmatmul.f32.gmra.mxu0 %v335
    %v367 = vpop.f32.mrf.mxu0
    %v368 = vadd.f32 0.0, %v367
    %369 = vdwg.mxu0
    %370 = vmatpush.msra.mxu0 %v257
    %371 = vmatpush.msra.mxu0 %v256
    %372 = vmatpush.msra.mxu0 %v255
    %373 = vmatpush.msra.mxu0 %v254
    %374 = vmatpush.msra.mxu0 %v253
    %375 = vmatpush.msra.mxu0 %v252
    %376 = vmatpush.msra.mxu0 %v251
    %377 = vmatpush.msra.mxu0 %v250
    %378 = vmatpush.msra.mxu0 %v249
    %379 = vmatpush.msra.mxu0 %v248
    %380 = vmatpush.msra.mxu0 %v247
    %381 = vmatpush.msra.mxu0 %v246
    %382 = vmatpush.msra.mxu0 %v245
    %383 = vmatpush.msra.mxu0 %v244
    %384 = vmatpush.msra.mxu0 %v243
    %385 = vmatpush.msra.mxu0 %v242
    %386 = vmatmul.f32.gmra.mxu0 %v336
    %v387 = vpop.f32.mrf.mxu0
    %v388 = vadd.f32 %v368, %v387
    %389 = vdwg.mxu0
    %390 = vmatpush.msra.mxu0 %v273
    %391 = vmatpush.msra.mxu0 %v272
    %392 = vmatpush.msra.mxu0 %v271
    %393 = vmatpush.msra.mxu0 %v270
    %394 = vmatpush.msra.mxu0 %v269
    %395 = vmatpush.msra.mxu0 %v268
    %396 = vmatpush.msra.mxu0 %v267
    %397 = vmatpush.msra.mxu0 %v266
    %398 = vmatpush.msra.mxu0 %v265
    %399 = vmatpush.msra.mxu0 %v264
    %400 = vmatpush.msra.mxu0 %v263
    %401 = vmatpush.msra.mxu0 %v262
    %402 = vmatpush.msra.mxu0 %v261
    %403 = vmatpush.msra.mxu0 %v260
    %404 = vmatpush.msra.mxu0 %v259
    %405 = vmatpush.msra.mxu0 %v258
    %406 = vmatmul.f32.gmra.mxu0 %v337
    %v407 = vpop.f32.mrf.mxu0
    %v408 = vadd.f32 %v388, %v407
    %409 = vdwg.mxu0
    %410 = vmatpush.msra.mxu0 %v289
    %411 = vmatpush.msra.mxu0 %v288
    %412 = vmatpush.msra.mxu0 %v287
    %413 = vmatpush.msra.mxu0 %v286
    %414 = vmatpush.msra.mxu0 %v285
    %415 = vmatpush.msra.mxu0 %v284
    %416 = vmatpush.msra.mxu0 %v283
    %417 = vmatpush.msra.mxu0 %v282
    %418 = vmatpush.msra.mxu0 %v281
    %419 = vmatpush.msra.mxu0 %v280
    %420 = vmatpush.msra.mxu0 %v279
    %421 = vmatpush.msra.mxu0 %v278
    %422 = vmatpush.msra.mxu0 %v277
    %423 = vmatpush.msra.mxu0 %v276
    %424 = vmatpush.msra.mxu0 %v275
    %425 = vmatpush.msra.mxu0 %v274
    %426 = vmatmul.f32.gmra.mxu0 %v338
    %v427 = vpop.f32.mrf.mxu0
    %v428 = vadd.f32 %v408, %v427
    %429 = vdwg.mxu0
    %430 = vmatpush.msra.mxu0 %v305
    %431 = vmatpush.msra.mxu0 %v304
    %432 = vmatpush.msra.mxu0 %v303
    %433 = vmatpush.msra.mxu0 %v302
    %434 = vmatpush.msra.mxu0 %v301
    %435 = vmatpush.msra.mxu0 %v300
    %436 = vmatpush.msra.mxu0 %v299
    %437 = vmatpush.msra.mxu0 %v298
    %438 = vmatpush.msra.mxu0 %v297
    %439 = vmatpush.msra.mxu0 %v296
    %440 = vmatpush.msra.mxu0 %v295
    %441 = vmatpush.msra.mxu0 %v294
    %442 = vmatpush.msra.mxu0 %v293
    %443 = vmatpush.msra.mxu0 %v292
    %444 = vmatpush.msra.mxu0 %v291
    %445 = vmatpush.msra.mxu0 %v290
    %446 = vmatmul.f32.gmra.mxu0 %v339
    %v447 = vpop.f32.mrf.mxu0
    %v448 = vadd.f32 %v428, %v447
    %449 = vdwg.mxu0
    %450 = vmatpush.msra.mxu0 %v321
    %451 = vmatpush.msra.mxu0 %v320
    %452 = vmatpush.msra.mxu0 %v319
    %453 = vmatpush.msra.mxu0 %v318
    %454 = vmatpush.msra.mxu0 %v317
    %455 = vmatpush.msra.mxu0 %v316
    %456 = vmatpush.msra.mxu0 %v315
    %457 = vmatpush.msra.mxu0 %v314
    %458 = vmatpush.msra.mxu0 %v313
    %459 = vmatpush.msra.mxu0 %v312
    %460 = vmatpush.msra.mxu0 %v311
    %461 = vmatpush.msra.mxu0 %v310
    %462 = vmatpush.msra.mxu0 %v309
    %463 = vmatpush.msra.mxu0 %v308
    %464 = vmatpush.msra.mxu0 %v307
    %465 = vmatpush.msra.mxu0 %v306
    %466 = vmatmul.f32.gmra.mxu0 %v340
    %v467 = vpop.f32.mrf.mxu0
    %v468 = vadd.f32 %v448, %v467
    %469 = vdwg.mxu0
    %470 = vmatpush.msra.mxu0 0.0
    %471 = vmatpush.msra.mxu0 0.0
    %472 = vmatpush.msra.mxu0 0.0
    %473 = vmatpush.msra.mxu0 0.0
    %474 = vmatpush.msra.mxu0 0.0
    %475 = vmatpush.msra.mxu0 0.0
    %476 = vmatpush.msra.mxu0 0.0
    %477 = vmatpush.msra.mxu0 0.0
    %478 = vmatpush.msra.mxu0 %v329
    %479 = vmatpush.msra.mxu0 %v328
    %480 = vmatpush.msra.mxu0 %v327
    %481 = vmatpush.msra.mxu0 %v326
    %482 = vmatpush.msra.mxu0 %v325
    %483 = vmatpush.msra.mxu0 %v324
    %484 = vmatpush.msra.mxu0 %v323
    %485 = vmatpush.msra.mxu0 %v322
    %486 = vmatmul.f32.gmra.mxu0 %v348
    %v487 = vpop.f32.mrf.mxu0
    %v488 = vadd.f32 %v468, %v487
    %489 = vdwg.mxu0
    %v490 = vadd.f32 %v53, %v488
    %s491 = sld [smem:[#allocation5 + $0x1]]
    %s492 = sld [smem:[#allocation2 + $0x1]]
    %v493 = vstv %s492
    %v494 = vmul.f32 %v493, %v48
    %v495 = vmul.f32 %v493, %v49
    %v496 = vstv %s491
    %v497 = vadd.f32 %v496, %v494
    %v498 = vadd.f32 %v496, %v495
    %s499 = sld [smem:[#allocation2 + $0x81]]
    %v500 = vstv %s499
    %v501 = vmul.f32 %v500, %v48
    %v502 = vmul.f32 %v500, %v49
    %505 = vrot.lane.b32.xlu0 %v501, 127
    %v506 = vpop.permute.xlu0 %505
    %507 = vrot.lane.b32.xlu0 %v502, 127
    %v508 = vpop.permute.xlu0 %507
    %v509 = vrot.slane %v506, 2
    %v510 = vrot.slane %v508, 2
    %v511 = vsel %vm75, %v509, %v510
    %v512 = vsel %vm77, %v506, %v511
    %v513 = vsel %vm77, %v508, %v510
    %v516 = vadd.f32 %v497, %v512
    %v517 = vadd.f32 %v498, %v513
    %s518 = sld [smem:[#allocation2 + $0x101]]
    %v519 = vstv %s518
    %v520 = vmul.f32 %v519, %v48
    %v521 = vmul.f32 %v519, %v49
    %524 = vrot.lane.b32.xlu0 %v520, 126
    %v525 = vpop.permute.xlu0 %524
    %526 = vrot.lane.b32.xlu0 %v521, 126
    %v527 = vpop.permute.xlu0 %526
    %v528 = vrot.slane %v525, 2
    %v529 = vrot.slane %v527, 2
    %v530 = vsel %vm75, %v528, %v529
    %v531 = vsel %vm97, %v525, %v530
    %v532 = vsel %vm97, %v527, %v529
    %v535 = vadd.f32 %v516, %v531
    %v536 = vadd.f32 %v517, %v532
    %s537 = sld [smem:[#allocation2 + $0x181]]
    %v538 = vstv %s537
    %v539 = vmul.f32 %v538, %v48
    %v540 = vmul.f32 %v538, %v49
    %543 = vrot.lane.b32.xlu0 %v539, 96
    %v544 = vpop.permute.xlu0 %543
    %545 = vrot.lane.b32.xlu0 %v540, 96
    %v546 = vpop.permute.xlu0 %545
    %v547 = vrot.slane %v544, 2
    %v548 = vrot.slane %v546, 2
    %v549 = vsel %vm75, %v547, %v548
    %v550 = vsel %vm117, %v544, %v549
    %v551 = vsel %vm117, %v546, %v548
    %v554 = vadd.f32 %v535, %v550
    %v555 = vadd.f32 %v536, %v551
    %s556 = sld [smem:[#allocation2 + $0x201]]
    %v557 = vstv %s556
    %v558 = vmul.f32 %v557, %v48
    %v559 = vmul.f32 %v557, %v49
    %562 = vrot.lane.b32.xlu0 %v558, 95
    %v563 = vpop.permute.xlu0 %562
    %564 = vrot.lane.b32.xlu0 %v559, 95
    %v565 = vpop.permute.xlu0 %564
    %v566 = vrot.slane %v563, 2
    %v567 = vrot.slane %v565, 2
    %v568 = vsel %vm75, %v566, %v567
    %v569 = vsel %vm137, %v563, %v568
    %v570 = vsel %vm137, %v565, %v567
    %v573 = vadd.f32 %v554, %v569
    %v574 = vadd.f32 %v555, %v570
    %s575 = sld [smem:[#allocation2 + $0x281]]
    %v576 = vstv %s575
    %v577 = vmul.f32 %v576, %v48
    %v578 = vmul.f32 %v576, %v49
    %581 = vrot.lane.b32.xlu0 %v577, 94
    %v582 = vpop.permute.xlu0 %581
    %583 = vrot.lane.b32.xlu0 %v578, 94
    %v584 = vpop.permute.xlu0 %583
    %v585 = vrot.slane %v582, 2
    %v586 = vrot.slane %v584, 2
    %v587 = vsel %vm75, %v585, %v586
    %v588 = vsel %vm157, %v582, %v587
    %v589 = vsel %vm157, %v584, %v586
    %v592 = vadd.f32 %v573, %v588
    %v593 = vadd.f32 %v574, %v589
    %s594 = sld [smem:[#allocation2 + $0x301]]
    %v595 = vstv %s594
    %v596 = vmul.f32 %v595, %v48
    %v597 = vmul.f32 %v595, %v49
    %600 = vrot.lane.b32.xlu0 %v596, 64
    %v601 = vpop.permute.xlu0 %600
    %602 = vrot.lane.b32.xlu0 %v597, 64
    %v603 = vpop.permute.xlu0 %602
    %v604 = vrot.slane %v601, 2
    %v605 = vrot.slane %v603, 2
    %v606 = vsel %vm75, %v604, %v605
    %v607 = vsel %vm177, %v601, %v606
    %v608 = vsel %vm177, %v603, %v605
    %v611 = vadd.f32 %v592, %v607
    %v612 = vadd.f32 %v593, %v608
    %s613 = sld [smem:[#allocation2 + $0x381]]
    %v614 = vstv %s613
    %v615 = vmul.f32 %v614, %v48
    %v616 = vmul.f32 %v614, %v50
    %619 = vrot.lane.b32.xlu0 %v615, 63
    %v620 = vpop.permute.xlu0 %619
    %621 = vrot.lane.b32.xlu0 %v616, 63
    %v622 = vpop.permute.xlu0 %621
    %v623 = vrot.slane %v620, 2
    %v624 = vrot.slane %v622, 2
    %v625 = vsel %vm75, %v623, %v624
    %v626 = vsel %vm197, %v620, %v625
    %v627 = vsel %vm197, %v622, %v624
    %v630 = vadd.f32 %v611, %v626
    %v631 = vadd.f32 %v612, %v627
    %s632 = sld [smem:[#allocation2 + $0x401]]
    %v633 = vstv %s632
    %v634 = vmul.f32 %v633, %v48
    %v635 = vmul.f32 %v633, %v50
    %638 = vrot.lane.b32.xlu0 %v634, 62
    %v639 = vpop.permute.xlu0 %638
    %640 = vrot.lane.b32.xlu0 %v635, 62
    %v641 = vpop.permute.xlu0 %640
    %v642 = vrot.slane %v639, 2
    %v643 = vrot.slane %v641, 2
    %v644 = vsel %vm75, %v642, %v643
    %v645 = vsel %vm217, %v639, %v644
    %v646 = vsel %vm217, %v641, %v643
    %v649 = vadd.f32 %v630, %v645
    %v650 = vadd.f32 %v631, %v646
    %v651 = vmax.f32 %v649, 0.0
    %v652 = vmax.f32 %v650, 0.0
    %s653 = scalar_lea.vmem %s3, 832
    %v654 = vld [vmem:[%s653] sm:$0xff]
    %v655 = vld [vmem:[%s653 + $0x8] sm:$0xff]
    %v656 = vld [vmem:[%s653 + $0x10] sm:$0xff]
    %v657 = vld [vmem:[%s653 + $0x18] sm:$0xff]
    %v658 = vld [vmem:[%s653 + $0x20] sm:$0xff]
    %v659 = vld [vmem:[%s653 + $0x28] sm:$0xff]
    %v660 = vld [vmem:[%s653 + $0x30] sm:$0xff]
    %v661 = vld [vmem:[%s653 + $0x38] sm:$0xff]
    %v662 = vld [vmem:[%s653 + $0x40] sm:$0xff]
    %v663 = vld [vmem:[%s653 + $0x48] sm:$0xff]
    %v664 = vld [vmem:[%s653 + $0x50] sm:$0xff]
    %v665 = vld [vmem:[%s653 + $0x58] sm:$0xff]
    %v666 = vld [vmem:[%s653 + $0x60] sm:$0xff]
    %v667 = vld [vmem:[%s653 + $0x68] sm:$0xff]
    %v668 = vld [vmem:[%s653 + $0x70] sm:$0xff]
    %v669 = vld [vmem:[%s653 + $0x78] sm:$0xff]
    %v670 = vld [vmem:[%s653 + $0x80] sm:$0xff]
    %v671 = vld [vmem:[%s653 + $0x88] sm:$0xff]
    %v672 = vld [vmem:[%s653 + $0x90] sm:$0xff]
    %v673 = vld [vmem:[%s653 + $0x98] sm:$0xff]
    %v674 = vld [vmem:[%s653 + $0xa0] sm:$0xff]
    %v675 = vld [vmem:[%s653 + $0xa8] sm:$0xff]
    %v676 = vld [vmem:[%s653 + $0xb0] sm:$0xff]
    %v677 = vld [vmem:[%s653 + $0xb8] sm:$0xff]
    %v678 = vld [vmem:[%s653 + $0xc0] sm:$0xff]
    %v679 = vld [vmem:[%s653 + $0xc8] sm:$0xff]
    %v680 = vld [vmem:[%s653 + $0xd0] sm:$0xff]
    %v681 = vld [vmem:[%s653 + $0xd8] sm:$0xff]
    %v682 = vld [vmem:[%s653 + $0xe0] sm:$0xff]
    %v683 = vld [vmem:[%s653 + $0xe8] sm:$0xff]
    %v684 = vld [vmem:[%s653 + $0xf0] sm:$0xff]
    %v685 = vld [vmem:[%s653 + $0xf8] sm:$0xff]
    %v686 = vld [vmem:[%s653 + $0x100] sm:$0xff]
    %v687 = vld [vmem:[%s653 + $0x108] sm:$0xff]
    %v688 = vld [vmem:[%s653 + $0x110] sm:$0xff]
    %v689 = vld [vmem:[%s653 + $0x118] sm:$0xff]
    %v690 = vld [vmem:[%s653 + $0x120] sm:$0xff]
    %v691 = vld [vmem:[%s653 + $0x128] sm:$0xff]
    %v692 = vld [vmem:[%s653 + $0x130] sm:$0xff]
    %v693 = vld [vmem:[%s653 + $0x138] sm:$0xff]
    %v694 = vld [vmem:[%s653 + $0x140] sm:$0xff]
    %v695 = vld [vmem:[%s653 + $0x148] sm:$0xff]
    %v696 = vld [vmem:[%s653 + $0x150] sm:$0xff]
    %v697 = vld [vmem:[%s653 + $0x158] sm:$0xff]
    %v698 = vld [vmem:[%s653 + $0x160] sm:$0xff]
    %v699 = vld [vmem:[%s653 + $0x168] sm:$0xff]
    %v700 = vld [vmem:[%s653 + $0x170] sm:$0xff]
    %v701 = vld [vmem:[%s653 + $0x178] sm:$0xff]
    %v702 = vld [vmem:[%s653 + $0x180] sm:$0xff]
    %v703 = vld [vmem:[%s653 + $0x188] sm:$0xff]
    %v704 = vld [vmem:[%s653 + $0x190] sm:$0xff]
    %v705 = vld [vmem:[%s653 + $0x198] sm:$0xff]
    %v706 = vld [vmem:[%s653 + $0x1a0] sm:$0xff]
    %v707 = vld [vmem:[%s653 + $0x1a8] sm:$0xff]
    %v708 = vld [vmem:[%s653 + $0x1b0] sm:$0xff]
    %v709 = vld [vmem:[%s653 + $0x1b8] sm:$0xff]
    %v710 = vld [vmem:[%s653 + $0x1c0] sm:$0xff]
    %v711 = vld [vmem:[%s653 + $0x1c8] sm:$0xff]
    %v712 = vld [vmem:[%s653 + $0x1d0] sm:$0xff]
    %v713 = vld [vmem:[%s653 + $0x1d8] sm:$0xff]
    %v714 = vld [vmem:[%s653 + $0x1e0] sm:$0xff]
    %v715 = vld [vmem:[%s653 + $0x1e8] sm:$0xff]
    %v716 = vld [vmem:[%s653 + $0x1f0] sm:$0xff]
    %v717 = vld [vmem:[%s653 + $0x1f8] sm:$0xff]
    %v718 = vld [vmem:[%s653 + $0x200] sm:$0xff]
    %v719 = vld [vmem:[%s653 + $0x208] sm:$0xff]
    %v720 = vld [vmem:[%s653 + $0x210] sm:$0xff]
    %v721 = vld [vmem:[%s653 + $0x218] sm:$0xff]
    %v722 = vld [vmem:[%s653 + $0x220] sm:$0xff]
    %v723 = vld [vmem:[%s653 + $0x228] sm:$0xff]
    %v724 = vld [vmem:[%s653 + $0x230] sm:$0xff]
    %v725 = vld [vmem:[%s653 + $0x238] sm:$0xff]
    %v726 = vld [vmem:[%s653 + $0x240] sm:$0xff]
    %v727 = vld [vmem:[%s653 + $0x248] sm:$0xff]
    %v728 = vld [vmem:[%s653 + $0x250] sm:$0xff]
    %v729 = vld [vmem:[%s653 + $0x258] sm:$0xff]
    %v730 = vld [vmem:[%s653 + $0x260] sm:$0xff]
    %v731 = vld [vmem:[%s653 + $0x268] sm:$0xff]
    %v732 = vld [vmem:[%s653 + $0x270] sm:$0xff]
    %v733 = vld [vmem:[%s653 + $0x278] sm:$0xff]
    %v734 = vld [vmem:[%s653 + $0x280] sm:$0xff]
    %v735 = vld [vmem:[%s653 + $0x288] sm:$0xff]
    %v736 = vld [vmem:[%s653 + $0x290] sm:$0xff]
    %v737 = vld [vmem:[%s653 + $0x298] sm:$0xff]
    %v738 = vld [vmem:[%s653 + $0x2a0] sm:$0xff]
    %v739 = vld [vmem:[%s653 + $0x2a8] sm:$0xff]
    %v740 = vld [vmem:[%s653 + $0x2b0] sm:$0xff]
    %v741 = vld [vmem:[%s653 + $0x2b8] sm:$0xff]
    %v742 = vld [vmem:[%s653 + $0x2c0] sm:$0xff]
    %v743 = vld [vmem:[%s653 + $0x2c8] sm:$0xff]
    %v744 = vld [vmem:[%s653 + $0x2d0] sm:$0xff]
    %v745 = vld [vmem:[%s653 + $0x2d8] sm:$0xff]
    %v746 = vld [vmem:[%s653 + $0x2e0] sm:$0xff]
    %v747 = vld [vmem:[%s653 + $0x2e8] sm:$0xff]
    %v748 = vld [vmem:[%s653 + $0x2f0] sm:$0xff]
    %v749 = vld [vmem:[%s653 + $0x2f8] sm:$0xff]
    %v750 = vld [vmem:[%s653 + $0x300] sm:$0xff]
    %v751 = vld [vmem:[%s653 + $0x308] sm:$0xff]
    %v752 = vld [vmem:[%s653 + $0x310] sm:$0xff]
    %v753 = vld [vmem:[%s653 + $0x318] sm:$0xff]
    %v754 = vld [vmem:[%s653 + $0x320] sm:$0xff]
    %v755 = vld [vmem:[%s653 + $0x328] sm:$0xff]
    %v756 = vld [vmem:[%s653 + $0x330] sm:$0xff]
    %v757 = vld [vmem:[%s653 + $0x338] sm:$0xff]
    %760 = vst [vmem:[#allocation1] ss:$4 sm:$0xff] %v651
    %s761 = scalar_lea.vmem [#allocation1], 32
    %762 = vst [vmem:[%s761] ss:$4 sm:$0xff] %v652
    %v763 = vld.sshfl [vmem:[#allocation1] sm:$0xff pattern:$0x73625140]
    %v764 = vld.sshfl [vmem:[#allocation1 + $0x8] sm:$0xff pattern:$0x73625140]
    %v765 = vld.sshfl [vmem:[#allocation1 + $0x10] sm:$0xff pattern:$0x73625140]
    %v766 = vld.sshfl [vmem:[#allocation1 + $0x18] sm:$0xff pattern:$0x73625140]
    %v767 = vld.sshfl [vmem:[#allocation1 + $0x20] sm:$0xff pattern:$0x73625140]
    %v768 = vld.sshfl [vmem:[#allocation1 + $0x28] sm:$0xff pattern:$0x73625140]
    %v769 = vld.sshfl [vmem:[#allocation1 + $0x30] sm:$0xff pattern:$0x73625140]
    %v776 = vsel %vm177, %v769, 0
    %778 = vmatpush.msra.mxu0 %v669
    %779 = vmatpush.msra.mxu0 %v668
    %780 = vmatpush.msra.mxu0 %v667
    %781 = vmatpush.msra.mxu0 %v666
    %782 = vmatpush.msra.mxu0 %v665
    %783 = vmatpush.msra.mxu0 %v664
    %784 = vmatpush.msra.mxu0 %v663
    %785 = vmatpush.msra.mxu0 %v662
    %786 = vmatpush.msra.mxu0 %v661
    %787 = vmatpush.msra.mxu0 %v660
    %788 = vmatpush.msra.mxu0 %v659
    %789 = vmatpush.msra.mxu0 %v658
    %790 = vmatpush.msra.mxu0 %v657
    %791 = vmatpush.msra.mxu0 %v656
    %792 = vmatpush.msra.mxu0 %v655
    %793 = vmatpush.msra.mxu0 %v654
    %794 = vmatmul.f32.gmra.mxu0 %v763
    %v795 = vpop.f32.mrf.mxu0
    %v796 = vadd.f32 0.0, %v795
    %797 = vdwg.mxu0
    %798 = vmatpush.msra.mxu0 %v685
    %799 = vmatpush.msra.mxu0 %v684
    %800 = vmatpush.msra.mxu0 %v683
    %801 = vmatpush.msra.mxu0 %v682
    %802 = vmatpush.msra.mxu0 %v681
    %803 = vmatpush.msra.mxu0 %v680
    %804 = vmatpush.msra.mxu0 %v679
    %805 = vmatpush.msra.mxu0 %v678
    %806 = vmatpush.msra.mxu0 %v677
    %807 = vmatpush.msra.mxu0 %v676
    %808 = vmatpush.msra.mxu0 %v675
    %809 = vmatpush.msra.mxu0 %v674
    %810 = vmatpush.msra.mxu0 %v673
    %811 = vmatpush.msra.mxu0 %v672
    %812 = vmatpush.msra.mxu0 %v671
    %813 = vmatpush.msra.mxu0 %v670
    %814 = vmatmul.f32.gmra.mxu0 %v764
    %v815 = vpop.f32.mrf.mxu0
    %v816 = vadd.f32 %v796, %v815
    %817 = vdwg.mxu0
    %818 = vmatpush.msra.mxu0 %v701
    %819 = vmatpush.msra.mxu0 %v700
    %820 = vmatpush.msra.mxu0 %v699
    %821 = vmatpush.msra.mxu0 %v698
    %822 = vmatpush.msra.mxu0 %v697
    %823 = vmatpush.msra.mxu0 %v696
    %824 = vmatpush.msra.mxu0 %v695
    %825 = vmatpush.msra.mxu0 %v694
    %826 = vmatpush.msra.mxu0 %v693
    %827 = vmatpush.msra.mxu0 %v692
    %828 = vmatpush.msra.mxu0 %v691
    %829 = vmatpush.msra.mxu0 %v690
    %830 = vmatpush.msra.mxu0 %v689
    %831 = vmatpush.msra.mxu0 %v688
    %832 = vmatpush.msra.mxu0 %v687
    %833 = vmatpush.msra.mxu0 %v686
    %834 = vmatmul.f32.gmra.mxu0 %v765
    %v835 = vpop.f32.mrf.mxu0
    %v836 = vadd.f32 %v816, %v835
    %837 = vdwg.mxu0
    %838 = vmatpush.msra.mxu0 %v717
    %839 = vmatpush.msra.mxu0 %v716
    %840 = vmatpush.msra.mxu0 %v715
    %841 = vmatpush.msra.mxu0 %v714
    %842 = vmatpush.msra.mxu0 %v713
    %843 = vmatpush.msra.mxu0 %v712
    %844 = vmatpush.msra.mxu0 %v711
    %845 = vmatpush.msra.mxu0 %v710
    %846 = vmatpush.msra.mxu0 %v709
    %847 = vmatpush.msra.mxu0 %v708
    %848 = vmatpush.msra.mxu0 %v707
    %849 = vmatpush.msra.mxu0 %v706
    %850 = vmatpush.msra.mxu0 %v705
    %851 = vmatpush.msra.mxu0 %v704
    %852 = vmatpush.msra.mxu0 %v703
    %853 = vmatpush.msra.mxu0 %v702
    %854 = vmatmul.f32.gmra.mxu0 %v766
    %v855 = vpop.f32.mrf.mxu0
    %v856 = vadd.f32 %v836, %v855
    %857 = vdwg.mxu0
    %858 = vmatpush.msra.mxu0 %v733
    %859 = vmatpush.msra.mxu0 %v732
    %860 = vmatpush.msra.mxu0 %v731
    %861 = vmatpush.msra.mxu0 %v730
    %862 = vmatpush.msra.mxu0 %v729
    %863 = vmatpush.msra.mxu0 %v728
    %864 = vmatpush.msra.mxu0 %v727
    %865 = vmatpush.msra.mxu0 %v726
    %866 = vmatpush.msra.mxu0 %v725
    %867 = vmatpush.msra.mxu0 %v724
    %868 = vmatpush.msra.mxu0 %v723
    %869 = vmatpush.msra.mxu0 %v722
    %870 = vmatpush.msra.mxu0 %v721
    %871 = vmatpush.msra.mxu0 %v720
    %872 = vmatpush.msra.mxu0 %v719
    %873 = vmatpush.msra.mxu0 %v718
    %874 = vmatmul.f32.gmra.mxu0 %v767
    %v875 = vpop.f32.mrf.mxu0
    %v876 = vadd.f32 %v856, %v875
    %877 = vdwg.mxu0
    %878 = vmatpush.msra.mxu0 %v749
    %879 = vmatpush.msra.mxu0 %v748
    %880 = vmatpush.msra.mxu0 %v747
    %881 = vmatpush.msra.mxu0 %v746
    %882 = vmatpush.msra.mxu0 %v745
    %883 = vmatpush.msra.mxu0 %v744
    %884 = vmatpush.msra.mxu0 %v743
    %885 = vmatpush.msra.mxu0 %v742
    %886 = vmatpush.msra.mxu0 %v741
    %887 = vmatpush.msra.mxu0 %v740
    %888 = vmatpush.msra.mxu0 %v739
    %889 = vmatpush.msra.mxu0 %v738
    %890 = vmatpush.msra.mxu0 %v737
    %891 = vmatpush.msra.mxu0 %v736
    %892 = vmatpush.msra.mxu0 %v735
    %893 = vmatpush.msra.mxu0 %v734
    %894 = vmatmul.f32.gmra.mxu0 %v768
    %v895 = vpop.f32.mrf.mxu0
    %v896 = vadd.f32 %v876, %v895
    %897 = vdwg.mxu0
    %898 = vmatpush.msra.mxu0 0.0
    %899 = vmatpush.msra.mxu0 0.0
    %900 = vmatpush.msra.mxu0 0.0
    %901 = vmatpush.msra.mxu0 0.0
    %902 = vmatpush.msra.mxu0 0.0
    %903 = vmatpush.msra.mxu0 0.0
    %904 = vmatpush.msra.mxu0 0.0
    %905 = vmatpush.msra.mxu0 0.0
    %906 = vmatpush.msra.mxu0 %v757
    %907 = vmatpush.msra.mxu0 %v756
    %908 = vmatpush.msra.mxu0 %v755
    %909 = vmatpush.msra.mxu0 %v754
    %910 = vmatpush.msra.mxu0 %v753
    %911 = vmatpush.msra.mxu0 %v752
    %912 = vmatpush.msra.mxu0 %v751
    %913 = vmatpush.msra.mxu0 %v750
    %914 = vmatmul.f32.gmra.mxu0 %v776
    %v915 = vpop.f32.mrf.mxu0
    %v916 = vadd.f32 %v896, %v915
    %917 = vdwg.mxu0
    %v918 = vadd.f32 %v490, %v916
    %s919 = sld [smem:[#allocation5 + $0x2]]
    %s920 = sld [smem:[#allocation2 + $0x2]]
    %v921 = vstv %s920
    %v922 = vmul.f32 %v921, %v48
    %v923 = vmul.f32 %v921, %v49
    %v924 = vstv %s919
    %v925 = vadd.f32 %v924, %v922
    %v926 = vadd.f32 %v924, %v923
    %s927 = sld [smem:[#allocation2 + $0x82]]
    %v928 = vstv %s927
    %v929 = vmul.f32 %v928, %v48
    %v930 = vmul.f32 %v928, %v49
    %933 = vrot.lane.b32.xlu0 %v929, 127
    %v934 = vpop.permute.xlu0 %933
    %935 = vrot.lane.b32.xlu0 %v930, 127
    %v936 = vpop.permute.xlu0 %935
    %v937 = vrot.slane %v934, 2
    %v938 = vrot.slane %v936, 2
    %v939 = vsel %vm75, %v937, %v938
    %v940 = vsel %vm77, %v934, %v939
    %v941 = vsel %vm77, %v936, %v938
    %v944 = vadd.f32 %v925, %v940
    %v945 = vadd.f32 %v926, %v941
    %s946 = sld [smem:[#allocation2 + $0x102]]
    %v947 = vstv %s946
    %v948 = vmul.f32 %v947, %v48
    %v949 = vmul.f32 %v947, %v49
    %952 = vrot.lane.b32.xlu0 %v948, 126
    %v953 = vpop.permute.xlu0 %952
    %954 = vrot.lane.b32.xlu0 %v949, 126
    %v955 = vpop.permute.xlu0 %954
    %v956 = vrot.slane %v953, 2
    %v957 = vrot.slane %v955, 2
    %v958 = vsel %vm75, %v956, %v957
    %v959 = vsel %vm97, %v953, %v958
    %v960 = vsel %vm97, %v955, %v957
    %v963 = vadd.f32 %v944, %v959
    %v964 = vadd.f32 %v945, %v960
    %s965 = sld [smem:[#allocation2 + $0x182]]
    %v966 = vstv %s965
    %v967 = vmul.f32 %v966, %v48
    %v968 = vmul.f32 %v966, %v49
    %971 = vrot.lane.b32.xlu0 %v967, 96
    %v972 = vpop.permute.xlu0 %971
    %973 = vrot.lane.b32.xlu0 %v968, 96
    %v974 = vpop.permute.xlu0 %973
    %v975 = vrot.slane %v972, 2
    %v976 = vrot.slane %v974, 2
    %v977 = vsel %vm75, %v975, %v976
    %v978 = vsel %vm117, %v972, %v977
    %v979 = vsel %vm117, %v974, %v976
    %v982 = vadd.f32 %v963, %v978
    %v983 = vadd.f32 %v964, %v979
    %s984 = sld [smem:[#allocation2 + $0x202]]
    %v985 = vstv %s984
    %v986 = vmul.f32 %v985, %v48
    %v987 = vmul.f32 %v985, %v49
    %990 = vrot.lane.b32.xlu0 %v986, 95
    %v991 = vpop.permute.xlu0 %990
    %992 = vrot.lane.b32.xlu0 %v987, 95
    %v993 = vpop.permute.xlu0 %992
    %v994 = vrot.slane %v991, 2
    %v995 = vrot.slane %v993, 2
    %v996 = vsel %vm75, %v994, %v995
    %v997 = vsel %vm137, %v991, %v996
    %v998 = vsel %vm137, %v993, %v995
    %v1001 = vadd.f32 %v982, %v997
    %v1002 = vadd.f32 %v983, %v998
    %s1003 = sld [smem:[#allocation2 + $0x282]]
    %v1004 = vstv %s1003
    %v1005 = vmul.f32 %v1004, %v48
    %v1006 = vmul.f32 %v1004, %v49
    %1009 = vrot.lane.b32.xlu0 %v1005, 94
    %v1010 = vpop.permute.xlu0 %1009
    %1011 = vrot.lane.b32.xlu0 %v1006, 94
    %v1012 = vpop.permute.xlu0 %1011
    %v1013 = vrot.slane %v1010, 2
    %v1014 = vrot.slane %v1012, 2
    %v1015 = vsel %vm75, %v1013, %v1014
    %v1016 = vsel %vm157, %v1010, %v1015
    %v1017 = vsel %vm157, %v1012, %v1014
    %v1020 = vadd.f32 %v1001, %v1016
    %v1021 = vadd.f32 %v1002, %v1017
    %s1022 = sld [smem:[#allocation2 + $0x302]]
    %v1023 = vstv %s1022
    %v1024 = vmul.f32 %v1023, %v48
    %v1025 = vmul.f32 %v1023, %v49
    %1028 = vrot.lane.b32.xlu0 %v1024, 64
    %v1029 = vpop.permute.xlu0 %1028
    %1030 = vrot.lane.b32.xlu0 %v1025, 64
    %v1031 = vpop.permute.xlu0 %1030
    %v1032 = vrot.slane %v1029, 2
    %v1033 = vrot.slane %v1031, 2
    %v1034 = vsel %vm75, %v1032, %v1033
    %v1035 = vsel %vm177, %v1029, %v1034
    %v1036 = vsel %vm177, %v1031, %v1033
    %v1039 = vadd.f32 %v1020, %v1035
    %v1040 = vadd.f32 %v1021, %v1036
    %s1041 = sld [smem:[#allocation2 + $0x382]]
    %v1042 = vstv %s1041
    %v1043 = vmul.f32 %v1042, %v48
    %v1044 = vmul.f32 %v1042, %v50
    %1047 = vrot.lane.b32.xlu0 %v1043, 63
    %v1048 = vpop.permute.xlu0 %1047
    %1049 = vrot.lane.b32.xlu0 %v1044, 63
    %v1050 = vpop.permute.xlu0 %1049
    %v1051 = vrot.slane %v1048, 2
    %v1052 = vrot.slane %v1050, 2
    %v1053 = vsel %vm75, %v1051, %v1052
    %v1054 = vsel %vm197, %v1048, %v1053
    %v1055 = vsel %vm197, %v1050, %v1052
    %v1058 = vadd.f32 %v1039, %v1054
    %v1059 = vadd.f32 %v1040, %v1055
    %s1060 = sld [smem:[#allocation2 + $0x402]]
    %v1061 = vstv %s1060
    %v1062 = vmul.f32 %v1061, %v48
    %v1063 = vmul.f32 %v1061, %v50
    %1066 = vrot.lane.b32.xlu0 %v1062, 62
    %v1067 = vpop.permute.xlu0 %1066
    %1068 = vrot.lane.b32.xlu0 %v1063, 62
    %v1069 = vpop.permute.xlu0 %1068
    %v1070 = vrot.slane %v1067, 2
    %v1071 = vrot.slane %v1069, 2
    %v1072 = vsel %vm75, %v1070, %v1071
    %v1073 = vsel %vm217, %v1067, %v1072
    %v1074 = vsel %vm217, %v1069, %v1071
    %v1077 = vadd.f32 %v1058, %v1073
    %v1078 = vadd.f32 %v1059, %v1074
    %v1079 = vmax.f32 %v1077, 0.0
    %v1080 = vmax.f32 %v1078, 0.0
    %s1081 = scalar_lea.vmem %s3, 1664
    %v1082 = vld [vmem:[%s1081] sm:$0xff]
    %v1083 = vld [vmem:[%s1081 + $0x8] sm:$0xff]
    %v1084 = vld [vmem:[%s1081 + $0x10] sm:$0xff]
    %v1085 = vld [vmem:[%s1081 + $0x18] sm:$0xff]
    %v1086 = vld [vmem:[%s1081 + $0x20] sm:$0xff]
    %v1087 = vld [vmem:[%s1081 + $0x28] sm:$0xff]
    %v1088 = vld [vmem:[%s1081 + $0x30] sm:$0xff]
    %v1089 = vld [vmem:[%s1081 + $0x38] sm:$0xff]
    %v1090 = vld [vmem:[%s1081 + $0x40] sm:$0xff]
    %v1091 = vld [vmem:[%s1081 + $0x48] sm:$0xff]
    %v1092 = vld [vmem:[%s1081 + $0x50] sm:$0xff]
    %v1093 = vld [vmem:[%s1081 + $0x58] sm:$0xff]
    %v1094 = vld [vmem:[%s1081 + $0x60] sm:$0xff]
    %v1095 = vld [vmem:[%s1081 + $0x68] sm:$0xff]
    %v1096 = vld [vmem:[%s1081 + $0x70] sm:$0xff]
    %v1097 = vld [vmem:[%s1081 + $0x78] sm:$0xff]
    %v1098 = vld [vmem:[%s1081 + $0x80] sm:$0xff]
    %v1099 = vld [vmem:[%s1081 + $0x88] sm:$0xff]
    %v1100 = vld [vmem:[%s1081 + $0x90] sm:$0xff]
    %v1101 = vld [vmem:[%s1081 + $0x98] sm:$0xff]
    %v1102 = vld [vmem:[%s1081 + $0xa0] sm:$0xff]
    %v1103 = vld [vmem:[%s1081 + $0xa8] sm:$0xff]
    %v1104 = vld [vmem:[%s1081 + $0xb0] sm:$0xff]
    %v1105 = vld [vmem:[%s1081 + $0xb8] sm:$0xff]
    %v1106 = vld [vmem:[%s1081 + $0xc0] sm:$0xff]
    %v1107 = vld [vmem:[%s1081 + $0xc8] sm:$0xff]
    %v1108 = vld [vmem:[%s1081 + $0xd0] sm:$0xff]
    %v1109 = vld [vmem:[%s1081 + $0xd8] sm:$0xff]
    %v1110 = vld [vmem:[%s1081 + $0xe0] sm:$0xff]
    %v1111 = vld [vmem:[%s1081 + $0xe8] sm:$0xff]
    %v1112 = vld [vmem:[%s1081 + $0xf0] sm:$0xff]
    %v1113 = vld [vmem:[%s1081 + $0xf8] sm:$0xff]
    %v1114 = vld [vmem:[%s1081 + $0x100] sm:$0xff]
    %v1115 = vld [vmem:[%s1081 + $0x108] sm:$0xff]
    %v1116 = vld [vmem:[%s1081 + $0x110] sm:$0xff]
    %v1117 = vld [vmem:[%s1081 + $0x118] sm:$0xff]
    %v1118 = vld [vmem:[%s1081 + $0x120] sm:$0xff]
    %v1119 = vld [vmem:[%s1081 + $0x128] sm:$0xff]
    %v1120 = vld [vmem:[%s1081 + $0x130] sm:$0xff]
    %v1121 = vld [vmem:[%s1081 + $0x138] sm:$0xff]
    %v1122 = vld [vmem:[%s1081 + $0x140] sm:$0xff]
    %v1123 = vld [vmem:[%s1081 + $0x148] sm:$0xff]
    %v1124 = vld [vmem:[%s1081 + $0x150] sm:$0xff]
    %v1125 = vld [vmem:[%s1081 + $0x158] sm:$0xff]
    %v1126 = vld [vmem:[%s1081 + $0x160] sm:$0xff]
    %v1127 = vld [vmem:[%s1081 + $0x168] sm:$0xff]
    %v1128 = vld [vmem:[%s1081 + $0x170] sm:$0xff]
    %v1129 = vld [vmem:[%s1081 + $0x178] sm:$0xff]
    %v1130 = vld [vmem:[%s1081 + $0x180] sm:$0xff]
    %v1131 = vld [vmem:[%s1081 + $0x188] sm:$0xff]
    %v1132 = vld [vmem:[%s1081 + $0x190] sm:$0xff]
    %v1133 = vld [vmem:[%s1081 + $0x198] sm:$0xff]
    %v1134 = vld [vmem:[%s1081 + $0x1a0] sm:$0xff]
    %v1135 = vld [vmem:[%s1081 + $0x1a8] sm:$0xff]
    %v1136 = vld [vmem:[%s1081 + $0x1b0] sm:$0xff]
    %v1137 = vld [vmem:[%s1081 + $0x1b8] sm:$0xff]
    %v1138 = vld [vmem:[%s1081 + $0x1c0] sm:$0xff]
    %v1139 = vld [vmem:[%s1081 + $0x1c8] sm:$0xff]
    %v1140 = vld [vmem:[%s1081 + $0x1d0] sm:$0xff]
    %v1141 = vld [vmem:[%s1081 + $0x1d8] sm:$0xff]
    %v1142 = vld [vmem:[%s1081 + $0x1e0] sm:$0xff]
    %v1143 = vld [vmem:[%s1081 + $0x1e8] sm:$0xff]
    %v1144 = vld [vmem:[%s1081 + $0x1f0] sm:$0xff]
    %v1145 = vld [vmem:[%s1081 + $0x1f8] sm:$0xff]
    %v1146 = vld [vmem:[%s1081 + $0x200] sm:$0xff]
    %v1147 = vld [vmem:[%s1081 + $0x208] sm:$0xff]
    %v1148 = vld [vmem:[%s1081 + $0x210] sm:$0xff]
    %v1149 = vld [vmem:[%s1081 + $0x218] sm:$0xff]
    %v1150 = vld [vmem:[%s1081 + $0x220] sm:$0xff]
    %v1151 = vld [vmem:[%s1081 + $0x228] sm:$0xff]
    %v1152 = vld [vmem:[%s1081 + $0x230] sm:$0xff]
    %v1153 = vld [vmem:[%s1081 + $0x238] sm:$0xff]
    %v1154 = vld [vmem:[%s1081 + $0x240] sm:$0xff]
    %v1155 = vld [vmem:[%s1081 + $0x248] sm:$0xff]
    %v1156 = vld [vmem:[%s1081 + $0x250] sm:$0xff]
    %v1157 = vld [vmem:[%s1081 + $0x258] sm:$0xff]
    %v1158 = vld [vmem:[%s1081 + $0x260] sm:$0xff]
    %v1159 = vld [vmem:[%s1081 + $0x268] sm:$0xff]
    %v1160 = vld [vmem:[%s1081 + $0x270] sm:$0xff]
    %v1161 = vld [vmem:[%s1081 + $0x278] sm:$0xff]
    %v1162 = vld [vmem:[%s1081 + $0x280] sm:$0xff]
    %v1163 = vld [vmem:[%s1081 + $0x288] sm:$0xff]
    %v1164 = vld [vmem:[%s1081 + $0x290] sm:$0xff]
    %v1165 = vld [vmem:[%s1081 + $0x298] sm:$0xff]
    %v1166 = vld [vmem:[%s1081 + $0x2a0] sm:$0xff]
    %v1167 = vld [vmem:[%s1081 + $0x2a8] sm:$0xff]
    %v1168 = vld [vmem:[%s1081 + $0x2b0] sm:$0xff]
    %v1169 = vld [vmem:[%s1081 + $0x2b8] sm:$0xff]
    %v1170 = vld [vmem:[%s1081 + $0x2c0] sm:$0xff]
    %v1171 = vld [vmem:[%s1081 + $0x2c8] sm:$0xff]
    %v1172 = vld [vmem:[%s1081 + $0x2d0] sm:$0xff]
    %v1173 = vld [vmem:[%s1081 + $0x2d8] sm:$0xff]
    %v1174 = vld [vmem:[%s1081 + $0x2e0] sm:$0xff]
    %v1175 = vld [vmem:[%s1081 + $0x2e8] sm:$0xff]
    %v1176 = vld [vmem:[%s1081 + $0x2f0] sm:$0xff]
    %v1177 = vld [vmem:[%s1081 + $0x2f8] sm:$0xff]
    %v1178 = vld [vmem:[%s1081 + $0x300] sm:$0xff]
    %v1179 = vld [vmem:[%s1081 + $0x308] sm:$0xff]
    %v1180 = vld [vmem:[%s1081 + $0x310] sm:$0xff]
    %v1181 = vld [vmem:[%s1081 + $0x318] sm:$0xff]
    %v1182 = vld [vmem:[%s1081 + $0x320] sm:$0xff]
    %v1183 = vld [vmem:[%s1081 + $0x328] sm:$0xff]
    %v1184 = vld [vmem:[%s1081 + $0x330] sm:$0xff]
    %v1185 = vld [vmem:[%s1081 + $0x338] sm:$0xff]
    %1188 = vst [vmem:[#allocation1] ss:$4 sm:$0xff] %v1079
    %s1189 = scalar_lea.vmem [#allocation1], 32
    %1190 = vst [vmem:[%s1189] ss:$4 sm:$0xff] %v1080
    %v1191 = vld.sshfl [vmem:[#allocation1] sm:$0xff pattern:$0x73625140]
    %v1192 = vld.sshfl [vmem:[#allocation1 + $0x8] sm:$0xff pattern:$0x73625140]
    %v1193 = vld.sshfl [vmem:[#allocation1 + $0x10] sm:$0xff pattern:$0x73625140]
    %v1194 = vld.sshfl [vmem:[#allocation1 + $0x18] sm:$0xff pattern:$0x73625140]
    %v1195 = vld.sshfl [vmem:[#allocation1 + $0x20] sm:$0xff pattern:$0x73625140]
    %v1196 = vld.sshfl [vmem:[#allocation1 + $0x28] sm:$0xff pattern:$0x73625140]
    %v1197 = vld.sshfl [vmem:[#allocation1 + $0x30] sm:$0xff pattern:$0x73625140]
    %v1204 = vsel %vm177, %v1197, 0
    %1206 = vmatpush.msra.mxu0 %v1097
    %1207 = vmatpush.msra.mxu0 %v1096
    %1208 = vmatpush.msra.mxu0 %v1095
    %1209 = vmatpush.msra.mxu0 %v1094
    %1210 = vmatpush.msra.mxu0 %v1093
    %1211 = vmatpush.msra.mxu0 %v1092
    %1212 = vmatpush.msra.mxu0 %v1091
    %1213 = vmatpush.msra.mxu0 %v1090
    %1214 = vmatpush.msra.mxu0 %v1089
    %1215 = vmatpush.msra.mxu0 %v1088
    %1216 = vmatpush.msra.mxu0 %v1087
    %1217 = vmatpush.msra.mxu0 %v1086
    %1218 = vmatpush.msra.mxu0 %v1085
    %1219 = vmatpush.msra.mxu0 %v1084
    %1220 = vmatpush.msra.mxu0 %v1083
    %1221 = vmatpush.msra.mxu0 %v1082
    %1222 = vmatmul.f32.gmra.mxu0 %v1191
    %v1223 = vpop.f32.mrf.mxu0
    %v1224 = vadd.f32 0.0, %v1223
    %1225 = vdwg.mxu0
    %1226 = vmatpush.msra.mxu0 %v1113
    %1227 = vmatpush.msra.mxu0 %v1112
    %1228 = vmatpush.msra.mxu0 %v1111
    %1229 = vmatpush.msra.mxu0 %v1110
    %1230 = vmatpush.msra.mxu0 %v1109
    %1231 = vmatpush.msra.mxu0 %v1108
    %1232 = vmatpush.msra.mxu0 %v1107
    %1233 = vmatpush.msra.mxu0 %v1106
    %1234 = vmatpush.msra.mxu0 %v1105
    %1235 = vmatpush.msra.mxu0 %v1104
    %1236 = vmatpush.msra.mxu0 %v1103
    %1237 = vmatpush.msra.mxu0 %v1102
    %1238 = vmatpush.msra.mxu0 %v1101
    %1239 = vmatpush.msra.mxu0 %v1100
    %1240 = vmatpush.msra.mxu0 %v1099
    %1241 = vmatpush.msra.mxu0 %v1098
    %1242 = vmatmul.f32.gmra.mxu0 %v1192
    %v1243 = vpop.f32.mrf.mxu0
    %v1244 = vadd.f32 %v1224, %v1243
    %1245 = vdwg.mxu0
    %1246 = vmatpush.msra.mxu0 %v1129
    %1247 = vmatpush.msra.mxu0 %v1128
    %1248 = vmatpush.msra.mxu0 %v1127
    %1249 = vmatpush.msra.mxu0 %v1126
    %1250 = vmatpush.msra.mxu0 %v1125
    %1251 = vmatpush.msra.mxu0 %v1124
    %1252 = vmatpush.msra.mxu0 %v1123
    %1253 = vmatpush.msra.mxu0 %v1122
    %1254 = vmatpush.msra.mxu0 %v1121
    %1255 = vmatpush.msra.mxu0 %v1120
    %1256 = vmatpush.msra.mxu0 %v1119
    %1257 = vmatpush.msra.mxu0 %v1118
    %1258 = vmatpush.msra.mxu0 %v1117
    %1259 = vmatpush.msra.mxu0 %v1116
    %1260 = vmatpush.msra.mxu0 %v1115
    %1261 = vmatpush.msra.mxu0 %v1114
    %1262 = vmatmul.f32.gmra.mxu0 %v1193
    %v1263 = vpop.f32.mrf.mxu0
    %v1264 = vadd.f32 %v1244, %v1263
    %1265 = vdwg.mxu0
    %1266 = vmatpush.msra.mxu0 %v1145
    %1267 = vmatpush.msra.mxu0 %v1144
    %1268 = vmatpush.msra.mxu0 %v1143
    %1269 = vmatpush.msra.mxu0 %v1142
    %1270 = vmatpush.msra.mxu0 %v1141
    %1271 = vmatpush.msra.mxu0 %v1140
    %1272 = vmatpush.msra.mxu0 %v1139
    %1273 = vmatpush.msra.mxu0 %v1138
    %1274 = vmatpush.msra.mxu0 %v1137
    %1275 = vmatpush.msra.mxu0 %v1136
    %1276 = vmatpush.msra.mxu0 %v1135
    %1277 = vmatpush.msra.mxu0 %v1134
    %1278 = vmatpush.msra.mxu0 %v1133
    %1279 = vmatpush.msra.mxu0 %v1132
    %1280 = vmatpush.msra.mxu0 %v1131
    %1281 = vmatpush.msra.mxu0 %v1130
    %1282 = vmatmul.f32.gmra.mxu0 %v1194
    %v1283 = vpop.f32.mrf.mxu0
    %v1284 = vadd.f32 %v1264, %v1283
    %1285 = vdwg.mxu0
    %1286 = vmatpush.msra.mxu0 %v1161
    %1287 = vmatpush.msra.mxu0 %v1160
    %1288 = vmatpush.msra.mxu0 %v1159
    %1289 = vmatpush.msra.mxu0 %v1158
    %1290 = vmatpush.msra.mxu0 %v1157
    %1291 = vmatpush.msra.mxu0 %v1156
    %1292 = vmatpush.msra.mxu0 %v1155
    %1293 = vmatpush.msra.mxu0 %v1154
    %1294 = vmatpush.msra.mxu0 %v1153
    %1295 = vmatpush.msra.mxu0 %v1152
    %1296 = vmatpush.msra.mxu0 %v1151
    %1297 = vmatpush.msra.mxu0 %v1150
    %1298 = vmatpush.msra.mxu0 %v1149
    %1299 = vmatpush.msra.mxu0 %v1148
    %1300 = vmatpush.msra.mxu0 %v1147
    %1301 = vmatpush.msra.mxu0 %v1146
    %1302 = vmatmul.f32.gmra.mxu0 %v1195
    %v1303 = vpop.f32.mrf.mxu0
    %v1304 = vadd.f32 %v1284, %v1303
    %1305 = vdwg.mxu0
    %1306 = vmatpush.msra.mxu0 %v1177
    %1307 = vmatpush.msra.mxu0 %v1176
    %1308 = vmatpush.msra.mxu0 %v1175
    %1309 = vmatpush.msra.mxu0 %v1174
    %1310 = vmatpush.msra.mxu0 %v1173
    %1311 = vmatpush.msra.mxu0 %v1172
    %1312 = vmatpush.msra.mxu0 %v1171
    %1313 = vmatpush.msra.mxu0 %v1170
    %1314 = vmatpush.msra.mxu0 %v1169
    %1315 = vmatpush.msra.mxu0 %v1168
    %1316 = vmatpush.msra.mxu0 %v1167
    %1317 = vmatpush.msra.mxu0 %v1166
    %1318 = vmatpush.msra.mxu0 %v1165
    %1319 = vmatpush.msra.mxu0 %v1164
    %1320 = vmatpush.msra.mxu0 %v1163
    %1321 = vmatpush.msra.mxu0 %v1162
    %1322 = vmatmul.f32.gmra.mxu0 %v1196
    %v1323 = vpop.f32.mrf.mxu0
    %v1324 = vadd.f32 %v1304, %v1323
    %1325 = vdwg.mxu0
    %1326 = vmatpush.msra.mxu0 0.0
    %1327 = vmatpush.msra.mxu0 0.0
    %1328 = vmatpush.msra.mxu0 0.0
    %1329 = vmatpush.msra.mxu0 0.0
    %1330 = vmatpush.msra.mxu0 0.0
    %1331 = vmatpush.msra.mxu0 0.0
    %1332 = vmatpush.msra.mxu0 0.0
    %1333 = vmatpush.msra.mxu0 0.0
    %1334 = vmatpush.msra.mxu0 %v1185
    %1335 = vmatpush.msra.mxu0 %v1184
    %1336 = vmatpush.msra.mxu0 %v1183
    %1337 = vmatpush.msra.mxu0 %v1182
    %1338 = vmatpush.msra.mxu0 %v1181
    %1339 = vmatpush.msra.mxu0 %v1180
    %1340 = vmatpush.msra.mxu0 %v1179
    %1341 = vmatpush.msra.mxu0 %v1178
    %1342 = vmatmul.f32.gmra.mxu0 %v1204
    %v1343 = vpop.f32.mrf.mxu0
    %v1344 = vadd.f32 %v1324, %v1343
    %1345 = vdwg.mxu0
    %v1346 = vadd.f32 %v918, %v1344
    %s1347 = sld [smem:[#allocation5 + $0x3]]
    %s1348 = sld [smem:[#allocation2 + $0x3]]
    %v1349 = vstv %s1348
    %v1350 = vmul.f32 %v1349, %v48
    %v1351 = vmul.f32 %v1349, %v49
    %v1352 = vstv %s1347
    %v1353 = vadd.f32 %v1352, %v1350
    %v1354 = vadd.f32 %v1352, %v1351
    %s1355 = sld [smem:[#allocation2 + $0x83]]
    %v1356 = vstv %s1355
    %v1357 = vmul.f32 %v1356, %v48
    %v1358 = vmul.f32 %v1356, %v49
    %1361 = vrot.lane.b32.xlu0 %v1357, 127
    %v1362 = vpop.permute.xlu0 %1361
    %1363 = vrot.lane.b32.xlu0 %v1358, 127
    %v1364 = vpop.permute.xlu0 %1363
    %v1365 = vrot.slane %v1362, 2
    %v1366 = vrot.slane %v1364, 2
    %v1367 = vsel %vm75, %v1365, %v1366
    %v1368 = vsel %vm77, %v1362, %v1367
    %v1369 = vsel %vm77, %v1364, %v1366
    %v1372 = vadd.f32 %v1353, %v1368
    %v1373 = vadd.f32 %v1354, %v1369
    %s1374 = sld [smem:[#allocation2 + $0x103]]
    %v1375 = vstv %s1374
    %v1376 = vmul.f32 %v1375, %v48
    %v1377 = vmul.f32 %v1375, %v49
    %1380 = vrot.lane.b32.xlu0 %v1376, 126
    %v1381 = vpop.permute.xlu0 %1380
    %1382 = vrot.lane.b32.xlu0 %v1377, 126
    %v1383 = vpop.permute.xlu0 %1382
    %v1384 = vrot.slane %v1381, 2
    %v1385 = vrot.slane %v1383, 2
    %v1386 = vsel %vm75, %v1384, %v1385
    %v1387 = vsel %vm97, %v1381, %v1386
    %v1388 = vsel %vm97, %v1383, %v1385
    %v1391 = vadd.f32 %v1372, %v1387
    %v1392 = vadd.f32 %v1373, %v1388
    %s1393 = sld [smem:[#allocation2 + $0x183]]
    %v1394 = vstv %s1393
    %v1395 = vmul.f32 %v1394, %v48
    %v1396 = vmul.f32 %v1394, %v49
    %1399 = vrot.lane.b32.xlu0 %v1395, 96
    %v1400 = vpop.permute.xlu0 %1399
    %1401 = vrot.lane.b32.xlu0 %v1396, 96
    %v1402 = vpop.permute.xlu0 %1401
    %v1403 = vrot.slane %v1400, 2
    %v1404 = vrot.slane %v1402, 2
    %v1405 = vsel %vm75, %v1403, %v1404
    %v1406 = vsel %vm117, %v1400, %v1405
    %v1407 = vsel %vm117, %v1402, %v1404
    %v1410 = vadd.f32 %v1391, %v1406
    %v1411 = vadd.f32 %v1392, %v1407
    %s1412 = sld [smem:[#allocation2 + $0x203]]
    %v1413 = vstv %s1412
    %v1414 = vmul.f32 %v1413, %v48
    %v1415 = vmul.f32 %v1413, %v49
    %1418 = vrot.lane.b32.xlu0 %v1414, 95
    %v1419 = vpop.permute.xlu0 %1418
    %1420 = vrot.lane.b32.xlu0 %v1415, 95
    %v1421 = vpop.permute.xlu0 %1420
    %v1422 = vrot.slane %v1419, 2
    %v1423 = vrot.slane %v1421, 2
    %v1424 = vsel %vm75, %v1422, %v1423
    %v1425 = vsel %vm137, %v1419, %v1424
    %v1426 = vsel %vm137, %v1421, %v1423
    %v1429 = vadd.f32 %v1410, %v1425
    %v1430 = vadd.f32 %v1411, %v1426
    %s1431 = sld [smem:[#allocation2 + $0x283]]
    %v1432 = vstv %s1431
    %v1433 = vmul.f32 %v1432, %v48
    %v1434 = vmul.f32 %v1432, %v49
    %1437 = vrot.lane.b32.xlu0 %v1433, 94
    %v1438 = vpop.permute.xlu0 %1437
    %1439 = vrot.lane.b32.xlu0 %v1434, 94
    %v1440 = vpop.permute.xlu0 %1439
    %v1441 = vrot.slane %v1438, 2
    %v1442 = vrot.slane %v1440, 2
    %v1443 = vsel %vm75, %v1441, %v1442
    %v1444 = vsel %vm157, %v1438, %v1443
    %v1445 = vsel %vm157, %v1440, %v1442
    %v1448 = vadd.f32 %v1429, %v1444
    %v1449 = vadd.f32 %v1430, %v1445
    %s1450 = sld [smem:[#allocation2 + $0x303]]
    %v1451 = vstv %s1450
    %v1452 = vmul.f32 %v1451, %v48
    %v1453 = vmul.f32 %v1451, %v49
    %1456 = vrot.lane.b32.xlu0 %v1452, 64
    %v1457 = vpop.permute.xlu0 %1456
    %1458 = vrot.lane.b32.xlu0 %v1453, 64
    %v1459 = vpop.permute.xlu0 %1458
    %v1460 = vrot.slane %v1457, 2
    %v1461 = vrot.slane %v1459, 2
    %v1462 = vsel %vm75, %v1460, %v1461
    %v1463 = vsel %vm177, %v1457, %v1462
    %v1464 = vsel %vm177, %v1459, %v1461
    %v1467 = vadd.f32 %v1448, %v1463
    %v1468 = vadd.f32 %v1449, %v1464
    %s1469 = sld [smem:[#allocation2 + $0x383]]
    %v1470 = vstv %s1469
    %v1471 = vmul.f32 %v1470, %v48
    %v1472 = vmul.f32 %v1470, %v50
    %1475 = vrot.lane.b32.xlu0 %v1471, 63
    %v1476 = vpop.permute.xlu0 %1475
    %1477 = vrot.lane.b32.xlu0 %v1472, 63
    %v1478 = vpop.permute.xlu0 %1477
    %v1479 = vrot.slane %v1476, 2
    %v1480 = vrot.slane %v1478, 2
    %v1481 = vsel %vm75, %v1479, %v1480
    %v1482 = vsel %vm197, %v1476, %v1481
    %v1483 = vsel %vm197, %v1478, %v1480
    %v1486 = vadd.f32 %v1467, %v1482
    %v1487 = vadd.f32 %v1468, %v1483
    %s1488 = sld [smem:[#allocation2 + $0x403]]
    %v1489 = vstv %s1488
    %v1490 = vmul.f32 %v1489, %v48
    %v1491 = vmul.f32 %v1489, %v50
    %1494 = vrot.lane.b32.xlu0 %v1490, 62
    %v1495 = vpop.permute.xlu0 %1494
    %1496 = vrot.lane.b32.xlu0 %v1491, 62
    %v1497 = vpop.permute.xlu0 %1496
    %v1498 = vrot.slane %v1495, 2
    %v1499 = vrot.slane %v1497, 2
    %v1500 = vsel %vm75, %v1498, %v1499
    %v1501 = vsel %vm217, %v1495, %v1500
    %v1502 = vsel %vm217, %v1497, %v1499
    %v1505 = vadd.f32 %v1486, %v1501
    %v1506 = vadd.f32 %v1487, %v1502
    %v1507 = vmax.f32 %v1505, 0.0
    %v1508 = vmax.f32 %v1506, 0.0
    %s1509 = scalar_lea.vmem %s3, 2496
    %v1510 = vld [vmem:[%s1509] sm:$0xff]
    %v1511 = vld [vmem:[%s1509 + $0x8] sm:$0xff]
    %v1512 = vld [vmem:[%s1509 + $0x10] sm:$0xff]
    %v1513 = vld [vmem:[%s1509 + $0x18] sm:$0xff]
    %v1514 = vld [vmem:[%s1509 + $0x20] sm:$0xff]
    %v1515 = vld [vmem:[%s1509 + $0x28] sm:$0xff]
    %v1516 = vld [vmem:[%s1509 + $0x30] sm:$0xff]
    %v1517 = vld [vmem:[%s1509 + $0x38] sm:$0xff]
    %v1518 = vld [vmem:[%s1509 + $0x40] sm:$0xff]
    %v1519 = vld [vmem:[%s1509 + $0x48] sm:$0xff]
    %v1520 = vld [vmem:[%s1509 + $0x50] sm:$0xff]
    %v1521 = vld [vmem:[%s1509 + $0x58] sm:$0xff]
    %v1522 = vld [vmem:[%s1509 + $0x60] sm:$0xff]
    %v1523 = vld [vmem:[%s1509 + $0x68] sm:$0xff]
    %v1524 = vld [vmem:[%s1509 + $0x70] sm:$0xff]
    %v1525 = vld [vmem:[%s1509 + $0x78] sm:$0xff]
    %v1526 = vld [vmem:[%s1509 + $0x80] sm:$0xff]
    %v1527 = vld [vmem:[%s1509 + $0x88] sm:$0xff]
    %v1528 = vld [vmem:[%s1509 + $0x90] sm:$0xff]
    %v1529 = vld [vmem:[%s1509 + $0x98] sm:$0xff]
    %v1530 = vld [vmem:[%s1509 + $0xa0] sm:$0xff]
    %v1531 = vld [vmem:[%s1509 + $0xa8] sm:$0xff]
    %v1532 = vld [vmem:[%s1509 + $0xb0] sm:$0xff]
    %v1533 = vld [vmem:[%s1509 + $0xb8] sm:$0xff]
    %v1534 = vld [vmem:[%s1509 + $0xc0] sm:$0xff]
    %v1535 = vld [vmem:[%s1509 + $0xc8] sm:$0xff]
    %v1536 = vld [vmem:[%s1509 + $0xd0] sm:$0xff]
    %v1537 = vld [vmem:[%s1509 + $0xd8] sm:$0xff]
    %v1538 = vld [vmem:[%s1509 + $0xe0] sm:$0xff]
    %v1539 = vld [vmem:[%s1509 + $0xe8] sm:$0xff]
    %v1540 = vld [vmem:[%s1509 + $0xf0] sm:$0xff]
    %v1541 = vld [vmem:[%s1509 + $0xf8] sm:$0xff]
    %v1542 = vld [vmem:[%s1509 + $0x100] sm:$0xff]
    %v1543 = vld [vmem:[%s1509 + $0x108] sm:$0xff]
    %v1544 = vld [vmem:[%s1509 + $0x110] sm:$0xff]
    %v1545 = vld [vmem:[%s1509 + $0x118] sm:$0xff]
    %v1546 = vld [vmem:[%s1509 + $0x120] sm:$0xff]
    %v1547 = vld [vmem:[%s1509 + $0x128] sm:$0xff]
    %v1548 = vld [vmem:[%s1509 + $0x130] sm:$0xff]
    %v1549 = vld [vmem:[%s1509 + $0x138] sm:$0xff]
    %v1550 = vld [vmem:[%s1509 + $0x140] sm:$0xff]
    %v1551 = vld [vmem:[%s1509 + $0x148] sm:$0xff]
    %v1552 = vld [vmem:[%s1509 + $0x150] sm:$0xff]
    %v1553 = vld [vmem:[%s1509 + $0x158] sm:$0xff]
    %v1554 = vld [vmem:[%s1509 + $0x160] sm:$0xff]
    %v1555 = vld [vmem:[%s1509 + $0x168] sm:$0xff]
    %v1556 = vld [vmem:[%s1509 + $0x170] sm:$0xff]
    %v1557 = vld [vmem:[%s1509 + $0x178] sm:$0xff]
    %v1558 = vld [vmem:[%s1509 + $0x180] sm:$0xff]
    %v1559 = vld [vmem:[%s1509 + $0x188] sm:$0xff]
    %v1560 = vld [vmem:[%s1509 + $0x190] sm:$0xff]
    %v1561 = vld [vmem:[%s1509 + $0x198] sm:$0xff]
    %v1562 = vld [vmem:[%s1509 + $0x1a0] sm:$0xff]
    %v1563 = vld [vmem:[%s1509 + $0x1a8] sm:$0xff]
    %v1564 = vld [vmem:[%s1509 + $0x1b0] sm:$0xff]
    %v1565 = vld [vmem:[%s1509 + $0x1b8] sm:$0xff]
    %v1566 = vld [vmem:[%s1509 + $0x1c0] sm:$0xff]
    %v1567 = vld [vmem:[%s1509 + $0x1c8] sm:$0xff]
    %v1568 = vld [vmem:[%s1509 + $0x1d0] sm:$0xff]
    %v1569 = vld [vmem:[%s1509 + $0x1d8] sm:$0xff]
    %v1570 = vld [vmem:[%s1509 + $0x1e0] sm:$0xff]
    %v1571 = vld [vmem:[%s1509 + $0x1e8] sm:$0xff]
    %v1572 = vld [vmem:[%s1509 + $0x1f0] sm:$0xff]
    %v1573 = vld [vmem:[%s1509 + $0x1f8] sm:$0xff]
    %v1574 = vld [vmem:[%s1509 + $0x200] sm:$0xff]
    %v1575 = vld [vmem:[%s1509 + $0x208] sm:$0xff]
    %v1576 = vld [vmem:[%s1509 + $0x210] sm:$0xff]
    %v1577 = vld [vmem:[%s1509 + $0x218] sm:$0xff]
    %v1578 = vld [vmem:[%s1509 + $0x220] sm:$0xff]
    %v1579 = vld [vmem:[%s1509 + $0x228] sm:$0xff]
    %v1580 = vld [vmem:[%s1509 + $0x230] sm:$0xff]
    %v1581 = vld [vmem:[%s1509 + $0x238] sm:$0xff]
    %v1582 = vld [vmem:[%s1509 + $0x240] sm:$0xff]
    %v1583 = vld [vmem:[%s1509 + $0x248] sm:$0xff]
    %v1584 = vld [vmem:[%s1509 + $0x250] sm:$0xff]
    %v1585 = vld [vmem:[%s1509 + $0x258] sm:$0xff]
    %v1586 = vld [vmem:[%s1509 + $0x260] sm:$0xff]
    %v1587 = vld [vmem:[%s1509 + $0x268] sm:$0xff]
    %v1588 = vld [vmem:[%s1509 + $0x270] sm:$0xff]
    %v1589 = vld [vmem:[%s1509 + $0x278] sm:$0xff]
    %v1590 = vld [vmem:[%s1509 + $0x280] sm:$0xff]
    %v1591 = vld [vmem:[%s1509 + $0x288] sm:$0xff]
    %v1592 = vld [vmem:[%s1509 + $0x290] sm:$0xff]
    %v1593 = vld [vmem:[%s1509 + $0x298] sm:$0xff]
    %v1594 = vld [vmem:[%s1509 + $0x2a0] sm:$0xff]
    %v1595 = vld [vmem:[%s1509 + $0x2a8] sm:$0xff]
    %v1596 = vld [vmem:[%s1509 + $0x2b0] sm:$0xff]
    %v1597 = vld [vmem:[%s1509 + $0x2b8] sm:$0xff]
    %v1598 = vld [vmem:[%s1509 + $0x2c0] sm:$0xff]
    %v1599 = vld [vmem:[%s1509 + $0x2c8] sm:$0xff]
    %v1600 = vld [vmem:[%s1509 + $0x2d0] sm:$0xff]
    %v1601 = vld [vmem:[%s1509 + $0x2d8] sm:$0xff]
    %v1602 = vld [vmem:[%s1509 + $0x2e0] sm:$0xff]
    %v1603 = vld [vmem:[%s1509 + $0x2e8] sm:$0xff]
    %v1604 = vld [vmem:[%s1509 + $0x2f0] sm:$0xff]
    %v1605 = vld [vmem:[%s1509 + $0x2f8] sm:$0xff]
    %v1606 = vld [vmem:[%s1509 + $0x300] sm:$0xff]
    %v1607 = vld [vmem:[%s1509 + $0x308] sm:$0xff]
    %v1608 = vld [vmem:[%s1509 + $0x310] sm:$0xff]
    %v1609 = vld [vmem:[%s1509 + $0x318] sm:$0xff]
    %v1610 = vld [vmem:[%s1509 + $0x320] sm:$0xff]
    %v1611 = vld [vmem:[%s1509 + $0x328] sm:$0xff]
    %v1612 = vld [vmem:[%s1509 + $0x330] sm:$0xff]
    %v1613 = vld [vmem:[%s1509 + $0x338] sm:$0xff]
    %1616 = vst [vmem:[#allocation1] ss:$4 sm:$0xff] %v1507
    %s1617 = scalar_lea.vmem [#allocation1], 32
    %1618 = vst [vmem:[%s1617] ss:$4 sm:$0xff] %v1508
    %v1619 = vld.sshfl [vmem:[#allocation1] sm:$0xff pattern:$0x73625140]
    %v1620 = vld.sshfl [vmem:[#allocation1 + $0x8] sm:$0xff pattern:$0x73625140]
    %v1621 = vld.sshfl [vmem:[#allocation1 + $0x10] sm:$0xff pattern:$0x73625140]
    %v1622 = vld.sshfl [vmem:[#allocation1 + $0x18] sm:$0xff pattern:$0x73625140]
    %v1623 = vld.sshfl [vmem:[#allocation1 + $0x20] sm:$0xff pattern:$0x73625140]
    %v1624 = vld.sshfl [vmem:[#allocation1 + $0x28] sm:$0xff pattern:$0x73625140]
    %v1625 = vld.sshfl [vmem:[#allocation1 + $0x30] sm:$0xff pattern:$0x73625140]
    %v1632 = vsel %vm177, %v1625, 0
    %1634 = vmatpush.msra.mxu0 %v1525
    %1635 = vmatpush.msra.mxu0 %v1524
    %1636 = vmatpush.msra.mxu0 %v1523
    %1637 = vmatpush.msra.mxu0 %v1522
    %1638 = vmatpush.msra.mxu0 %v1521
    %1639 = vmatpush.msra.mxu0 %v1520
    %1640 = vmatpush.msra.mxu0 %v1519
    %1641 = vmatpush.msra.mxu0 %v1518
    %1642 = vmatpush.msra.mxu0 %v1517
    %1643 = vmatpush.msra.mxu0 %v1516
    %1644 = vmatpush.msra.mxu0 %v1515
    %1645 = vmatpush.msra.mxu0 %v1514
    %1646 = vmatpush.msra.mxu0 %v1513
    %1647 = vmatpush.msra.mxu0 %v1512
    %1648 = vmatpush.msra.mxu0 %v1511
    %1649 = vmatpush.msra.mxu0 %v1510
    %1650 = vmatmul.f32.gmra.mxu0 %v1619
    %v1651 = vpop.f32.mrf.mxu0
    %v1652 = vadd.f32 0.0, %v1651
    %1653 = vdwg.mxu0
    %1654 = vmatpush.msra.mxu0 %v1541
    %1655 = vmatpush.msra.mxu0 %v1540
    %1656 = vmatpush.msra.mxu0 %v1539
    %1657 = vmatpush.msra.mxu0 %v1538
    %1658 = vmatpush.msra.mxu0 %v1537
    %1659 = vmatpush.msra.mxu0 %v1536
    %1660 = vmatpush.msra.mxu0 %v1535
    %1661 = vmatpush.msra.mxu0 %v1534
    %1662 = vmatpush.msra.mxu0 %v1533
    %1663 = vmatpush.msra.mxu0 %v1532
    %1664 = vmatpush.msra.mxu0 %v1531
    %1665 = vmatpush.msra.mxu0 %v1530
    %1666 = vmatpush.msra.mxu0 %v1529
    %1667 = vmatpush.msra.mxu0 %v1528
    %1668 = vmatpush.msra.mxu0 %v1527
    %1669 = vmatpush.msra.mxu0 %v1526
    %1670 = vmatmul.f32.gmra.mxu0 %v1620
    %v1671 = vpop.f32.mrf.mxu0
    %v1672 = vadd.f32 %v1652, %v1671
    %1673 = vdwg.mxu0
    %1674 = vmatpush.msra.mxu0 %v1557
    %1675 = vmatpush.msra.mxu0 %v1556
    %1676 = vmatpush.msra.mxu0 %v1555
    %1677 = vmatpush.msra.mxu0 %v1554
    %1678 = vmatpush.msra.mxu0 %v1553
    %1679 = vmatpush.msra.mxu0 %v1552
    %1680 = vmatpush.msra.mxu0 %v1551
    %1681 = vmatpush.msra.mxu0 %v1550
    %1682 = vmatpush.msra.mxu0 %v1549
    %1683 = vmatpush.msra.mxu0 %v1548
    %1684 = vmatpush.msra.mxu0 %v1547
    %1685 = vmatpush.msra.mxu0 %v1546
    %1686 = vmatpush.msra.mxu0 %v1545
    %1687 = vmatpush.msra.mxu0 %v1544
    %1688 = vmatpush.msra.mxu0 %v1543
    %1689 = vmatpush.msra.mxu0 %v1542
    %1690 = vmatmul.f32.gmra.mxu0 %v1621
    %v1691 = vpop.f32.mrf.mxu0
    %v1692 = vadd.f32 %v1672, %v1691
    %1693 = vdwg.mxu0
    %1694 = vmatpush.msra.mxu0 %v1573
    %1695 = vmatpush.msra.mxu0 %v1572
    %1696 = vmatpush.msra.mxu0 %v1571
    %1697 = vmatpush.msra.mxu0 %v1570
    %1698 = vmatpush.msra.mxu0 %v1569
    %1699 = vmatpush.msra.mxu0 %v1568
    %1700 = vmatpush.msra.mxu0 %v1567
    %1701 = vmatpush.msra.mxu0 %v1566
    %1702 = vmatpush.msra.mxu0 %v1565
    %1703 = vmatpush.msra.mxu0 %v1564
    %1704 = vmatpush.msra.mxu0 %v1563
    %1705 = vmatpush.msra.mxu0 %v1562
    %1706 = vmatpush.msra.mxu0 %v1561
    %1707 = vmatpush.msra.mxu0 %v1560
    %1708 = vmatpush.msra.mxu0 %v1559
    %1709 = vmatpush.msra.mxu0 %v1558
    %1710 = vmatmul.f32.gmra.mxu0 %v1622
    %v1711 = vpop.f32.mrf.mxu0
    %v1712 = vadd.f32 %v1692, %v1711
    %1713 = vdwg.mxu0
    %1714 = vmatpush.msra.mxu0 %v1589
    %1715 = vmatpush.msra.mxu0 %v1588
    %1716 = vmatpush.msra.mxu0 %v1587
    %1717 = vmatpush.msra.mxu0 %v1586
    %1718 = vmatpush.msra.mxu0 %v1585
    %1719 = vmatpush.msra.mxu0 %v1584
    %1720 = vmatpush.msra.mxu0 %v1583
    %1721 = vmatpush.msra.mxu0 %v1582
    %1722 = vmatpush.msra.mxu0 %v1581
    %1723 = vmatpush.msra.mxu0 %v1580
    %1724 = vmatpush.msra.mxu0 %v1579
    %1725 = vmatpush.msra.mxu0 %v1578
    %1726 = vmatpush.msra.mxu0 %v1577
    %1727 = vmatpush.msra.mxu0 %v1576
    %1728 = vmatpush.msra.mxu0 %v1575
    %1729 = vmatpush.msra.mxu0 %v1574
    %1730 = vmatmul.f32.gmra.mxu0 %v1623
    %v1731 = vpop.f32.mrf.mxu0
    %v1732 = vadd.f32 %v1712, %v1731
    %1733 = vdwg.mxu0
    %1734 = vmatpush.msra.mxu0 %v1605
    %1735 = vmatpush.msra.mxu0 %v1604
    %1736 = vmatpush.msra.mxu0 %v1603
    %1737 = vmatpush.msra.mxu0 %v1602
    %1738 = vmatpush.msra.mxu0 %v1601
    %1739 = vmatpush.msra.mxu0 %v1600
    %1740 = vmatpush.msra.mxu0 %v1599
    %1741 = vmatpush.msra.mxu0 %v1598
    %1742 = vmatpush.msra.mxu0 %v1597
    %1743 = vmatpush.msra.mxu0 %v1596
    %1744 = vmatpush.msra.mxu0 %v1595
    %1745 = vmatpush.msra.mxu0 %v1594
    %1746 = vmatpush.msra.mxu0 %v1593
    %1747 = vmatpush.msra.mxu0 %v1592
    %1748 = vmatpush.msra.mxu0 %v1591
    %1749 = vmatpush.msra.mxu0 %v1590
    %1750 = vmatmul.f32.gmra.mxu0 %v1624
    %v1751 = vpop.f32.mrf.mxu0
    %v1752 = vadd.f32 %v1732, %v1751
    %1753 = vdwg.mxu0
    %1754 = vmatpush.msra.mxu0 0.0
    %1755 = vmatpush.msra.mxu0 0.0
    %1756 = vmatpush.msra.mxu0 0.0
    %1757 = vmatpush.msra.mxu0 0.0
    %1758 = vmatpush.msra.mxu0 0.0
    %1759 = vmatpush.msra.mxu0 0.0
    %1760 = vmatpush.msra.mxu0 0.0
    %1761 = vmatpush.msra.mxu0 0.0
    %1762 = vmatpush.msra.mxu0 %v1613
    %1763 = vmatpush.msra.mxu0 %v1612
    %1764 = vmatpush.msra.mxu0 %v1611
    %1765 = vmatpush.msra.mxu0 %v1610
    %1766 = vmatpush.msra.mxu0 %v1609
    %1767 = vmatpush.msra.mxu0 %v1608
    %1768 = vmatpush.msra.mxu0 %v1607
    %1769 = vmatpush.msra.mxu0 %v1606
    %1770 = vmatmul.f32.gmra.mxu0 %v1632
    %v1771 = vpop.f32.mrf.mxu0
    %v1772 = vadd.f32 %v1752, %v1771
    %1773 = vdwg.mxu0
    %v1774 = vadd.f32 %v1346, %v1772
    %s1775 = sld [smem:[#allocation5 + $0x4]]
    %s1776 = sld [smem:[#allocation2 + $0x4]]
    %v1777 = vstv %s1776
    %v1778 = vmul.f32 %v1777, %v48
    %v1779 = vmul.f32 %v1777, %v49
    %v1780 = vstv %s1775
    %v1781 = vadd.f32 %v1780, %v1778
    %v1782 = vadd.f32 %v1780, %v1779
    %s1783 = sld [smem:[#allocation2 + $0x84]]
    %v1784 = vstv %s1783
    %v1785 = vmul.f32 %v1784, %v48
    %v1786 = vmul.f32 %v1784, %v49
    %1789 = vrot.lane.b32.xlu0 %v1785, 127
    %v1790 = vpop.permute.xlu0 %1789
    %1791 = vrot.lane.b32.xlu0 %v1786, 127
    %v1792 = vpop.permute.xlu0 %1791
    %v1793 = vrot.slane %v1790, 2
    %v1794 = vrot.slane %v1792, 2
    %v1795 = vsel %vm75, %v1793, %v1794
    %v1796 = vsel %vm77, %v1790, %v1795
    %v1797 = vsel %vm77, %v1792, %v1794
    %v1800 = vadd.f32 %v1781, %v1796
    %v1801 = vadd.f32 %v1782, %v1797
    %s1802 = sld [smem:[#allocation2 + $0x104]]
    %v1803 = vstv %s1802
    %v1804 = vmul.f32 %v1803, %v48
    %v1805 = vmul.f32 %v1803, %v49
    %1808 = vrot.lane.b32.xlu0 %v1804, 126
    %v1809 = vpop.permute.xlu0 %1808
    %1810 = vrot.lane.b32.xlu0 %v1805, 126
    %v1811 = vpop.permute.xlu0 %1810
    %v1812 = vrot.slane %v1809, 2
    %v1813 = vrot.slane %v1811, 2
    %v1814 = vsel %vm75, %v1812, %v1813
    %v1815 = vsel %vm97, %v1809, %v1814
    %v1816 = vsel %vm97, %v1811, %v1813
    %v1819 = vadd.f32 %v1800, %v1815
    %v1820 = vadd.f32 %v1801, %v1816
    %s1821 = sld [smem:[#allocation2 + $0x184]]
    %v1822 = vstv %s1821
    %v1823 = vmul.f32 %v1822, %v48
    %v1824 = vmul.f32 %v1822, %v49
    %1827 = vrot.lane.b32.xlu0 %v1823, 96
    %v1828 = vpop.permute.xlu0 %1827
    %1829 = vrot.lane.b32.xlu0 %v1824, 96
    %v1830 = vpop.permute.xlu0 %1829
    %v1831 = vrot.slane %v1828, 2
    %v1832 = vrot.slane %v1830, 2
    %v1833 = vsel %vm75, %v1831, %v1832
    %v1834 = vsel %vm117, %v1828, %v1833
    %v1835 = vsel %vm117, %v1830, %v1832
    %v1838 = vadd.f32 %v1819, %v1834
    %v1839 = vadd.f32 %v1820, %v1835
    %s1840 = sld [smem:[#allocation2 + $0x204]]
    %v1841 = vstv %s1840
    %v1842 = vmul.f32 %v1841, %v48
    %v1843 = vmul.f32 %v1841, %v49
    %1846 = vrot.lane.b32.xlu0 %v1842, 95
    %v1847 = vpop.permute.xlu0 %1846
    %1848 = vrot.lane.b32.xlu0 %v1843, 95
    %v1849 = vpop.permute.xlu0 %1848
    %v1850 = vrot.slane %v1847, 2
    %v1851 = vrot.slane %v1849, 2
    %v1852 = vsel %vm75, %v1850, %v1851
    %v1853 = vsel %vm137, %v1847, %v1852
    %v1854 = vsel %vm137, %v1849, %v1851
    %v1857 = vadd.f32 %v1838, %v1853
    %v1858 = vadd.f32 %v1839, %v1854
    %s1859 = sld [smem:[#allocation2 + $0x284]]
    %v1860 = vstv %s1859
    %v1861 = vmul.f32 %v1860, %v48
    %v1862 = vmul.f32 %v1860, %v49
    %1865 = vrot.lane.b32.xlu0 %v1861, 94
    %v1866 = vpop.permute.xlu0 %1865
    %1867 = vrot.lane.b32.xlu0 %v1862, 94
    %v1868 = vpop.permute.xlu0 %1867
    %v1869 = vrot.slane %v1866, 2
    %v1870 = vrot.slane %v1868, 2
    %v1871 = vsel %vm75, %v1869, %v1870
    %v1872 = vsel %vm157, %v1866, %v1871
    %v1873 = vsel %vm157, %v1868, %v1870
    %v1876 = vadd.f32 %v1857, %v1872
    %v1877 = vadd.f32 %v1858, %v1873
    %s1878 = sld [smem:[#allocation2 + $0x304]]
    %v1879 = vstv %s1878
    %v1880 = vmul.f32 %v1879, %v48
    %v1881 = vmul.f32 %v1879, %v49
    %1884 = vrot.lane.b32.xlu0 %v1880, 64
    %v1885 = vpop.permute.xlu0 %1884
    %1886 = vrot.lane.b32.xlu0 %v1881, 64
    %v1887 = vpop.permute.xlu0 %1886
    %v1888 = vrot.slane %v1885, 2
    %v1889 = vrot.slane %v1887, 2
    %v1890 = vsel %vm75, %v1888, %v1889
    %v1891 = vsel %vm177, %v1885, %v1890
    %v1892 = vsel %vm177, %v1887, %v1889
    %v1895 = vadd.f32 %v1876, %v1891
    %v1896 = vadd.f32 %v1877, %v1892
    %s1897 = sld [smem:[#allocation2 + $0x384]]
    %v1898 = vstv %s1897
    %v1899 = vmul.f32 %v1898, %v48
    %v1900 = vmul.f32 %v1898, %v50
    %1903 = vrot.lane.b32.xlu0 %v1899, 63
    %v1904 = vpop.permute.xlu0 %1903
    %1905 = vrot.lane.b32.xlu0 %v1900, 63
    %v1906 = vpop.permute.xlu0 %1905
    %v1907 = vrot.slane %v1904, 2
    %v1908 = vrot.slane %v1906, 2
    %v1909 = vsel %vm75, %v1907, %v1908
    %v1910 = vsel %vm197, %v1904, %v1909
    %v1911 = vsel %vm197, %v1906, %v1908
    %v1914 = vadd.f32 %v1895, %v1910
    %v1915 = vadd.f32 %v1896, %v1911
    %s1916 = sld [smem:[#allocation2 + $0x404]]
    %v1917 = vstv %s1916
    %v1918 = vmul.f32 %v1917, %v48
    %v1919 = vmul.f32 %v1917, %v50
    %1922 = vrot.lane.b32.xlu0 %v1918, 62
    %v1923 = vpop.permute.xlu0 %1922
    %1924 = vrot.lane.b32.xlu0 %v1919, 62
    %v1925 = vpop.permute.xlu0 %1924
    %v1926 = vrot.slane %v1923, 2
    %v1927 = vrot.slane %v1925, 2
    %v1928 = vsel %vm75, %v1926, %v1927
    %v1929 = vsel %vm217, %v1923, %v1928
    %v1930 = vsel %vm217, %v1925, %v1927
    %v1933 = vadd.f32 %v1914, %v1929
    %v1934 = vadd.f32 %v1915, %v1930
    %v1935 = vmax.f32 %v1933, 0.0
    %v1936 = vmax.f32 %v1934, 0.0
    %s1937 = scalar_lea.vmem %s3, 3328
    %v1938 = vld [vmem:[%s1937] sm:$0xff]
    %v1939 = vld [vmem:[%s1937 + $0x8] sm:$0xff]
    %v1940 = vld [vmem:[%s1937 + $0x10] sm:$0xff]
    %v1941 = vld [vmem:[%s1937 + $0x18] sm:$0xff]
    %v1942 = vld [vmem:[%s1937 + $0x20] sm:$0xff]
    %v1943 = vld [vmem:[%s1937 + $0x28] sm:$0xff]
    %v1944 = vld [vmem:[%s1937 + $0x30] sm:$0xff]
    %v1945 = vld [vmem:[%s1937 + $0x38] sm:$0xff]
    %v1946 = vld [vmem:[%s1937 + $0x40] sm:$0xff]
    %v1947 = vld [vmem:[%s1937 + $0x48] sm:$0xff]
    %v1948 = vld [vmem:[%s1937 + $0x50] sm:$0xff]
    %v1949 = vld [vmem:[%s1937 + $0x58] sm:$0xff]
    %v1950 = vld [vmem:[%s1937 + $0x60] sm:$0xff]
    %v1951 = vld [vmem:[%s1937 + $0x68] sm:$0xff]
    %v1952 = vld [vmem:[%s1937 + $0x70] sm:$0xff]
    %v1953 = vld [vmem:[%s1937 + $0x78] sm:$0xff]
    %v1954 = vld [vmem:[%s1937 + $0x80] sm:$0xff]
    %v1955 = vld [vmem:[%s1937 + $0x88] sm:$0xff]
    %v1956 = vld [vmem:[%s1937 + $0x90] sm:$0xff]
    %v1957 = vld [vmem:[%s1937 + $0x98] sm:$0xff]
    %v1958 = vld [vmem:[%s1937 + $0xa0] sm:$0xff]
    %v1959 = vld [vmem:[%s1937 + $0xa8] sm:$0xff]
    %v1960 = vld [vmem:[%s1937 + $0xb0] sm:$0xff]
    %v1961 = vld [vmem:[%s1937 + $0xb8] sm:$0xff]
    %v1962 = vld [vmem:[%s1937 + $0xc0] sm:$0xff]
    %v1963 = vld [vmem:[%s1937 + $0xc8] sm:$0xff]
    %v1964 = vld [vmem:[%s1937 + $0xd0] sm:$0xff]
    %v1965 = vld [vmem:[%s1937 + $0xd8] sm:$0xff]
    %v1966 = vld [vmem:[%s1937 + $0xe0] sm:$0xff]
    %v1967 = vld [vmem:[%s1937 + $0xe8] sm:$0xff]
    %v1968 = vld [vmem:[%s1937 + $0xf0] sm:$0xff]
    %v1969 = vld [vmem:[%s1937 + $0xf8] sm:$0xff]
    %v1970 = vld [vmem:[%s1937 + $0x100] sm:$0xff]
    %v1971 = vld [vmem:[%s1937 + $0x108] sm:$0xff]
    %v1972 = vld [vmem:[%s1937 + $0x110] sm:$0xff]
    %v1973 = vld [vmem:[%s1937 + $0x118] sm:$0xff]
    %v1974 = vld [vmem:[%s1937 + $0x120] sm:$0xff]
    %v1975 = vld [vmem:[%s1937 + $0x128] sm:$0xff]
    %v1976 = vld [vmem:[%s1937 + $0x130] sm:$0xff]
    %v1977 = vld [vmem:[%s1937 + $0x138] sm:$0xff]
    %v1978 = vld [vmem:[%s1937 + $0x140] sm:$0xff]
    %v1979 = vld [vmem:[%s1937 + $0x148] sm:$0xff]
    %v1980 = vld [vmem:[%s1937 + $0x150] sm:$0xff]
    %v1981 = vld [vmem:[%s1937 + $0x158] sm:$0xff]
    %v1982 = vld [vmem:[%s1937 + $0x160] sm:$0xff]
    %v1983 = vld [vmem:[%s1937 + $0x168] sm:$0xff]
    %v1984 = vld [vmem:[%s1937 + $0x170] sm:$0xff]
    %v1985 = vld [vmem:[%s1937 + $0x178] sm:$0xff]
    %v1986 = vld [vmem:[%s1937 + $0x180] sm:$0xff]
    %v1987 = vld [vmem:[%s1937 + $0x188] sm:$0xff]
    %v1988 = vld [vmem:[%s1937 + $0x190] sm:$0xff]
    %v1989 = vld [vmem:[%s1937 + $0x198] sm:$0xff]
    %v1990 = vld [vmem:[%s1937 + $0x1a0] sm:$0xff]
    %v1991 = vld [vmem:[%s1937 + $0x1a8] sm:$0xff]
    %v1992 = vld [vmem:[%s1937 + $0x1b0] sm:$0xff]
    %v1993 = vld [vmem:[%s1937 + $0x1b8] sm:$0xff]
    %v1994 = vld [vmem:[%s1937 + $0x1c0] sm:$0xff]
    %v1995 = vld [vmem:[%s1937 + $0x1c8] sm:$0xff]
    %v1996 = vld [vmem:[%s1937 + $0x1d0] sm:$0xff]
    %v1997 = vld [vmem:[%s1937 + $0x1d8] sm:$0xff]
    %v1998 = vld [vmem:[%s1937 + $0x1e0] sm:$0xff]
    %v1999 = vld [vmem:[%s1937 + $0x1e8] sm:$0xff]
    %v2000 = vld [vmem:[%s1937 + $0x1f0] sm:$0xff]
    %v2001 = vld [vmem:[%s1937 + $0x1f8] sm:$0xff]
    %v2002 = vld [vmem:[%s1937 + $0x200] sm:$0xff]
    %v2003 = vld [vmem:[%s1937 + $0x208] sm:$0xff]
    %v2004 = vld [vmem:[%s1937 + $0x210] sm:$0xff]
    %v2005 = vld [vmem:[%s1937 + $0x218] sm:$0xff]
    %v2006 = vld [vmem:[%s1937 + $0x220] sm:$0xff]
    %v2007 = vld [vmem:[%s1937 + $0x228] sm:$0xff]
    %v2008 = vld [vmem:[%s1937 + $0x230] sm:$0xff]
    %v2009 = vld [vmem:[%s1937 + $0x238] sm:$0xff]
    %v2010 = vld [vmem:[%s1937 + $0x240] sm:$0xff]
    %v2011 = vld [vmem:[%s1937 + $0x248] sm:$0xff]
    %v2012 = vld [vmem:[%s1937 + $0x250] sm:$0xff]
    %v2013 = vld [vmem:[%s1937 + $0x258] sm:$0xff]
    %v2014 = vld [vmem:[%s1937 + $0x260] sm:$0xff]
    %v2015 = vld [vmem:[%s1937 + $0x268] sm:$0xff]
    %v2016 = vld [vmem:[%s1937 + $0x270] sm:$0xff]
    %v2017 = vld [vmem:[%s1937 + $0x278] sm:$0xff]
    %v2018 = vld [vmem:[%s1937 + $0x280] sm:$0xff]
    %v2019 = vld [vmem:[%s1937 + $0x288] sm:$0xff]
    %v2020 = vld [vmem:[%s1937 + $0x290] sm:$0xff]
    %v2021 = vld [vmem:[%s1937 + $0x298] sm:$0xff]
    %v2022 = vld [vmem:[%s1937 + $0x2a0] sm:$0xff]
    %v2023 = vld [vmem:[%s1937 + $0x2a8] sm:$0xff]
    %v2024 = vld [vmem:[%s1937 + $0x2b0] sm:$0xff]
    %v2025 = vld [vmem:[%s1937 + $0x2b8] sm:$0xff]
    %v2026 = vld [vmem:[%s1937 + $0x2c0] sm:$0xff]
    %v2027 = vld [vmem:[%s1937 + $0x2c8] sm:$0xff]
    %v2028 = vld [vmem:[%s1937 + $0x2d0] sm:$0xff]
    %v2029 = vld [vmem:[%s1937 + $0x2d8] sm:$0xff]
    %v2030 = vld [vmem:[%s1937 + $0x2e0] sm:$0xff]
    %v2031 = vld [vmem:[%s1937 + $0x2e8] sm:$0xff]
    %v2032 = vld [vmem:[%s1937 + $0x2f0] sm:$0xff]
    %v2033 = vld [vmem:[%s1937 + $0x2f8] sm:$0xff]
    %v2034 = vld [vmem:[%s1937 + $0x300] sm:$0xff]
    %v2035 = vld [vmem:[%s1937 + $0x308] sm:$0xff]
    %v2036 = vld [vmem:[%s1937 + $0x310] sm:$0xff]
    %v2037 = vld [vmem:[%s1937 + $0x318] sm:$0xff]
    %v2038 = vld [vmem:[%s1937 + $0x320] sm:$0xff]
    %v2039 = vld [vmem:[%s1937 + $0x328] sm:$0xff]
    %v2040 = vld [vmem:[%s1937 + $0x330] sm:$0xff]
    %v2041 = vld [vmem:[%s1937 + $0x338] sm:$0xff]
    %2044 = vst [vmem:[#allocation1] ss:$4 sm:$0xff] %v1935
    %s2045 = scalar_lea.vmem [#allocation1], 32
    %2046 = vst [vmem:[%s2045] ss:$4 sm:$0xff] %v1936
    %v2047 = vld.sshfl [vmem:[#allocation1] sm:$0xff pattern:$0x73625140]
    %v2048 = vld.sshfl [vmem:[#allocation1 + $0x8] sm:$0xff pattern:$0x73625140]
    %v2049 = vld.sshfl [vmem:[#allocation1 + $0x10] sm:$0xff pattern:$0x73625140]
    %v2050 = vld.sshfl [vmem:[#allocation1 + $0x18] sm:$0xff pattern:$0x73625140]
    %v2051 = vld.sshfl [vmem:[#allocation1 + $0x20] sm:$0xff pattern:$0x73625140]
    %v2052 = vld.sshfl [vmem:[#allocation1 + $0x28] sm:$0xff pattern:$0x73625140]
    %v2053 = vld.sshfl [vmem:[#allocation1 + $0x30] sm:$0xff pattern:$0x73625140]
    %v2060 = vsel %vm177, %v2053, 0
    %2062 = vmatpush.msra.mxu0 %v1953
    %2063 = vmatpush.msra.mxu0 %v1952
    %2064 = vmatpush.msra.mxu0 %v1951
    %2065 = vmatpush.msra.mxu0 %v1950
    %2066 = vmatpush.msra.mxu0 %v1949
    %2067 = vmatpush.msra.mxu0 %v1948
    %2068 = vmatpush.msra.mxu0 %v1947
    %2069 = vmatpush.msra.mxu0 %v1946
    %2070 = vmatpush.msra.mxu0 %v1945
    %2071 = vmatpush.msra.mxu0 %v1944
    %2072 = vmatpush.msra.mxu0 %v1943
    %2073 = vmatpush.msra.mxu0 %v1942
    %2074 = vmatpush.msra.mxu0 %v1941
    %2075 = vmatpush.msra.mxu0 %v1940
    %2076 = vmatpush.msra.mxu0 %v1939
    %2077 = vmatpush.msra.mxu0 %v1938
    %2078 = vmatmul.f32.gmra.mxu0 %v2047
    %v2079 = vpop.f32.mrf.mxu0
    %v2080 = vadd.f32 0.0, %v2079
    %2081 = vdwg.mxu0
    %2082 = vmatpush.msra.mxu0 %v1969
    %2083 = vmatpush.msra.mxu0 %v1968
    %2084 = vmatpush.msra.mxu0 %v1967
    %2085 = vmatpush.msra.mxu0 %v1966
    %2086 = vmatpush.msra.mxu0 %v1965
    %2087 = vmatpush.msra.mxu0 %v1964
    %2088 = vmatpush.msra.mxu0 %v1963
    %2089 = vmatpush.msra.mxu0 %v1962
    %2090 = vmatpush.msra.mxu0 %v1961
    %2091 = vmatpush.msra.mxu0 %v1960
    %2092 = vmatpush.msra.mxu0 %v1959
    %2093 = vmatpush.msra.mxu0 %v1958
    %2094 = vmatpush.msra.mxu0 %v1957
    %2095 = vmatpush.msra.mxu0 %v1956
    %2096 = vmatpush.msra.mxu0 %v1955
    %2097 = vmatpush.msra.mxu0 %v1954
    %2098 = vmatmul.f32.gmra.mxu0 %v2048
    %v2099 = vpop.f32.mrf.mxu0
    %v2100 = vadd.f32 %v2080, %v2099
    %2101 = vdwg.mxu0
    %2102 = vmatpush.msra.mxu0 %v1985
    %2103 = vmatpush.msra.mxu0 %v1984
    %2104 = vmatpush.msra.mxu0 %v1983
    %2105 = vmatpush.msra.mxu0 %v1982
    %2106 = vmatpush.msra.mxu0 %v1981
    %2107 = vmatpush.msra.mxu0 %v1980
    %2108 = vmatpush.msra.mxu0 %v1979
    %2109 = vmatpush.msra.mxu0 %v1978
    %2110 = vmatpush.msra.mxu0 %v1977
    %2111 = vmatpush.msra.mxu0 %v1976
    %2112 = vmatpush.msra.mxu0 %v1975
    %2113 = vmatpush.msra.mxu0 %v1974
    %2114 = vmatpush.msra.mxu0 %v1973
    %2115 = vmatpush.msra.mxu0 %v1972
    %2116 = vmatpush.msra.mxu0 %v1971
    %2117 = vmatpush.msra.mxu0 %v1970
    %2118 = vmatmul.f32.gmra.mxu0 %v2049
    %v2119 = vpop.f32.mrf.mxu0
    %v2120 = vadd.f32 %v2100, %v2119
    %2121 = vdwg.mxu0
    %2122 = vmatpush.msra.mxu0 %v2001
    %2123 = vmatpush.msra.mxu0 %v2000
    %2124 = vmatpush.msra.mxu0 %v1999
    %2125 = vmatpush.msra.mxu0 %v1998
    %2126 = vmatpush.msra.mxu0 %v1997
    %2127 = vmatpush.msra.mxu0 %v1996
    %2128 = vmatpush.msra.mxu0 %v1995
    %2129 = vmatpush.msra.mxu0 %v1994
    %2130 = vmatpush.msra.mxu0 %v1993
    %2131 = vmatpush.msra.mxu0 %v1992
    %2132 = vmatpush.msra.mxu0 %v1991
    %2133 = vmatpush.msra.mxu0 %v1990
    %2134 = vmatpush.msra.mxu0 %v1989
    %2135 = vmatpush.msra.mxu0 %v1988
    %2136 = vmatpush.msra.mxu0 %v1987
    %2137 = vmatpush.msra.mxu0 %v1986
    %2138 = vmatmul.f32.gmra.mxu0 %v2050
    %v2139 = vpop.f32.mrf.mxu0
    %v2140 = vadd.f32 %v2120, %v2139
    %2141 = vdwg.mxu0
    %2142 = vmatpush.msra.mxu0 %v2017
    %2143 = vmatpush.msra.mxu0 %v2016
    %2144 = vmatpush.msra.mxu0 %v2015
    %2145 = vmatpush.msra.mxu0 %v2014
    %2146 = vmatpush.msra.mxu0 %v2013
    %2147 = vmatpush.msra.mxu0 %v2012
    %2148 = vmatpush.msra.mxu0 %v2011
    %2149 = vmatpush.msra.mxu0 %v2010
    %2150 = vmatpush.msra.mxu0 %v2009
    %2151 = vmatpush.msra.mxu0 %v2008
    %2152 = vmatpush.msra.mxu0 %v2007
    %2153 = vmatpush.msra.mxu0 %v2006
    %2154 = vmatpush.msra.mxu0 %v2005
    %2155 = vmatpush.msra.mxu0 %v2004
    %2156 = vmatpush.msra.mxu0 %v2003
    %2157 = vmatpush.msra.mxu0 %v2002
    %2158 = vmatmul.f32.gmra.mxu0 %v2051
    %v2159 = vpop.f32.mrf.mxu0
    %v2160 = vadd.f32 %v2140, %v2159
    %2161 = vdwg.mxu0
    %2162 = vmatpush.msra.mxu0 %v2033
    %2163 = vmatpush.msra.mxu0 %v2032
    %2164 = vmatpush.msra.mxu0 %v2031
    %2165 = vmatpush.msra.mxu0 %v2030
    %2166 = vmatpush.msra.mxu0 %v2029
    %2167 = vmatpush.msra.mxu0 %v2028
    %2168 = vmatpush.msra.mxu0 %v2027
    %2169 = vmatpush.msra.mxu0 %v2026
    %2170 = vmatpush.msra.mxu0 %v2025
    %2171 = vmatpush.msra.mxu0 %v2024
    %2172 = vmatpush.msra.mxu0 %v2023
    %2173 = vmatpush.msra.mxu0 %v2022
    %2174 = vmatpush.msra.mxu0 %v2021
    %2175 = vmatpush.msra.mxu0 %v2020
    %2176 = vmatpush.msra.mxu0 %v2019
    %2177 = vmatpush.msra.mxu0 %v2018
    %2178 = vmatmul.f32.gmra.mxu0 %v2052
    %v2179 = vpop.f32.mrf.mxu0
    %v2180 = vadd.f32 %v2160, %v2179
    %2181 = vdwg.mxu0
    %2182 = vmatpush.msra.mxu0 0.0
    %2183 = vmatpush.msra.mxu0 0.0
    %2184 = vmatpush.msra.mxu0 0.0
    %2185 = vmatpush.msra.mxu0 0.0
    %2186 = vmatpush.msra.mxu0 0.0
    %2187 = vmatpush.msra.mxu0 0.0
    %2188 = vmatpush.msra.mxu0 0.0
    %2189 = vmatpush.msra.mxu0 0.0
    %2190 = vmatpush.msra.mxu0 %v2041
    %2191 = vmatpush.msra.mxu0 %v2040
    %2192 = vmatpush.msra.mxu0 %v2039
    %2193 = vmatpush.msra.mxu0 %v2038
    %2194 = vmatpush.msra.mxu0 %v2037
    %2195 = vmatpush.msra.mxu0 %v2036
    %2196 = vmatpush.msra.mxu0 %v2035
    %2197 = vmatpush.msra.mxu0 %v2034
    %2198 = vmatmul.f32.gmra.mxu0 %v2060
    %v2199 = vpop.f32.mrf.mxu0
    %v2200 = vadd.f32 %v2180, %v2199
    %2201 = vdwg.mxu0
    %v2202 = vadd.f32 %v1774, %v2200
    %s2203 = sld [smem:[#allocation5 + $0x5]]
    %s2204 = sld [smem:[#allocation2 + $0x5]]
    %v2205 = vstv %s2204
    %v2206 = vmul.f32 %v2205, %v48
    %v2207 = vmul.f32 %v2205, %v49
    %v2208 = vstv %s2203
    %v2209 = vadd.f32 %v2208, %v2206
    %v2210 = vadd.f32 %v2208, %v2207
    %s2211 = sld [smem:[#allocation2 + $0x85]]
    %v2212 = vstv %s2211
    %v2213 = vmul.f32 %v2212, %v48
    %v2214 = vmul.f32 %v2212, %v49
    %2217 = vrot.lane.b32.xlu0 %v2213, 127
    %v2218 = vpop.permute.xlu0 %2217
    %2219 = vrot.lane.b32.xlu0 %v2214, 127
    %v2220 = vpop.permute.xlu0 %2219
    %v2221 = vrot.slane %v2218, 2
    %v2222 = vrot.slane %v2220, 2
    %v2223 = vsel %vm75, %v2221, %v2222
    %v2224 = vsel %vm77, %v2218, %v2223
    %v2225 = vsel %vm77, %v2220, %v2222
    %v2228 = vadd.f32 %v2209, %v2224
    %v2229 = vadd.f32 %v2210, %v2225
    %s2230 = sld [smem:[#allocation2 + $0x105]]
    %v2231 = vstv %s2230
    %v2232 = vmul.f32 %v2231, %v48
    %v2233 = vmul.f32 %v2231, %v49
    %2236 = vrot.lane.b32.xlu0 %v2232, 126
    %v2237 = vpop.permute.xlu0 %2236
    %2238 = vrot.lane.b32.xlu0 %v2233, 126
    %v2239 = vpop.permute.xlu0 %2238
    %v2240 = vrot.slane %v2237, 2
    %v2241 = vrot.slane %v2239, 2
    %v2242 = vsel %vm75, %v2240, %v2241
    %v2243 = vsel %vm97, %v2237, %v2242
    %v2244 = vsel %vm97, %v2239, %v2241
    %v2247 = vadd.f32 %v2228, %v2243
    %v2248 = vadd.f32 %v2229, %v2244
    %s2249 = sld [smem:[#allocation2 + $0x185]]
    %v2250 = vstv %s2249
    %v2251 = vmul.f32 %v2250, %v48
    %v2252 = vmul.f32 %v2250, %v49
    %2255 = vrot.lane.b32.xlu0 %v2251, 96
    %v2256 = vpop.permute.xlu0 %2255
    %2257 = vrot.lane.b32.xlu0 %v2252, 96
    %v2258 = vpop.permute.xlu0 %2257
    %v2259 = vrot.slane %v2256, 2
    %v2260 = vrot.slane %v2258, 2
    %v2261 = vsel %vm75, %v2259, %v2260
    %v2262 = vsel %vm117, %v2256, %v2261
    %v2263 = vsel %vm117, %v2258, %v2260
    %v2266 = vadd.f32 %v2247, %v2262
    %v2267 = vadd.f32 %v2248, %v2263
    %s2268 = sld [smem:[#allocation2 + $0x205]]
    %v2269 = vstv %s2268
    %v2270 = vmul.f32 %v2269, %v48
    %v2271 = vmul.f32 %v2269, %v49
    %2274 = vrot.lane.b32.xlu0 %v2270, 95
    %v2275 = vpop.permute.xlu0 %2274
    %2276 = vrot.lane.b32.xlu0 %v2271, 95
    %v2277 = vpop.permute.xlu0 %2276
    %v2278 = vrot.slane %v2275, 2
    %v2279 = vrot.slane %v2277, 2
    %v2280 = vsel %vm75, %v2278, %v2279
    %v2281 = vsel %vm137, %v2275, %v2280
    %v2282 = vsel %vm137, %v2277, %v2279
    %v2285 = vadd.f32 %v2266, %v2281
    %v2286 = vadd.f32 %v2267, %v2282
    %s2287 = sld [smem:[#allocation2 + $0x285]]
    %v2288 = vstv %s2287
    %v2289 = vmul.f32 %v2288, %v48
    %v2290 = vmul.f32 %v2288, %v49
    %2293 = vrot.lane.b32.xlu0 %v2289, 94
    %v2294 = vpop.permute.xlu0 %2293
    %2295 = vrot.lane.b32.xlu0 %v2290, 94
    %v2296 = vpop.permute.xlu0 %2295
    %v2297 = vrot.slane %v2294, 2
    %v2298 = vrot.slane %v2296, 2
    %v2299 = vsel %vm75, %v2297, %v2298
    %v2300 = vsel %vm157, %v2294, %v2299
    %v2301 = vsel %vm157, %v2296, %v2298
    %v2304 = vadd.f32 %v2285, %v2300
    %v2305 = vadd.f32 %v2286, %v2301
    %s2306 = sld [smem:[#allocation2 + $0x305]]
    %v2307 = vstv %s2306
    %v2308 = vmul.f32 %v2307, %v48
    %v2309 = vmul.f32 %v2307, %v49
    %2312 = vrot.lane.b32.xlu0 %v2308, 64
    %v2313 = vpop.permute.xlu0 %2312
    %2314 = vrot.lane.b32.xlu0 %v2309, 64
    %v2315 = vpop.permute.xlu0 %2314
    %v2316 = vrot.slane %v2313, 2
    %v2317 = vrot.slane %v2315, 2
    %v2318 = vsel %vm75, %v2316, %v2317
    %v2319 = vsel %vm177, %v2313, %v2318
    %v2320 = vsel %vm177, %v2315, %v2317
    %v2323 = vadd.f32 %v2304, %v2319
    %v2324 = vadd.f32 %v2305, %v2320
    %s2325 = sld [smem:[#allocation2 + $0x385]]
    %v2326 = vstv %s2325
    %v2327 = vmul.f32 %v2326, %v48
    %v2328 = vmul.f32 %v2326, %v50
    %2331 = vrot.lane.b32.xlu0 %v2327, 63
    %v2332 = vpop.permute.xlu0 %2331
    %2333 = vrot.lane.b32.xlu0 %v2328, 63
    %v2334 = vpop.permute.xlu0 %2333
    %v2335 = vrot.slane %v2332, 2
    %v2336 = vrot.slane %v2334, 2
    %v2337 = vsel %vm75, %v2335, %v2336
    %v2338 = vsel %vm197, %v2332, %v2337
    %v2339 = vsel %vm197, %v2334, %v2336
    %v2342 = vadd.f32 %v2323, %v2338
    %v2343 = vadd.f32 %v2324, %v2339
    %s2344 = sld [smem:[#allocation2 + $0x405]]
    %v2345 = vstv %s2344
    %v2346 = vmul.f32 %v2345, %v48
    %v2347 = vmul.f32 %v2345, %v50
    %2350 = vrot.lane.b32.xlu0 %v2346, 62
    %v2351 = vpop.permute.xlu0 %2350
    %2352 = vrot.lane.b32.xlu0 %v2347, 62
    %v2353 = vpop.permute.xlu0 %2352
    %v2354 = vrot.slane %v2351, 2
    %v2355 = vrot.slane %v2353, 2
    %v2356 = vsel %vm75, %v2354, %v2355
    %v2357 = vsel %vm217, %v2351, %v2356
    %v2358 = vsel %vm217, %v2353, %v2355
    %v2361 = vadd.f32 %v2342, %v2357
    %v2362 = vadd.f32 %v2343, %v2358
    %v2363 = vmax.f32 %v2361, 0.0
    %v2364 = vmax.f32 %v2362, 0.0
    %s2365 = scalar_lea.vmem %s3, 4160
    %v2366 = vld [vmem:[%s2365] sm:$0xff]
    %v2367 = vld [vmem:[%s2365 + $0x8] sm:$0xff]
    %v2368 = vld [vmem:[%s2365 + $0x10] sm:$0xff]
    %v2369 = vld [vmem:[%s2365 + $0x18] sm:$0xff]
    %v2370 = vld [vmem:[%s2365 + $0x20] sm:$0xff]
    %v2371 = vld [vmem:[%s2365 + $0x28] sm:$0xff]
    %v2372 = vld [vmem:[%s2365 + $0x30] sm:$0xff]
    %v2373 = vld [vmem:[%s2365 + $0x38] sm:$0xff]
    %v2374 = vld [vmem:[%s2365 + $0x40] sm:$0xff]
    %v2375 = vld [vmem:[%s2365 + $0x48] sm:$0xff]
    %v2376 = vld [vmem:[%s2365 + $0x50] sm:$0xff]
    %v2377 = vld [vmem:[%s2365 + $0x58] sm:$0xff]
    %v2378 = vld [vmem:[%s2365 + $0x60] sm:$0xff]
    %v2379 = vld [vmem:[%s2365 + $0x68] sm:$0xff]
    %v2380 = vld [vmem:[%s2365 + $0x70] sm:$0xff]
    %v2381 = vld [vmem:[%s2365 + $0x78] sm:$0xff]
    %v2382 = vld [vmem:[%s2365 + $0x80] sm:$0xff]
    %v2383 = vld [vmem:[%s2365 + $0x88] sm:$0xff]
    %v2384 = vld [vmem:[%s2365 + $0x90] sm:$0xff]
    %v2385 = vld [vmem:[%s2365 + $0x98] sm:$0xff]
    %v2386 = vld [vmem:[%s2365 + $0xa0] sm:$0xff]
    %v2387 = vld [vmem:[%s2365 + $0xa8] sm:$0xff]
    %v2388 = vld [vmem:[%s2365 + $0xb0] sm:$0xff]
    %v2389 = vld [vmem:[%s2365 + $0xb8] sm:$0xff]
    %v2390 = vld [vmem:[%s2365 + $0xc0] sm:$0xff]
    %v2391 = vld [vmem:[%s2365 + $0xc8] sm:$0xff]
    %v2392 = vld [vmem:[%s2365 + $0xd0] sm:$0xff]
    %v2393 = vld [vmem:[%s2365 + $0xd8] sm:$0xff]
    %v2394 = vld [vmem:[%s2365 + $0xe0] sm:$0xff]
    %v2395 = vld [vmem:[%s2365 + $0xe8] sm:$0xff]
    %v2396 = vld [vmem:[%s2365 + $0xf0] sm:$0xff]
    %v2397 = vld [vmem:[%s2365 + $0xf8] sm:$0xff]
    %v2398 = vld [vmem:[%s2365 + $0x100] sm:$0xff]
    %v2399 = vld [vmem:[%s2365 + $0x108] sm:$0xff]
    %v2400 = vld [vmem:[%s2365 + $0x110] sm:$0xff]
    %v2401 = vld [vmem:[%s2365 + $0x118] sm:$0xff]
    %v2402 = vld [vmem:[%s2365 + $0x120] sm:$0xff]
    %v2403 = vld [vmem:[%s2365 + $0x128] sm:$0xff]
    %v2404 = vld [vmem:[%s2365 + $0x130] sm:$0xff]
    %v2405 = vld [vmem:[%s2365 + $0x138] sm:$0xff]
    %v2406 = vld [vmem:[%s2365 + $0x140] sm:$0xff]
    %v2407 = vld [vmem:[%s2365 + $0x148] sm:$0xff]
    %v2408 = vld [vmem:[%s2365 + $0x150] sm:$0xff]
    %v2409 = vld [vmem:[%s2365 + $0x158] sm:$0xff]
    %v2410 = vld [vmem:[%s2365 + $0x160] sm:$0xff]
    %v2411 = vld [vmem:[%s2365 + $0x168] sm:$0xff]
    %v2412 = vld [vmem:[%s2365 + $0x170] sm:$0xff]
    %v2413 = vld [vmem:[%s2365 + $0x178] sm:$0xff]
    %v2414 = vld [vmem:[%s2365 + $0x180] sm:$0xff]
    %v2415 = vld [vmem:[%s2365 + $0x188] sm:$0xff]
    %v2416 = vld [vmem:[%s2365 + $0x190] sm:$0xff]
    %v2417 = vld [vmem:[%s2365 + $0x198] sm:$0xff]
    %v2418 = vld [vmem:[%s2365 + $0x1a0] sm:$0xff]
    %v2419 = vld [vmem:[%s2365 + $0x1a8] sm:$0xff]
    %v2420 = vld [vmem:[%s2365 + $0x1b0] sm:$0xff]
    %v2421 = vld [vmem:[%s2365 + $0x1b8] sm:$0xff]
    %v2422 = vld [vmem:[%s2365 + $0x1c0] sm:$0xff]
    %v2423 = vld [vmem:[%s2365 + $0x1c8] sm:$0xff]
    %v2424 = vld [vmem:[%s2365 + $0x1d0] sm:$0xff]
    %v2425 = vld [vmem:[%s2365 + $0x1d8] sm:$0xff]
    %v2426 = vld [vmem:[%s2365 + $0x1e0] sm:$0xff]
    %v2427 = vld [vmem:[%s2365 + $0x1e8] sm:$0xff]
    %v2428 = vld [vmem:[%s2365 + $0x1f0] sm:$0xff]
    %v2429 = vld [vmem:[%s2365 + $0x1f8] sm:$0xff]
    %v2430 = vld [vmem:[%s2365 + $0x200] sm:$0xff]
    %v2431 = vld [vmem:[%s2365 + $0x208] sm:$0xff]
    %v2432 = vld [vmem:[%s2365 + $0x210] sm:$0xff]
    %v2433 = vld [vmem:[%s2365 + $0x218] sm:$0xff]
    %v2434 = vld [vmem:[%s2365 + $0x220] sm:$0xff]
    %v2435 = vld [vmem:[%s2365 + $0x228] sm:$0xff]
    %v2436 = vld [vmem:[%s2365 + $0x230] sm:$0xff]
    %v2437 = vld [vmem:[%s2365 + $0x238] sm:$0xff]
    %v2438 = vld [vmem:[%s2365 + $0x240] sm:$0xff]
    %v2439 = vld [vmem:[%s2365 + $0x248] sm:$0xff]
    %v2440 = vld [vmem:[%s2365 + $0x250] sm:$0xff]
    %v2441 = vld [vmem:[%s2365 + $0x258] sm:$0xff]
    %v2442 = vld [vmem:[%s2365 + $0x260] sm:$0xff]
    %v2443 = vld [vmem:[%s2365 + $0x268] sm:$0xff]
    %v2444 = vld [vmem:[%s2365 + $0x270] sm:$0xff]
    %v2445 = vld [vmem:[%s2365 + $0x278] sm:$0xff]
    %v2446 = vld [vmem:[%s2365 + $0x280] sm:$0xff]
    %v2447 = vld [vmem:[%s2365 + $0x288] sm:$0xff]
    %v2448 = vld [vmem:[%s2365 + $0x290] sm:$0xff]
    %v2449 = vld [vmem:[%s2365 + $0x298] sm:$0xff]
    %v2450 = vld [vmem:[%s2365 + $0x2a0] sm:$0xff]
    %v2451 = vld [vmem:[%s2365 + $0x2a8] sm:$0xff]
    %v2452 = vld [vmem:[%s2365 + $0x2b0] sm:$0xff]
    %v2453 = vld [vmem:[%s2365 + $0x2b8] sm:$0xff]
    %v2454 = vld [vmem:[%s2365 + $0x2c0] sm:$0xff]
    %v2455 = vld [vmem:[%s2365 + $0x2c8] sm:$0xff]
    %v2456 = vld [vmem:[%s2365 + $0x2d0] sm:$0xff]
    %v2457 = vld [vmem:[%s2365 + $0x2d8] sm:$0xff]
    %v2458 = vld [vmem:[%s2365 + $0x2e0] sm:$0xff]
    %v2459 = vld [vmem:[%s2365 + $0x2e8] sm:$0xff]
    %v2460 = vld [vmem:[%s2365 + $0x2f0] sm:$0xff]
    %v2461 = vld [vmem:[%s2365 + $0x2f8] sm:$0xff]
    %v2462 = vld [vmem:[%s2365 + $0x300] sm:$0xff]
    %v2463 = vld [vmem:[%s2365 + $0x308] sm:$0xff]
    %v2464 = vld [vmem:[%s2365 + $0x310] sm:$0xff]
    %v2465 = vld [vmem:[%s2365 + $0x318] sm:$0xff]
    %v2466 = vld [vmem:[%s2365 + $0x320] sm:$0xff]
    %v2467 = vld [vmem:[%s2365 + $0x328] sm:$0xff]
    %v2468 = vld [vmem:[%s2365 + $0x330] sm:$0xff]
    %v2469 = vld [vmem:[%s2365 + $0x338] sm:$0xff]
    %2472 = vst [vmem:[#allocation1] ss:$4 sm:$0xff] %v2363
    %s2473 = scalar_lea.vmem [#allocation1], 32
    %2474 = vst [vmem:[%s2473] ss:$4 sm:$0xff] %v2364
    %v2475 = vld.sshfl [vmem:[#allocation1] sm:$0xff pattern:$0x73625140]
    %v2476 = vld.sshfl [vmem:[#allocation1 + $0x8] sm:$0xff pattern:$0x73625140]
    %v2477 = vld.sshfl [vmem:[#allocation1 + $0x10] sm:$0xff pattern:$0x73625140]
    %v2478 = vld.sshfl [vmem:[#allocation1 + $0x18] sm:$0xff pattern:$0x73625140]
    %v2479 = vld.sshfl [vmem:[#allocation1 + $0x20] sm:$0xff pattern:$0x73625140]
    %v2480 = vld.sshfl [vmem:[#allocation1 + $0x28] sm:$0xff pattern:$0x73625140]
    %v2481 = vld.sshfl [vmem:[#allocation1 + $0x30] sm:$0xff pattern:$0x73625140]
    %v2488 = vsel %vm177, %v2481, 0
    %2490 = vmatpush.msra.mxu0 %v2381
    %2491 = vmatpush.msra.mxu0 %v2380
    %2492 = vmatpush.msra.mxu0 %v2379
    %2493 = vmatpush.msra.mxu0 %v2378
    %2494 = vmatpush.msra.mxu0 %v2377
    %2495 = vmatpush.msra.mxu0 %v2376
    %2496 = vmatpush.msra.mxu0 %v2375
    %2497 = vmatpush.msra.mxu0 %v2374
    %2498 = vmatpush.msra.mxu0 %v2373
    %2499 = vmatpush.msra.mxu0 %v2372
    %2500 = vmatpush.msra.mxu0 %v2371
    %2501 = vmatpush.msra.mxu0 %v2370
    %2502 = vmatpush.msra.mxu0 %v2369
    %2503 = vmatpush.msra.mxu0 %v2368
    %2504 = vmatpush.msra.mxu0 %v2367
    %2505 = vmatpush.msra.mxu0 %v2366
    %2506 = vmatmul.f32.gmra.mxu0 %v2475
    %v2507 = vpop.f32.mrf.mxu0
    %v2508 = vadd.f32 0.0, %v2507
    %2509 = vdwg.mxu0
    %2510 = vmatpush.msra.mxu0 %v2397
    %2511 = vmatpush.msra.mxu0 %v2396
    %2512 = vmatpush.msra.mxu0 %v2395
    %2513 = vmatpush.msra.mxu0 %v2394
    %2514 = vmatpush.msra.mxu0 %v2393
    %2515 = vmatpush.msra.mxu0 %v2392
    %2516 = vmatpush.msra.mxu0 %v2391
    %2517 = vmatpush.msra.mxu0 %v2390
    %2518 = vmatpush.msra.mxu0 %v2389
    %2519 = vmatpush.msra.mxu0 %v2388
    %2520 = vmatpush.msra.mxu0 %v2387
    %2521 = vmatpush.msra.mxu0 %v2386
    %2522 = vmatpush.msra.mxu0 %v2385
    %2523 = vmatpush.msra.mxu0 %v2384
    %2524 = vmatpush.msra.mxu0 %v2383
    %2525 = vmatpush.msra.mxu0 %v2382
    %2526 = vmatmul.f32.gmra.mxu0 %v2476
    %v2527 = vpop.f32.mrf.mxu0
    %v2528 = vadd.f32 %v2508, %v2527
    %2529 = vdwg.mxu0
    %2530 = vmatpush.msra.mxu0 %v2413
    %2531 = vmatpush.msra.mxu0 %v2412
    %2532 = vmatpush.msra.mxu0 %v2411
    %2533 = vmatpush.msra.mxu0 %v2410
    %2534 = vmatpush.msra.mxu0 %v2409
    %2535 = vmatpush.msra.mxu0 %v2408
    %2536 = vmatpush.msra.mxu0 %v2407
    %2537 = vmatpush.msra.mxu0 %v2406
    %2538 = vmatpush.msra.mxu0 %v2405
    %2539 = vmatpush.msra.mxu0 %v2404
    %2540 = vmatpush.msra.mxu0 %v2403
    %2541 = vmatpush.msra.mxu0 %v2402
    %2542 = vmatpush.msra.mxu0 %v2401
    %2543 = vmatpush.msra.mxu0 %v2400
    %2544 = vmatpush.msra.mxu0 %v2399
    %2545 = vmatpush.msra.mxu0 %v2398
    %2546 = vmatmul.f32.gmra.mxu0 %v2477
    %v2547 = vpop.f32.mrf.mxu0
    %v2548 = vadd.f32 %v2528, %v2547
    %2549 = vdwg.mxu0
    %2550 = vmatpush.msra.mxu0 %v2429
    %2551 = vmatpush.msra.mxu0 %v2428
    %2552 = vmatpush.msra.mxu0 %v2427
    %2553 = vmatpush.msra.mxu0 %v2426
    %2554 = vmatpush.msra.mxu0 %v2425
    %2555 = vmatpush.msra.mxu0 %v2424
    %2556 = vmatpush.msra.mxu0 %v2423
    %2557 = vmatpush.msra.mxu0 %v2422
    %2558 = vmatpush.msra.mxu0 %v2421
    %2559 = vmatpush.msra.mxu0 %v2420
    %2560 = vmatpush.msra.mxu0 %v2419
    %2561 = vmatpush.msra.mxu0 %v2418
    %2562 = vmatpush.msra.mxu0 %v2417
    %2563 = vmatpush.msra.mxu0 %v2416
    %2564 = vmatpush.msra.mxu0 %v2415
    %2565 = vmatpush.msra.mxu0 %v2414
    %2566 = vmatmul.f32.gmra.mxu0 %v2478
    %v2567 = vpop.f32.mrf.mxu0
    %v2568 = vadd.f32 %v2548, %v2567
    %2569 = vdwg.mxu0
    %2570 = vmatpush.msra.mxu0 %v2445
    %2571 = vmatpush.msra.mxu0 %v2444
    %2572 = vmatpush.msra.mxu0 %v2443
    %2573 = vmatpush.msra.mxu0 %v2442
    %2574 = vmatpush.msra.mxu0 %v2441
    %2575 = vmatpush.msra.mxu0 %v2440
    %2576 = vmatpush.msra.mxu0 %v2439
    %2577 = vmatpush.msra.mxu0 %v2438
    %2578 = vmatpush.msra.mxu0 %v2437
    %2579 = vmatpush.msra.mxu0 %v2436
    %2580 = vmatpush.msra.mxu0 %v2435
    %2581 = vmatpush.msra.mxu0 %v2434
    %2582 = vmatpush.msra.mxu0 %v2433
    %2583 = vmatpush.msra.mxu0 %v2432
    %2584 = vmatpush.msra.mxu0 %v2431
    %2585 = vmatpush.msra.mxu0 %v2430
    %2586 = vmatmul.f32.gmra.mxu0 %v2479
    %v2587 = vpop.f32.mrf.mxu0
    %v2588 = vadd.f32 %v2568, %v2587
    %2589 = vdwg.mxu0
    %2590 = vmatpush.msra.mxu0 %v2461
    %2591 = vmatpush.msra.mxu0 %v2460
    %2592 = vmatpush.msra.mxu0 %v2459
    %2593 = vmatpush.msra.mxu0 %v2458
    %2594 = vmatpush.msra.mxu0 %v2457
    %2595 = vmatpush.msra.mxu0 %v2456
    %2596 = vmatpush.msra.mxu0 %v2455
    %2597 = vmatpush.msra.mxu0 %v2454
    %2598 = vmatpush.msra.mxu0 %v2453
    %2599 = vmatpush.msra.mxu0 %v2452
    %2600 = vmatpush.msra.mxu0 %v2451
    %2601 = vmatpush.msra.mxu0 %v2450
    %2602 = vmatpush.msra.mxu0 %v2449
    %2603 = vmatpush.msra.mxu0 %v2448
    %2604 = vmatpush.msra.mxu0 %v2447
    %2605 = vmatpush.msra.mxu0 %v2446
    %2606 = vmatmul.f32.gmra.mxu0 %v2480
    %v2607 = vpop.f32.mrf.mxu0
    %v2608 = vadd.f32 %v2588, %v2607
    %2609 = vdwg.mxu0
    %2610 = vmatpush.msra.mxu0 0.0
    %2611 = vmatpush.msra.mxu0 0.0
    %2612 = vmatpush.msra.mxu0 0.0
    %2613 = vmatpush.msra.mxu0 0.0
    %2614 = vmatpush.msra.mxu0 0.0
    %2615 = vmatpush.msra.mxu0 0.0
    %2616 = vmatpush.msra.mxu0 0.0
    %2617 = vmatpush.msra.mxu0 0.0
    %2618 = vmatpush.msra.mxu0 %v2469
    %2619 = vmatpush.msra.mxu0 %v2468
    %2620 = vmatpush.msra.mxu0 %v2467
    %2621 = vmatpush.msra.mxu0 %v2466
    %2622 = vmatpush.msra.mxu0 %v2465
    %2623 = vmatpush.msra.mxu0 %v2464
    %2624 = vmatpush.msra.mxu0 %v2463
    %2625 = vmatpush.msra.mxu0 %v2462
    %2626 = vmatmul.f32.gmra.mxu0 %v2488
    %v2627 = vpop.f32.mrf.mxu0
    %v2628 = vadd.f32 %v2608, %v2627
    %2629 = vdwg.mxu0
    %v2630 = vadd.f32 %v2202, %v2628
    %s2631 = sld [smem:[#allocation5 + $0x6]]
    %s2632 = sld [smem:[#allocation2 + $0x6]]
    %v2633 = vstv %s2632
    %v2634 = vmul.f32 %v2633, %v48
    %v2635 = vmul.f32 %v2633, %v49
    %v2636 = vstv %s2631
    %v2637 = vadd.f32 %v2636, %v2634
    %v2638 = vadd.f32 %v2636, %v2635
    %s2639 = sld [smem:[#allocation2 + $0x86]]
    %v2640 = vstv %s2639
    %v2641 = vmul.f32 %v2640, %v48
    %v2642 = vmul.f32 %v2640, %v49
    %2645 = vrot.lane.b32.xlu0 %v2641, 127
    %v2646 = vpop.permute.xlu0 %2645
    %2647 = vrot.lane.b32.xlu0 %v2642, 127
    %v2648 = vpop.permute.xlu0 %2647
    %v2649 = vrot.slane %v2646, 2
    %v2650 = vrot.slane %v2648, 2
    %v2651 = vsel %vm75, %v2649, %v2650
    %v2652 = vsel %vm77, %v2646, %v2651
    %v2653 = vsel %vm77, %v2648, %v2650
    %v2656 = vadd.f32 %v2637, %v2652
    %v2657 = vadd.f32 %v2638, %v2653
    %s2658 = sld [smem:[#allocation2 + $0x106]]
    %v2659 = vstv %s2658
    %v2660 = vmul.f32 %v2659, %v48
    %v2661 = vmul.f32 %v2659, %v49
    %2664 = vrot.lane.b32.xlu0 %v2660, 126
    %v2665 = vpop.permute.xlu0 %2664
    %2666 = vrot.lane.b32.xlu0 %v2661, 126
    %v2667 = vpop.permute.xlu0 %2666
    %v2668 = vrot.slane %v2665, 2
    %v2669 = vrot.slane %v2667, 2
    %v2670 = vsel %vm75, %v2668, %v2669
    %v2671 = vsel %vm97, %v2665, %v2670
    %v2672 = vsel %vm97, %v2667, %v2669
    %v2675 = vadd.f32 %v2656, %v2671
    %v2676 = vadd.f32 %v2657, %v2672
    %s2677 = sld [smem:[#allocation2 + $0x186]]
    %v2678 = vstv %s2677
    %v2679 = vmul.f32 %v2678, %v48
    %v2680 = vmul.f32 %v2678, %v49
    %2683 = vrot.lane.b32.xlu0 %v2679, 96
    %v2684 = vpop.permute.xlu0 %2683
    %2685 = vrot.lane.b32.xlu0 %v2680, 96
    %v2686 = vpop.permute.xlu0 %2685
    %v2687 = vrot.slane %v2684, 2
    %v2688 = vrot.slane %v2686, 2
    %v2689 = vsel %vm75, %v2687, %v2688
    %v2690 = vsel %vm117, %v2684, %v2689
    %v2691 = vsel %vm117, %v2686, %v2688
    %v2694 = vadd.f32 %v2675, %v2690
    %v2695 = vadd.f32 %v2676, %v2691
    %s2696 = sld [smem:[#allocation2 + $0x206]]
    %v2697 = vstv %s2696
    %v2698 = vmul.f32 %v2697, %v48
    %v2699 = vmul.f32 %v2697, %v49
    %2702 = vrot.lane.b32.xlu0 %v2698, 95
    %v2703 = vpop.permute.xlu0 %2702
    %2704 = vrot.lane.b32.xlu0 %v2699, 95
    %v2705 = vpop.permute.xlu0 %2704
    %v2706 = vrot.slane %v2703, 2
    %v2707 = vrot.slane %v2705, 2
    %v2708 = vsel %vm75, %v2706, %v2707
    %v2709 = vsel %vm137, %v2703, %v2708
    %v2710 = vsel %vm137, %v2705, %v2707
    %v2713 = vadd.f32 %v2694, %v2709
    %v2714 = vadd.f32 %v2695, %v2710
    %s2715 = sld [smem:[#allocation2 + $0x286]]
    %v2716 = vstv %s2715
    %v2717 = vmul.f32 %v2716, %v48
    %v2718 = vmul.f32 %v2716, %v49
    %2721 = vrot.lane.b32.xlu0 %v2717, 94
    %v2722 = vpop.permute.xlu0 %2721
    %2723 = vrot.lane.b32.xlu0 %v2718, 94
    %v2724 = vpop.permute.xlu0 %2723
    %v2725 = vrot.slane %v2722, 2
    %v2726 = vrot.slane %v2724, 2
    %v2727 = vsel %vm75, %v2725, %v2726
    %v2728 = vsel %vm157, %v2722, %v2727
    %v2729 = vsel %vm157, %v2724, %v2726
    %v2732 = vadd.f32 %v2713, %v2728
    %v2733 = vadd.f32 %v2714, %v2729
    %s2734 = sld [smem:[#allocation2 + $0x306]]
    %v2735 = vstv %s2734
    %v2736 = vmul.f32 %v2735, %v48
    %v2737 = vmul.f32 %v2735, %v49
    %2740 = vrot.lane.b32.xlu0 %v2736, 64
    %v2741 = vpop.permute.xlu0 %2740
    %2742 = vrot.lane.b32.xlu0 %v2737, 64
    %v2743 = vpop.permute.xlu0 %2742
    %v2744 = vrot.slane %v2741, 2
    %v2745 = vrot.slane %v2743, 2
    %v2746 = vsel %vm75, %v2744, %v2745
    %v2747 = vsel %vm177, %v2741, %v2746
    %v2748 = vsel %vm177, %v2743, %v2745
    %v2751 = vadd.f32 %v2732, %v2747
    %v2752 = vadd.f32 %v2733, %v2748
    %s2753 = sld [smem:[#allocation2 + $0x386]]
    %v2754 = vstv %s2753
    %v2755 = vmul.f32 %v2754, %v48
    %v2756 = vmul.f32 %v2754, %v50
    %2759 = vrot.lane.b32.xlu0 %v2755, 63
    %v2760 = vpop.permute.xlu0 %2759
    %2761 = vrot.lane.b32.xlu0 %v2756, 63
    %v2762 = vpop.permute.xlu0 %2761
    %v2763 = vrot.slane %v2760, 2
    %v2764 = vrot.slane %v2762, 2
    %v2765 = vsel %vm75, %v2763, %v2764
    %v2766 = vsel %vm197, %v2760, %v2765
    %v2767 = vsel %vm197, %v2762, %v2764
    %v2770 = vadd.f32 %v2751, %v2766
    %v2771 = vadd.f32 %v2752, %v2767
    %s2772 = sld [smem:[#allocation2 + $0x406]]
    %v2773 = vstv %s2772
    %v2774 = vmul.f32 %v2773, %v48
    %v2775 = vmul.f32 %v2773, %v50
    %2778 = vrot.lane.b32.xlu0 %v2774, 62
    %v2779 = vpop.permute.xlu0 %2778
    %2780 = vrot.lane.b32.xlu0 %v2775, 62
    %v2781 = vpop.permute.xlu0 %2780
    %v2782 = vrot.slane %v2779, 2
    %v2783 = vrot.slane %v2781, 2
    %v2784 = vsel %vm75, %v2782, %v2783
    %v2785 = vsel %vm217, %v2779, %v2784
    %v2786 = vsel %vm217, %v2781, %v2783
    %v2789 = vadd.f32 %v2770, %v2785
    %v2790 = vadd.f32 %v2771, %v2786
    %v2791 = vmax.f32 %v2789, 0.0
    %v2792 = vmax.f32 %v2790, 0.0
    %s2793 = scalar_lea.vmem %s3, 4992
    %v2794 = vld [vmem:[%s2793] sm:$0xff]
    %v2795 = vld [vmem:[%s2793 + $0x8] sm:$0xff]
    %v2796 = vld [vmem:[%s2793 + $0x10] sm:$0xff]
    %v2797 = vld [vmem:[%s2793 + $0x18] sm:$0xff]
    %v2798 = vld [vmem:[%s2793 + $0x20] sm:$0xff]
    %v2799 = vld [vmem:[%s2793 + $0x28] sm:$0xff]
    %v2800 = vld [vmem:[%s2793 + $0x30] sm:$0xff]
    %v2801 = vld [vmem:[%s2793 + $0x38] sm:$0xff]
    %v2802 = vld [vmem:[%s2793 + $0x40] sm:$0xff]
    %v2803 = vld [vmem:[%s2793 + $0x48] sm:$0xff]
    %v2804 = vld [vmem:[%s2793 + $0x50] sm:$0xff]
    %v2805 = vld [vmem:[%s2793 + $0x58] sm:$0xff]
    %v2806 = vld [vmem:[%s2793 + $0x60] sm:$0xff]
    %v2807 = vld [vmem:[%s2793 + $0x68] sm:$0xff]
    %v2808 = vld [vmem:[%s2793 + $0x70] sm:$0xff]
    %v2809 = vld [vmem:[%s2793 + $0x78] sm:$0xff]
    %v2810 = vld [vmem:[%s2793 + $0x80] sm:$0xff]
    %v2811 = vld [vmem:[%s2793 + $0x88] sm:$0xff]
    %v2812 = vld [vmem:[%s2793 + $0x90] sm:$0xff]
    %v2813 = vld [vmem:[%s2793 + $0x98] sm:$0xff]
    %v2814 = vld [vmem:[%s2793 + $0xa0] sm:$0xff]
    %v2815 = vld [vmem:[%s2793 + $0xa8] sm:$0xff]
    %v2816 = vld [vmem:[%s2793 + $0xb0] sm:$0xff]
    %v2817 = vld [vmem:[%s2793 + $0xb8] sm:$0xff]
    %v2818 = vld [vmem:[%s2793 + $0xc0] sm:$0xff]
    %v2819 = vld [vmem:[%s2793 + $0xc8] sm:$0xff]
    %v2820 = vld [vmem:[%s2793 + $0xd0] sm:$0xff]
    %v2821 = vld [vmem:[%s2793 + $0xd8] sm:$0xff]
    %v2822 = vld [vmem:[%s2793 + $0xe0] sm:$0xff]
    %v2823 = vld [vmem:[%s2793 + $0xe8] sm:$0xff]
    %v2824 = vld [vmem:[%s2793 + $0xf0] sm:$0xff]
    %v2825 = vld [vmem:[%s2793 + $0xf8] sm:$0xff]
    %v2826 = vld [vmem:[%s2793 + $0x100] sm:$0xff]
    %v2827 = vld [vmem:[%s2793 + $0x108] sm:$0xff]
    %v2828 = vld [vmem:[%s2793 + $0x110] sm:$0xff]
    %v2829 = vld [vmem:[%s2793 + $0x118] sm:$0xff]
    %v2830 = vld [vmem:[%s2793 + $0x120] sm:$0xff]
    %v2831 = vld [vmem:[%s2793 + $0x128] sm:$0xff]
    %v2832 = vld [vmem:[%s2793 + $0x130] sm:$0xff]
    %v2833 = vld [vmem:[%s2793 + $0x138] sm:$0xff]
    %v2834 = vld [vmem:[%s2793 + $0x140] sm:$0xff]
    %v2835 = vld [vmem:[%s2793 + $0x148] sm:$0xff]
    %v2836 = vld [vmem:[%s2793 + $0x150] sm:$0xff]
    %v2837 = vld [vmem:[%s2793 + $0x158] sm:$0xff]
    %v2838 = vld [vmem:[%s2793 + $0x160] sm:$0xff]
    %v2839 = vld [vmem:[%s2793 + $0x168] sm:$0xff]
    %v2840 = vld [vmem:[%s2793 + $0x170] sm:$0xff]
    %v2841 = vld [vmem:[%s2793 + $0x178] sm:$0xff]
    %v2842 = vld [vmem:[%s2793 + $0x180] sm:$0xff]
    %v2843 = vld [vmem:[%s2793 + $0x188] sm:$0xff]
    %v2844 = vld [vmem:[%s2793 + $0x190] sm:$0xff]
    %v2845 = vld [vmem:[%s2793 + $0x198] sm:$0xff]
    %v2846 = vld [vmem:[%s2793 + $0x1a0] sm:$0xff]
    %v2847 = vld [vmem:[%s2793 + $0x1a8] sm:$0xff]
    %v2848 = vld [vmem:[%s2793 + $0x1b0] sm:$0xff]
    %v2849 = vld [vmem:[%s2793 + $0x1b8] sm:$0xff]
    %v2850 = vld [vmem:[%s2793 + $0x1c0] sm:$0xff]
    %v2851 = vld [vmem:[%s2793 + $0x1c8] sm:$0xff]
    %v2852 = vld [vmem:[%s2793 + $0x1d0] sm:$0xff]
    %v2853 = vld [vmem:[%s2793 + $0x1d8] sm:$0xff]
    %v2854 = vld [vmem:[%s2793 + $0x1e0] sm:$0xff]
    %v2855 = vld [vmem:[%s2793 + $0x1e8] sm:$0xff]
    %v2856 = vld [vmem:[%s2793 + $0x1f0] sm:$0xff]
    %v2857 = vld [vmem:[%s2793 + $0x1f8] sm:$0xff]
    %v2858 = vld [vmem:[%s2793 + $0x200] sm:$0xff]
    %v2859 = vld [vmem:[%s2793 + $0x208] sm:$0xff]
    %v2860 = vld [vmem:[%s2793 + $0x210] sm:$0xff]
    %v2861 = vld [vmem:[%s2793 + $0x218] sm:$0xff]
    %v2862 = vld [vmem:[%s2793 + $0x220] sm:$0xff]
    %v2863 = vld [vmem:[%s2793 + $0x228] sm:$0xff]
    %v2864 = vld [vmem:[%s2793 + $0x230] sm:$0xff]
    %v2865 = vld [vmem:[%s2793 + $0x238] sm:$0xff]
    %v2866 = vld [vmem:[%s2793 + $0x240] sm:$0xff]
    %v2867 = vld [vmem:[%s2793 + $0x248] sm:$0xff]
    %v2868 = vld [vmem:[%s2793 + $0x250] sm:$0xff]
    %v2869 = vld [vmem:[%s2793 + $0x258] sm:$0xff]
    %v2870 = vld [vmem:[%s2793 + $0x260] sm:$0xff]
    %v2871 = vld [vmem:[%s2793 + $0x268] sm:$0xff]
    %v2872 = vld [vmem:[%s2793 + $0x270] sm:$0xff]
    %v2873 = vld [vmem:[%s2793 + $0x278] sm:$0xff]
    %v2874 = vld [vmem:[%s2793 + $0x280] sm:$0xff]
    %v2875 = vld [vmem:[%s2793 + $0x288] sm:$0xff]
    %v2876 = vld [vmem:[%s2793 + $0x290] sm:$0xff]
    %v2877 = vld [vmem:[%s2793 + $0x298] sm:$0xff]
    %v2878 = vld [vmem:[%s2793 + $0x2a0] sm:$0xff]
    %v2879 = vld [vmem:[%s2793 + $0x2a8] sm:$0xff]
    %v2880 = vld [vmem:[%s2793 + $0x2b0] sm:$0xff]
    %v2881 = vld [vmem:[%s2793 + $0x2b8] sm:$0xff]
    %v2882 = vld [vmem:[%s2793 + $0x2c0] sm:$0xff]
    %v2883 = vld [vmem:[%s2793 + $0x2c8] sm:$0xff]
    %v2884 = vld [vmem:[%s2793 + $0x2d0] sm:$0xff]
    %v2885 = vld [vmem:[%s2793 + $0x2d8] sm:$0xff]
    %v2886 = vld [vmem:[%s2793 + $0x2e0] sm:$0xff]
    %v2887 = vld [vmem:[%s2793 + $0x2e8] sm:$0xff]
    %v2888 = vld [vmem:[%s2793 + $0x2f0] sm:$0xff]
    %v2889 = vld [vmem:[%s2793 + $0x2f8] sm:$0xff]
    %v2890 = vld [vmem:[%s2793 + $0x300] sm:$0xff]
    %v2891 = vld [vmem:[%s2793 + $0x308] sm:$0xff]
    %v2892 = vld [vmem:[%s2793 + $0x310] sm:$0xff]
    %v2893 = vld [vmem:[%s2793 + $0x318] sm:$0xff]
    %v2894 = vld [vmem:[%s2793 + $0x320] sm:$0xff]
    %v2895 = vld [vmem:[%s2793 + $0x328] sm:$0xff]
    %v2896 = vld [vmem:[%s2793 + $0x330] sm:$0xff]
    %v2897 = vld [vmem:[%s2793 + $0x338] sm:$0xff]
    %2900 = vst [vmem:[#allocation1] ss:$4 sm:$0xff] %v2791
    %s2901 = scalar_lea.vmem [#allocation1], 32
    %2902 = vst [vmem:[%s2901] ss:$4 sm:$0xff] %v2792
    %v2903 = vld.sshfl [vmem:[#allocation1] sm:$0xff pattern:$0x73625140]
    %v2904 = vld.sshfl [vmem:[#allocation1 + $0x8] sm:$0xff pattern:$0x73625140]
    %v2905 = vld.sshfl [vmem:[#allocation1 + $0x10] sm:$0xff pattern:$0x73625140]
    %v2906 = vld.sshfl [vmem:[#allocation1 + $0x18] sm:$0xff pattern:$0x73625140]
    %v2907 = vld.sshfl [vmem:[#allocation1 + $0x20] sm:$0xff pattern:$0x73625140]
    %v2908 = vld.sshfl [vmem:[#allocation1 + $0x28] sm:$0xff pattern:$0x73625140]
    %v2909 = vld.sshfl [vmem:[#allocation1 + $0x30] sm:$0xff pattern:$0x73625140]
    %v2916 = vsel %vm177, %v2909, 0
    %2918 = vmatpush.msra.mxu0 %v2809
    %2919 = vmatpush.msra.mxu0 %v2808
    %2920 = vmatpush.msra.mxu0 %v2807
    %2921 = vmatpush.msra.mxu0 %v2806
    %2922 = vmatpush.msra.mxu0 %v2805
    %2923 = vmatpush.msra.mxu0 %v2804
    %2924 = vmatpush.msra.mxu0 %v2803
    %2925 = vmatpush.msra.mxu0 %v2802
    %2926 = vmatpush.msra.mxu0 %v2801
    %2927 = vmatpush.msra.mxu0 %v2800
    %2928 = vmatpush.msra.mxu0 %v2799
    %2929 = vmatpush.msra.mxu0 %v2798
    %2930 = vmatpush.msra.mxu0 %v2797
    %2931 = vmatpush.msra.mxu0 %v2796
    %2932 = vmatpush.msra.mxu0 %v2795
    %2933 = vmatpush.msra.mxu0 %v2794
    %2934 = vmatmul.f32.gmra.mxu0 %v2903
    %v2935 = vpop.f32.mrf.mxu0
    %v2936 = vadd.f32 0.0, %v2935
    %2937 = vdwg.mxu0
    %2938 = vmatpush.msra.mxu0 %v2825
    %2939 = vmatpush.msra.mxu0 %v2824
    %2940 = vmatpush.msra.mxu0 %v2823
    %2941 = vmatpush.msra.mxu0 %v2822
    %2942 = vmatpush.msra.mxu0 %v2821
    %2943 = vmatpush.msra.mxu0 %v2820
    %2944 = vmatpush.msra.mxu0 %v2819
    %2945 = vmatpush.msra.mxu0 %v2818
    %2946 = vmatpush.msra.mxu0 %v2817
    %2947 = vmatpush.msra.mxu0 %v2816
    %2948 = vmatpush.msra.mxu0 %v2815
    %2949 = vmatpush.msra.mxu0 %v2814
    %2950 = vmatpush.msra.mxu0 %v2813
    %2951 = vmatpush.msra.mxu0 %v2812
    %2952 = vmatpush.msra.mxu0 %v2811
    %2953 = vmatpush.msra.mxu0 %v2810
    %2954 = vmatmul.f32.gmra.mxu0 %v2904
    %v2955 = vpop.f32.mrf.mxu0
    %v2956 = vadd.f32 %v2936, %v2955
    %2957 = vdwg.mxu0
    %2958 = vmatpush.msra.mxu0 %v2841
    %2959 = vmatpush.msra.mxu0 %v2840
    %2960 = vmatpush.msra.mxu0 %v2839
    %2961 = vmatpush.msra.mxu0 %v2838
    %2962 = vmatpush.msra.mxu0 %v2837
    %2963 = vmatpush.msra.mxu0 %v2836
    %2964 = vmatpush.msra.mxu0 %v2835
    %2965 = vmatpush.msra.mxu0 %v2834
    %2966 = vmatpush.msra.mxu0 %v2833
    %2967 = vmatpush.msra.mxu0 %v2832
    %2968 = vmatpush.msra.mxu0 %v2831
    %2969 = vmatpush.msra.mxu0 %v2830
    %2970 = vmatpush.msra.mxu0 %v2829
    %2971 = vmatpush.msra.mxu0 %v2828
    %2972 = vmatpush.msra.mxu0 %v2827
    %2973 = vmatpush.msra.mxu0 %v2826
    %2974 = vmatmul.f32.gmra.mxu0 %v2905
    %v2975 = vpop.f32.mrf.mxu0
    %v2976 = vadd.f32 %v2956, %v2975
    %2977 = vdwg.mxu0
    %2978 = vmatpush.msra.mxu0 %v2857
    %2979 = vmatpush.msra.mxu0 %v2856
    %2980 = vmatpush.msra.mxu0 %v2855
    %2981 = vmatpush.msra.mxu0 %v2854
    %2982 = vmatpush.msra.mxu0 %v2853
    %2983 = vmatpush.msra.mxu0 %v2852
    %2984 = vmatpush.msra.mxu0 %v2851
    %2985 = vmatpush.msra.mxu0 %v2850
    %2986 = vmatpush.msra.mxu0 %v2849
    %2987 = vmatpush.msra.mxu0 %v2848
    %2988 = vmatpush.msra.mxu0 %v2847
    %2989 = vmatpush.msra.mxu0 %v2846
    %2990 = vmatpush.msra.mxu0 %v2845
    %2991 = vmatpush.msra.mxu0 %v2844
    %2992 = vmatpush.msra.mxu0 %v2843
    %2993 = vmatpush.msra.mxu0 %v2842
    %2994 = vmatmul.f32.gmra.mxu0 %v2906
    %v2995 = vpop.f32.mrf.mxu0
    %v2996 = vadd.f32 %v2976, %v2995
    %2997 = vdwg.mxu0
    %2998 = vmatpush.msra.mxu0 %v2873
    %2999 = vmatpush.msra.mxu0 %v2872
    %3000 = vmatpush.msra.mxu0 %v2871
    %3001 = vmatpush.msra.mxu0 %v2870
    %3002 = vmatpush.msra.mxu0 %v2869
    %3003 = vmatpush.msra.mxu0 %v2868
    %3004 = vmatpush.msra.mxu0 %v2867
    %3005 = vmatpush.msra.mxu0 %v2866
    %3006 = vmatpush.msra.mxu0 %v2865
    %3007 = vmatpush.msra.mxu0 %v2864
    %3008 = vmatpush.msra.mxu0 %v2863
    %3009 = vmatpush.msra.mxu0 %v2862
    %3010 = vmatpush.msra.mxu0 %v2861
    %3011 = vmatpush.msra.mxu0 %v2860
    %3012 = vmatpush.msra.mxu0 %v2859
    %3013 = vmatpush.msra.mxu0 %v2858
    %3014 = vmatmul.f32.gmra.mxu0 %v2907
    %v3015 = vpop.f32.mrf.mxu0
    %v3016 = vadd.f32 %v2996, %v3015
    %3017 = vdwg.mxu0
    %3018 = vmatpush.msra.mxu0 %v2889
    %3019 = vmatpush.msra.mxu0 %v2888
    %3020 = vmatpush.msra.mxu0 %v2887
    %3021 = vmatpush.msra.mxu0 %v2886
    %3022 = vmatpush.msra.mxu0 %v2885
    %3023 = vmatpush.msra.mxu0 %v2884
    %3024 = vmatpush.msra.mxu0 %v2883
    %3025 = vmatpush.msra.mxu0 %v2882
    %3026 = vmatpush.msra.mxu0 %v2881
    %3027 = vmatpush.msra.mxu0 %v2880
    %3028 = vmatpush.msra.mxu0 %v2879
    %3029 = vmatpush.msra.mxu0 %v2878
    %3030 = vmatpush.msra.mxu0 %v2877
    %3031 = vmatpush.msra.mxu0 %v2876
    %3032 = vmatpush.msra.mxu0 %v2875
    %3033 = vmatpush.msra.mxu0 %v2874
    %3034 = vmatmul.f32.gmra.mxu0 %v2908
    %v3035 = vpop.f32.mrf.mxu0
    %v3036 = vadd.f32 %v3016, %v3035
    %3037 = vdwg.mxu0
    %3038 = vmatpush.msra.mxu0 0.0
    %3039 = vmatpush.msra.mxu0 0.0
    %3040 = vmatpush.msra.mxu0 0.0
    %3041 = vmatpush.msra.mxu0 0.0
    %3042 = vmatpush.msra.mxu0 0.0
    %3043 = vmatpush.msra.mxu0 0.0
    %3044 = vmatpush.msra.mxu0 0.0
    %3045 = vmatpush.msra.mxu0 0.0
    %3046 = vmatpush.msra.mxu0 %v2897
    %3047 = vmatpush.msra.mxu0 %v2896
    %3048 = vmatpush.msra.mxu0 %v2895
    %3049 = vmatpush.msra.mxu0 %v2894
    %3050 = vmatpush.msra.mxu0 %v2893
    %3051 = vmatpush.msra.mxu0 %v2892
    %3052 = vmatpush.msra.mxu0 %v2891
    %3053 = vmatpush.msra.mxu0 %v2890
    %3054 = vmatmul.f32.gmra.mxu0 %v2916
    %v3055 = vpop.f32.mrf.mxu0
    %v3056 = vadd.f32 %v3036, %v3055
    %3057 = vdwg.mxu0
    %v3058 = vadd.f32 %v2630, %v3056
    %s3059 = sld [smem:[#allocation5 + $0x7]]
    %s3060 = sld [smem:[#allocation2 + $0x7]]
    %v3061 = vstv %s3060
    %v3062 = vmul.f32 %v3061, %v48
    %v3063 = vmul.f32 %v3061, %v49
    %v3064 = vstv %s3059
    %v3065 = vadd.f32 %v3064, %v3062
    %v3066 = vadd.f32 %v3064, %v3063
    %s3067 = sld [smem:[#allocation2 + $0x87]]
    %v3068 = vstv %s3067
    %v3069 = vmul.f32 %v3068, %v48
    %v3070 = vmul.f32 %v3068, %v49
    %3073 = vrot.lane.b32.xlu0 %v3069, 127
    %v3074 = vpop.permute.xlu0 %3073
    %3075 = vrot.lane.b32.xlu0 %v3070, 127
    %v3076 = vpop.permute.xlu0 %3075
    %v3077 = vrot.slane %v3074, 2
    %v3078 = vrot.slane %v3076, 2
    %v3079 = vsel %vm75, %v3077, %v3078
    %v3080 = vsel %vm77, %v3074, %v3079
    %v3081 = vsel %vm77, %v3076, %v3078
    %v3084 = vadd.f32 %v3065, %v3080
    %v3085 = vadd.f32 %v3066, %v3081
    %s3086 = sld [smem:[#allocation2 + $0x107]]
    %v3087 = vstv %s3086
    %v3088 = vmul.f32 %v3087, %v48
    %v3089 = vmul.f32 %v3087, %v49
    %3092 = vrot.lane.b32.xlu0 %v3088, 126
    %v3093 = vpop.permute.xlu0 %3092
    %3094 = vrot.lane.b32.xlu0 %v3089, 126
    %v3095 = vpop.permute.xlu0 %3094
    %v3096 = vrot.slane %v3093, 2
    %v3097 = vrot.slane %v3095, 2
    %v3098 = vsel %vm75, %v3096, %v3097
    %v3099 = vsel %vm97, %v3093, %v3098
    %v3100 = vsel %vm97, %v3095, %v3097
    %v3103 = vadd.f32 %v3084, %v3099
    %v3104 = vadd.f32 %v3085, %v3100
    %s3105 = sld [smem:[#allocation2 + $0x187]]
    %v3106 = vstv %s3105
    %v3107 = vmul.f32 %v3106, %v48
    %v3108 = vmul.f32 %v3106, %v49
    %3111 = vrot.lane.b32.xlu0 %v3107, 96
    %v3112 = vpop.permute.xlu0 %3111
    %3113 = vrot.lane.b32.xlu0 %v3108, 96
    %v3114 = vpop.permute.xlu0 %3113
    %v3115 = vrot.slane %v3112, 2
    %v3116 = vrot.slane %v3114, 2
    %v3117 = vsel %vm75, %v3115, %v3116
    %v3118 = vsel %vm117, %v3112, %v3117
    %v3119 = vsel %vm117, %v3114, %v3116
    %v3122 = vadd.f32 %v3103, %v3118
    %v3123 = vadd.f32 %v3104, %v3119
    %s3124 = sld [smem:[#allocation2 + $0x207]]
    %v3125 = vstv %s3124
    %v3126 = vmul.f32 %v3125, %v48
    %v3127 = vmul.f32 %v3125, %v49
    %3130 = vrot.lane.b32.xlu0 %v3126, 95
    %v3131 = vpop.permute.xlu0 %3130
    %3132 = vrot.lane.b32.xlu0 %v3127, 95
    %v3133 = vpop.permute.xlu0 %3132
    %v3134 = vrot.slane %v3131, 2
    %v3135 = vrot.slane %v3133, 2
    %v3136 = vsel %vm75, %v3134, %v3135
    %v3137 = vsel %vm137, %v3131, %v3136
    %v3138 = vsel %vm137, %v3133, %v3135
    %v3141 = vadd.f32 %v3122, %v3137
    %v3142 = vadd.f32 %v3123, %v3138
    %s3143 = sld [smem:[#allocation2 + $0x287]]
    %v3144 = vstv %s3143
    %v3145 = vmul.f32 %v3144, %v48
    %v3146 = vmul.f32 %v3144, %v49
    %3149 = vrot.lane.b32.xlu0 %v3145, 94
    %v3150 = vpop.permute.xlu0 %3149
    %3151 = vrot.lane.b32.xlu0 %v3146, 94
    %v3152 = vpop.permute.xlu0 %3151
    %v3153 = vrot.slane %v3150, 2
    %v3154 = vrot.slane %v3152, 2
    %v3155 = vsel %vm75, %v3153, %v3154
    %v3156 = vsel %vm157, %v3150, %v3155
    %v3157 = vsel %vm157, %v3152, %v3154
    %v3160 = vadd.f32 %v3141, %v3156
    %v3161 = vadd.f32 %v3142, %v3157
    %s3162 = sld [smem:[#allocation2 + $0x307]]
    %v3163 = vstv %s3162
    %v3164 = vmul.f32 %v3163, %v48
    %v3165 = vmul.f32 %v3163, %v49
    %3168 = vrot.lane.b32.xlu0 %v3164, 64
    %v3169 = vpop.permute.xlu0 %3168
    %3170 = vrot.lane.b32.xlu0 %v3165, 64
    %v3171 = vpop.permute.xlu0 %3170
    %v3172 = vrot.slane %v3169, 2
    %v3173 = vrot.slane %v3171, 2
    %v3174 = vsel %vm75, %v3172, %v3173
    %v3175 = vsel %vm177, %v3169, %v3174
    %v3176 = vsel %vm177, %v3171, %v3173
    %v3179 = vadd.f32 %v3160, %v3175
    %v3180 = vadd.f32 %v3161, %v3176
    %s3181 = sld [smem:[#allocation2 + $0x387]]
    %v3182 = vstv %s3181
    %v3183 = vmul.f32 %v3182, %v48
    %v3184 = vmul.f32 %v3182, %v50
    %3187 = vrot.lane.b32.xlu0 %v3183, 63
    %v3188 = vpop.permute.xlu0 %3187
    %3189 = vrot.lane.b32.xlu0 %v3184, 63
    %v3190 = vpop.permute.xlu0 %3189
    %v3191 = vrot.slane %v3188, 2
    %v3192 = vrot.slane %v3190, 2
    %v3193 = vsel %vm75, %v3191, %v3192
    %v3194 = vsel %vm197, %v3188, %v3193
    %v3195 = vsel %vm197, %v3190, %v3192
    %v3198 = vadd.f32 %v3179, %v3194
    %v3199 = vadd.f32 %v3180, %v3195
    %s3200 = sld [smem:[#allocation2 + $0x407]]
    %v3201 = vstv %s3200
    %v3202 = vmul.f32 %v3201, %v48
    %v3203 = vmul.f32 %v3201, %v50
    %3206 = vrot.lane.b32.xlu0 %v3202, 62
    %v3207 = vpop.permute.xlu0 %3206
    %3208 = vrot.lane.b32.xlu0 %v3203, 62
    %v3209 = vpop.permute.xlu0 %3208
    %v3210 = vrot.slane %v3207, 2
    %v3211 = vrot.slane %v3209, 2
    %v3212 = vsel %vm75, %v3210, %v3211
    %v3213 = vsel %vm217, %v3207, %v3212
    %v3214 = vsel %vm217, %v3209, %v3211
    %v3217 = vadd.f32 %v3198, %v3213
    %v3218 = vadd.f32 %v3199, %v3214
    %v3219 = vmax.f32 %v3217, 0.0
    %v3220 = vmax.f32 %v3218, 0.0
    %s3221 = scalar_lea.vmem %s3, 5824
    %v3222 = vld [vmem:[%s3221] sm:$0xff]
    %v3223 = vld [vmem:[%s3221 + $0x8] sm:$0xff]
    %v3224 = vld [vmem:[%s3221 + $0x10] sm:$0xff]
    %v3225 = vld [vmem:[%s3221 + $0x18] sm:$0xff]
    %v3226 = vld [vmem:[%s3221 + $0x20] sm:$0xff]
    %v3227 = vld [vmem:[%s3221 + $0x28] sm:$0xff]
    %v3228 = vld [vmem:[%s3221 + $0x30] sm:$0xff]
    %v3229 = vld [vmem:[%s3221 + $0x38] sm:$0xff]
    %v3230 = vld [vmem:[%s3221 + $0x40] sm:$0xff]
    %v3231 = vld [vmem:[%s3221 + $0x48] sm:$0xff]
    %v3232 = vld [vmem:[%s3221 + $0x50] sm:$0xff]
    %v3233 = vld [vmem:[%s3221 + $0x58] sm:$0xff]
    %v3234 = vld [vmem:[%s3221 + $0x60] sm:$0xff]
    %v3235 = vld [vmem:[%s3221 + $0x68] sm:$0xff]
    %v3236 = vld [vmem:[%s3221 + $0x70] sm:$0xff]
    %v3237 = vld [vmem:[%s3221 + $0x78] sm:$0xff]
    %v3238 = vld [vmem:[%s3221 + $0x80] sm:$0xff]
    %v3239 = vld [vmem:[%s3221 + $0x88] sm:$0xff]
    %v3240 = vld [vmem:[%s3221 + $0x90] sm:$0xff]
    %v3241 = vld [vmem:[%s3221 + $0x98] sm:$0xff]
    %v3242 = vld [vmem:[%s3221 + $0xa0] sm:$0xff]
    %v3243 = vld [vmem:[%s3221 + $0xa8] sm:$0xff]
    %v3244 = vld [vmem:[%s3221 + $0xb0] sm:$0xff]
    %v3245 = vld [vmem:[%s3221 + $0xb8] sm:$0xff]
    %v3246 = vld [vmem:[%s3221 + $0xc0] sm:$0xff]
    %v3247 = vld [vmem:[%s3221 + $0xc8] sm:$0xff]
    %v3248 = vld [vmem:[%s3221 + $0xd0] sm:$0xff]
    %v3249 = vld [vmem:[%s3221 + $0xd8] sm:$0xff]
    %v3250 = vld [vmem:[%s3221 + $0xe0] sm:$0xff]
    %v3251 = vld [vmem:[%s3221 + $0xe8] sm:$0xff]
    %v3252 = vld [vmem:[%s3221 + $0xf0] sm:$0xff]
    %v3253 = vld [vmem:[%s3221 + $0xf8] sm:$0xff]
    %v3254 = vld [vmem:[%s3221 + $0x100] sm:$0xff]
    %v3255 = vld [vmem:[%s3221 + $0x108] sm:$0xff]
    %v3256 = vld [vmem:[%s3221 + $0x110] sm:$0xff]
    %v3257 = vld [vmem:[%s3221 + $0x118] sm:$0xff]
    %v3258 = vld [vmem:[%s3221 + $0x120] sm:$0xff]
    %v3259 = vld [vmem:[%s3221 + $0x128] sm:$0xff]
    %v3260 = vld [vmem:[%s3221 + $0x130] sm:$0xff]
    %v3261 = vld [vmem:[%s3221 + $0x138] sm:$0xff]
    %v3262 = vld [vmem:[%s3221 + $0x140] sm:$0xff]
    %v3263 = vld [vmem:[%s3221 + $0x148] sm:$0xff]
    %v3264 = vld [vmem:[%s3221 + $0x150] sm:$0xff]
    %v3265 = vld [vmem:[%s3221 + $0x158] sm:$0xff]
    %v3266 = vld [vmem:[%s3221 + $0x160] sm:$0xff]
    %v3267 = vld [vmem:[%s3221 + $0x168] sm:$0xff]
    %v3268 = vld [vmem:[%s3221 + $0x170] sm:$0xff]
    %v3269 = vld [vmem:[%s3221 + $0x178] sm:$0xff]
    %v3270 = vld [vmem:[%s3221 + $0x180] sm:$0xff]
    %v3271 = vld [vmem:[%s3221 + $0x188] sm:$0xff]
    %v3272 = vld [vmem:[%s3221 + $0x190] sm:$0xff]
    %v3273 = vld [vmem:[%s3221 + $0x198] sm:$0xff]
    %v3274 = vld [vmem:[%s3221 + $0x1a0] sm:$0xff]
    %v3275 = vld [vmem:[%s3221 + $0x1a8] sm:$0xff]
    %v3276 = vld [vmem:[%s3221 + $0x1b0] sm:$0xff]
    %v3277 = vld [vmem:[%s3221 + $0x1b8] sm:$0xff]
    %v3278 = vld [vmem:[%s3221 + $0x1c0] sm:$0xff]
    %v3279 = vld [vmem:[%s3221 + $0x1c8] sm:$0xff]
    %v3280 = vld [vmem:[%s3221 + $0x1d0] sm:$0xff]
    %v3281 = vld [vmem:[%s3221 + $0x1d8] sm:$0xff]
    %v3282 = vld [vmem:[%s3221 + $0x1e0] sm:$0xff]
    %v3283 = vld [vmem:[%s3221 + $0x1e8] sm:$0xff]
    %v3284 = vld [vmem:[%s3221 + $0x1f0] sm:$0xff]
    %v3285 = vld [vmem:[%s3221 + $0x1f8] sm:$0xff]
    %v3286 = vld [vmem:[%s3221 + $0x200] sm:$0xff]
    %v3287 = vld [vmem:[%s3221 + $0x208] sm:$0xff]
    %v3288 = vld [vmem:[%s3221 + $0x210] sm:$0xff]
    %v3289 = vld [vmem:[%s3221 + $0x218] sm:$0xff]
    %v3290 = vld [vmem:[%s3221 + $0x220] sm:$0xff]
    %v3291 = vld [vmem:[%s3221 + $0x228] sm:$0xff]
    %v3292 = vld [vmem:[%s3221 + $0x230] sm:$0xff]
    %v3293 = vld [vmem:[%s3221 + $0x238] sm:$0xff]
    %v3294 = vld [vmem:[%s3221 + $0x240] sm:$0xff]
    %v3295 = vld [vmem:[%s3221 + $0x248] sm:$0xff]
    %v3296 = vld [vmem:[%s3221 + $0x250] sm:$0xff]
    %v3297 = vld [vmem:[%s3221 + $0x258] sm:$0xff]
    %v3298 = vld [vmem:[%s3221 + $0x260] sm:$0xff]
    %v3299 = vld [vmem:[%s3221 + $0x268] sm:$0xff]
    %v3300 = vld [vmem:[%s3221 + $0x270] sm:$0xff]
    %v3301 = vld [vmem:[%s3221 + $0x278] sm:$0xff]
    %v3302 = vld [vmem:[%s3221 + $0x280] sm:$0xff]
    %v3303 = vld [vmem:[%s3221 + $0x288] sm:$0xff]
    %v3304 = vld [vmem:[%s3221 + $0x290] sm:$0xff]
    %v3305 = vld [vmem:[%s3221 + $0x298] sm:$0xff]
    %v3306 = vld [vmem:[%s3221 + $0x2a0] sm:$0xff]
    %v3307 = vld [vmem:[%s3221 + $0x2a8] sm:$0xff]
    %v3308 = vld [vmem:[%s3221 + $0x2b0] sm:$0xff]
    %v3309 = vld [vmem:[%s3221 + $0x2b8] sm:$0xff]
    %v3310 = vld [vmem:[%s3221 + $0x2c0] sm:$0xff]
    %v3311 = vld [vmem:[%s3221 + $0x2c8] sm:$0xff]
    %v3312 = vld [vmem:[%s3221 + $0x2d0] sm:$0xff]
    %v3313 = vld [vmem:[%s3221 + $0x2d8] sm:$0xff]
    %v3314 = vld [vmem:[%s3221 + $0x2e0] sm:$0xff]
    %v3315 = vld [vmem:[%s3221 + $0x2e8] sm:$0xff]
    %v3316 = vld [vmem:[%s3221 + $0x2f0] sm:$0xff]
    %v3317 = vld [vmem:[%s3221 + $0x2f8] sm:$0xff]
    %v3318 = vld [vmem:[%s3221 + $0x300] sm:$0xff]
    %v3319 = vld [vmem:[%s3221 + $0x308] sm:$0xff]
    %v3320 = vld [vmem:[%s3221 + $0x310] sm:$0xff]
    %v3321 = vld [vmem:[%s3221 + $0x318] sm:$0xff]
    %v3322 = vld [vmem:[%s3221 + $0x320] sm:$0xff]
    %v3323 = vld [vmem:[%s3221 + $0x328] sm:$0xff]
    %v3324 = vld [vmem:[%s3221 + $0x330] sm:$0xff]
    %v3325 = vld [vmem:[%s3221 + $0x338] sm:$0xff]
    %3328 = vst [vmem:[#allocation1] ss:$4 sm:$0xff] %v3219
    %s3329 = scalar_lea.vmem [#allocation1], 32
    %3330 = vst [vmem:[%s3329] ss:$4 sm:$0xff] %v3220
    %v3331 = vld.sshfl [vmem:[#allocation1] sm:$0xff pattern:$0x73625140]
    %v3332 = vld.sshfl [vmem:[#allocation1 + $0x8] sm:$0xff pattern:$0x73625140]
    %v3333 = vld.sshfl [vmem:[#allocation1 + $0x10] sm:$0xff pattern:$0x73625140]
    %v3334 = vld.sshfl [vmem:[#allocation1 + $0x18] sm:$0xff pattern:$0x73625140]
    %v3335 = vld.sshfl [vmem:[#allocation1 + $0x20] sm:$0xff pattern:$0x73625140]
    %v3336 = vld.sshfl [vmem:[#allocation1 + $0x28] sm:$0xff pattern:$0x73625140]
    %v3337 = vld.sshfl [vmem:[#allocation1 + $0x30] sm:$0xff pattern:$0x73625140]
    %v3344 = vsel %vm177, %v3337, 0
    %3346 = vmatpush.msra.mxu0 %v3237
    %3347 = vmatpush.msra.mxu0 %v3236
    %3348 = vmatpush.msra.mxu0 %v3235
    %3349 = vmatpush.msra.mxu0 %v3234
    %3350 = vmatpush.msra.mxu0 %v3233
    %3351 = vmatpush.msra.mxu0 %v3232
    %3352 = vmatpush.msra.mxu0 %v3231
    %3353 = vmatpush.msra.mxu0 %v3230
    %3354 = vmatpush.msra.mxu0 %v3229
    %3355 = vmatpush.msra.mxu0 %v3228
    %3356 = vmatpush.msra.mxu0 %v3227
    %3357 = vmatpush.msra.mxu0 %v3226
    %3358 = vmatpush.msra.mxu0 %v3225
    %3359 = vmatpush.msra.mxu0 %v3224
    %3360 = vmatpush.msra.mxu0 %v3223
    %3361 = vmatpush.msra.mxu0 %v3222
    %3362 = vmatmul.f32.gmra.mxu0 %v3331
    %v3363 = vpop.f32.mrf.mxu0
    %v3364 = vadd.f32 0.0, %v3363
    %3365 = vdwg.mxu0
    %3366 = vmatpush.msra.mxu0 %v3253
    %3367 = vmatpush.msra.mxu0 %v3252
    %3368 = vmatpush.msra.mxu0 %v3251
    %3369 = vmatpush.msra.mxu0 %v3250
    %3370 = vmatpush.msra.mxu0 %v3249
    %3371 = vmatpush.msra.mxu0 %v3248
    %3372 = vmatpush.msra.mxu0 %v3247
    %3373 = vmatpush.msra.mxu0 %v3246
    %3374 = vmatpush.msra.mxu0 %v3245
    %3375 = vmatpush.msra.mxu0 %v3244
    %3376 = vmatpush.msra.mxu0 %v3243
    %3377 = vmatpush.msra.mxu0 %v3242
    %3378 = vmatpush.msra.mxu0 %v3241
    %3379 = vmatpush.msra.mxu0 %v3240
    %3380 = vmatpush.msra.mxu0 %v3239
    %3381 = vmatpush.msra.mxu0 %v3238
    %3382 = vmatmul.f32.gmra.mxu0 %v3332
    %v3383 = vpop.f32.mrf.mxu0
    %v3384 = vadd.f32 %v3364, %v3383
    %3385 = vdwg.mxu0
    %3386 = vmatpush.msra.mxu0 %v3269
    %3387 = vmatpush.msra.mxu0 %v3268
    %3388 = vmatpush.msra.mxu0 %v3267
    %3389 = vmatpush.msra.mxu0 %v3266
    %3390 = vmatpush.msra.mxu0 %v3265
    %3391 = vmatpush.msra.mxu0 %v3264
    %3392 = vmatpush.msra.mxu0 %v3263
    %3393 = vmatpush.msra.mxu0 %v3262
    %3394 = vmatpush.msra.mxu0 %v3261
    %3395 = vmatpush.msra.mxu0 %v3260
    %3396 = vmatpush.msra.mxu0 %v3259
    %3397 = vmatpush.msra.mxu0 %v3258
    %3398 = vmatpush.msra.mxu0 %v3257
    %3399 = vmatpush.msra.mxu0 %v3256
    %3400 = vmatpush.msra.mxu0 %v3255
    %3401 = vmatpush.msra.mxu0 %v3254
    %3402 = vmatmul.f32.gmra.mxu0 %v3333
    %v3403 = vpop.f32.mrf.mxu0
    %v3404 = vadd.f32 %v3384, %v3403
    %3405 = vdwg.mxu0
    %3406 = vmatpush.msra.mxu0 %v3285
    %3407 = vmatpush.msra.mxu0 %v3284
    %3408 = vmatpush.msra.mxu0 %v3283
    %3409 = vmatpush.msra.mxu0 %v3282
    %3410 = vmatpush.msra.mxu0 %v3281
    %3411 = vmatpush.msra.mxu0 %v3280
    %3412 = vmatpush.msra.mxu0 %v3279
    %3413 = vmatpush.msra.mxu0 %v3278
    %3414 = vmatpush.msra.mxu0 %v3277
    %3415 = vmatpush.msra.mxu0 %v3276
    %3416 = vmatpush.msra.mxu0 %v3275
    %3417 = vmatpush.msra.mxu0 %v3274
    %3418 = vmatpush.msra.mxu0 %v3273
    %3419 = vmatpush.msra.mxu0 %v3272
    %3420 = vmatpush.msra.mxu0 %v3271
    %3421 = vmatpush.msra.mxu0 %v3270
    %3422 = vmatmul.f32.gmra.mxu0 %v3334
    %v3423 = vpop.f32.mrf.mxu0
    %v3424 = vadd.f32 %v3404, %v3423
    %3425 = vdwg.mxu0
    %3426 = vmatpush.msra.mxu0 %v3301
    %3427 = vmatpush.msra.mxu0 %v3300
    %3428 = vmatpush.msra.mxu0 %v3299
    %3429 = vmatpush.msra.mxu0 %v3298
    %3430 = vmatpush.msra.mxu0 %v3297
    %3431 = vmatpush.msra.mxu0 %v3296
    %3432 = vmatpush.msra.mxu0 %v3295
    %3433 = vmatpush.msra.mxu0 %v3294
    %3434 = vmatpush.msra.mxu0 %v3293
    %3435 = vmatpush.msra.mxu0 %v3292
    %3436 = vmatpush.msra.mxu0 %v3291
    %3437 = vmatpush.msra.mxu0 %v3290
    %3438 = vmatpush.msra.mxu0 %v3289
    %3439 = vmatpush.msra.mxu0 %v3288
    %3440 = vmatpush.msra.mxu0 %v3287
    %3441 = vmatpush.msra.mxu0 %v3286
    %3442 = vmatmul.f32.gmra.mxu0 %v3335
    %v3443 = vpop.f32.mrf.mxu0
    %v3444 = vadd.f32 %v3424, %v3443
    %3445 = vdwg.mxu0
    %3446 = vmatpush.msra.mxu0 %v3317
    %3447 = vmatpush.msra.mxu0 %v3316
    %3448 = vmatpush.msra.mxu0 %v3315
    %3449 = vmatpush.msra.mxu0 %v3314
    %3450 = vmatpush.msra.mxu0 %v3313
    %3451 = vmatpush.msra.mxu0 %v3312
    %3452 = vmatpush.msra.mxu0 %v3311
    %3453 = vmatpush.msra.mxu0 %v3310
    %3454 = vmatpush.msra.mxu0 %v3309
    %3455 = vmatpush.msra.mxu0 %v3308
    %3456 = vmatpush.msra.mxu0 %v3307
    %3457 = vmatpush.msra.mxu0 %v3306
    %3458 = vmatpush.msra.mxu0 %v3305
    %3459 = vmatpush.msra.mxu0 %v3304
    %3460 = vmatpush.msra.mxu0 %v3303
    %3461 = vmatpush.msra.mxu0 %v3302
    %3462 = vmatmul.f32.gmra.mxu0 %v3336
    %v3463 = vpop.f32.mrf.mxu0
    %v3464 = vadd.f32 %v3444, %v3463
    %3465 = vdwg.mxu0
    %3466 = vmatpush.msra.mxu0 0.0
    %3467 = vmatpush.msra.mxu0 0.0
    %3468 = vmatpush.msra.mxu0 0.0
    %3469 = vmatpush.msra.mxu0 0.0
    %3470 = vmatpush.msra.mxu0 0.0
    %3471 = vmatpush.msra.mxu0 0.0
    %3472 = vmatpush.msra.mxu0 0.0
    %3473 = vmatpush.msra.mxu0 0.0
    %3474 = vmatpush.msra.mxu0 %v3325
    %3475 = vmatpush.msra.mxu0 %v3324
    %3476 = vmatpush.msra.mxu0 %v3323
    %3477 = vmatpush.msra.mxu0 %v3322
    %3478 = vmatpush.msra.mxu0 %v3321
    %3479 = vmatpush.msra.mxu0 %v3320
    %3480 = vmatpush.msra.mxu0 %v3319
    %3481 = vmatpush.msra.mxu0 %v3318
    %3482 = vmatmul.f32.gmra.mxu0 %v3344
    %v3483 = vpop.f32.mrf.mxu0
    %v3484 = vadd.f32 %v3464, %v3483
    %3485 = vdwg.mxu0
    %v3486 = vadd.f32 %v3058, %v3484
    %s3487 = sld [smem:[#allocation5 + $0x8]]
    %s3488 = sld [smem:[#allocation2 + $0x8]]
    %v3489 = vstv %s3488
    %v3490 = vmul.f32 %v3489, %v48
    %v3491 = vmul.f32 %v3489, %v49
    %v3492 = vstv %s3487
    %v3493 = vadd.f32 %v3492, %v3490
    %v3494 = vadd.f32 %v3492, %v3491
    %s3495 = sld [smem:[#allocation2 + $0x88]]
    %v3496 = vstv %s3495
    %v3497 = vmul.f32 %v3496, %v48
    %v3498 = vmul.f32 %v3496, %v49
    %3501 = vrot.lane.b32.xlu0 %v3497, 127
    %v3502 = vpop.permute.xlu0 %3501
    %3503 = vrot.lane.b32.xlu0 %v3498, 127
    %v3504 = vpop.permute.xlu0 %3503
    %v3505 = vrot.slane %v3502, 2
    %v3506 = vrot.slane %v3504, 2
    %v3507 = vsel %vm75, %v3505, %v3506
    %v3508 = vsel %vm77, %v3502, %v3507
    %v3509 = vsel %vm77, %v3504, %v3506
    %v3512 = vadd.f32 %v3493, %v3508
    %v3513 = vadd.f32 %v3494, %v3509
    %s3514 = sld [smem:[#allocation2 + $0x108]]
    %v3515 = vstv %s3514
    %v3516 = vmul.f32 %v3515, %v48
    %v3517 = vmul.f32 %v3515, %v49
    %3520 = vrot.lane.b32.xlu0 %v3516, 126
    %v3521 = vpop.permute.xlu0 %3520
    %3522 = vrot.lane.b32.xlu0 %v3517, 126
    %v3523 = vpop.permute.xlu0 %3522
    %v3524 = vrot.slane %v3521, 2
    %v3525 = vrot.slane %v3523, 2
    %v3526 = vsel %vm75, %v3524, %v3525
    %v3527 = vsel %vm97, %v3521, %v3526
    %v3528 = vsel %vm97, %v3523, %v3525
    %v3531 = vadd.f32 %v3512, %v3527
    %v3532 = vadd.f32 %v3513, %v3528
    %s3533 = sld [smem:[#allocation2 + $0x188]]
    %v3534 = vstv %s3533
    %v3535 = vmul.f32 %v3534, %v48
    %v3536 = vmul.f32 %v3534, %v49
    %3539 = vrot.lane.b32.xlu0 %v3535, 96
    %v3540 = vpop.permute.xlu0 %3539
    %3541 = vrot.lane.b32.xlu0 %v3536, 96
    %v3542 = vpop.permute.xlu0 %3541
    %v3543 = vrot.slane %v3540, 2
    %v3544 = vrot.slane %v3542, 2
    %v3545 = vsel %vm75, %v3543, %v3544
    %v3546 = vsel %vm117, %v3540, %v3545
    %v3547 = vsel %vm117, %v3542, %v3544
    %v3550 = vadd.f32 %v3531, %v3546
    %v3551 = vadd.f32 %v3532, %v3547
    %s3552 = sld [smem:[#allocation2 + $0x208]]
    %v3553 = vstv %s3552
    %v3554 = vmul.f32 %v3553, %v48
    %v3555 = vmul.f32 %v3553, %v49
    %3558 = vrot.lane.b32.xlu0 %v3554, 95
    %v3559 = vpop.permute.xlu0 %3558
    %3560 = vrot.lane.b32.xlu0 %v3555, 95
    %v3561 = vpop.permute.xlu0 %3560
    %v3562 = vrot.slane %v3559, 2
    %v3563 = vrot.slane %v3561, 2
    %v3564 = vsel %vm75, %v3562, %v3563
    %v3565 = vsel %vm137, %v3559, %v3564
    %v3566 = vsel %vm137, %v3561, %v3563
    %v3569 = vadd.f32 %v3550, %v3565
    %v3570 = vadd.f32 %v3551, %v3566
    %s3571 = sld [smem:[#allocation2 + $0x288]]
    %v3572 = vstv %s3571
    %v3573 = vmul.f32 %v3572, %v48
    %v3574 = vmul.f32 %v3572, %v49
    %3577 = vrot.lane.b32.xlu0 %v3573, 94
    %v3578 = vpop.permute.xlu0 %3577
    %3579 = vrot.lane.b32.xlu0 %v3574, 94
    %v3580 = vpop.permute.xlu0 %3579
    %v3581 = vrot.slane %v3578, 2
    %v3582 = vrot.slane %v3580, 2
    %v3583 = vsel %vm75, %v3581, %v3582
    %v3584 = vsel %vm157, %v3578, %v3583
    %v3585 = vsel %vm157, %v3580, %v3582
    %v3588 = vadd.f32 %v3569, %v3584
    %v3589 = vadd.f32 %v3570, %v3585
    %s3590 = sld [smem:[#allocation2 + $0x308]]
    %v3591 = vstv %s3590
    %v3592 = vmul.f32 %v3591, %v48
    %v3593 = vmul.f32 %v3591, %v49
    %3596 = vrot.lane.b32.xlu0 %v3592, 64
    %v3597 = vpop.permute.xlu0 %3596
    %3598 = vrot.lane.b32.xlu0 %v3593, 64
    %v3599 = vpop.permute.xlu0 %3598
    %v3600 = vrot.slane %v3597, 2
    %v3601 = vrot.slane %v3599, 2
    %v3602 = vsel %vm75, %v3600, %v3601
    %v3603 = vsel %vm177, %v3597, %v3602
    %v3604 = vsel %vm177, %v3599, %v3601
    %v3607 = vadd.f32 %v3588, %v3603
    %v3608 = vadd.f32 %v3589, %v3604
    %s3609 = sld [smem:[#allocation2 + $0x388]]
    %v3610 = vstv %s3609
    %v3611 = vmul.f32 %v3610, %v48
    %v3612 = vmul.f32 %v3610, %v50
    %3615 = vrot.lane.b32.xlu0 %v3611, 63
    %v3616 = vpop.permute.xlu0 %3615
    %3617 = vrot.lane.b32.xlu0 %v3612, 63
    %v3618 = vpop.permute.xlu0 %3617
    %v3619 = vrot.slane %v3616, 2
    %v3620 = vrot.slane %v3618, 2
    %v3621 = vsel %vm75, %v3619, %v3620
    %v3622 = vsel %vm197, %v3616, %v3621
    %v3623 = vsel %vm197, %v3618, %v3620
    %v3626 = vadd.f32 %v3607, %v3622
    %v3627 = vadd.f32 %v3608, %v3623
    %s3628 = sld [smem:[#allocation2 + $0x408]]
    %v3629 = vstv %s3628
    %v3630 = vmul.f32 %v3629, %v48
    %v3631 = vmul.f32 %v3629, %v50
    %3634 = vrot.lane.b32.xlu0 %v3630, 62
    %v3635 = vpop.permute.xlu0 %3634
    %3636 = vrot.lane.b32.xlu0 %v3631, 62
    %v3637 = vpop.permute.xlu0 %3636
    %v3638 = vrot.slane %v3635, 2
    %v3639 = vrot.slane %v3637, 2
    %v3640 = vsel %vm75, %v3638, %v3639
    %v3641 = vsel %vm217, %v3635, %v3640
    %v3642 = vsel %vm217, %v3637, %v3639
    %v3645 = vadd.f32 %v3626, %v3641
    %v3646 = vadd.f32 %v3627, %v3642
    %v3647 = vmax.f32 %v3645, 0.0
    %v3648 = vmax.f32 %v3646, 0.0
    %s3649 = scalar_lea.vmem %s3, 6656
    %v3650 = vld [vmem:[%s3649] sm:$0xff]
    %v3651 = vld [vmem:[%s3649 + $0x8] sm:$0xff]
    %v3652 = vld [vmem:[%s3649 + $0x10] sm:$0xff]
    %v3653 = vld [vmem:[%s3649 + $0x18] sm:$0xff]
    %v3654 = vld [vmem:[%s3649 + $0x20] sm:$0xff]
    %v3655 = vld [vmem:[%s3649 + $0x28] sm:$0xff]
    %v3656 = vld [vmem:[%s3649 + $0x30] sm:$0xff]
    %v3657 = vld [vmem:[%s3649 + $0x38] sm:$0xff]
    %v3658 = vld [vmem:[%s3649 + $0x40] sm:$0xff]
    %v3659 = vld [vmem:[%s3649 + $0x48] sm:$0xff]
    %v3660 = vld [vmem:[%s3649 + $0x50] sm:$0xff]
    %v3661 = vld [vmem:[%s3649 + $0x58] sm:$0xff]
    %v3662 = vld [vmem:[%s3649 + $0x60] sm:$0xff]
    %v3663 = vld [vmem:[%s3649 + $0x68] sm:$0xff]
    %v3664 = vld [vmem:[%s3649 + $0x70] sm:$0xff]
    %v3665 = vld [vmem:[%s3649 + $0x78] sm:$0xff]
    %v3666 = vld [vmem:[%s3649 + $0x80] sm:$0xff]
    %v3667 = vld [vmem:[%s3649 + $0x88] sm:$0xff]
    %v3668 = vld [vmem:[%s3649 + $0x90] sm:$0xff]
    %v3669 = vld [vmem:[%s3649 + $0x98] sm:$0xff]
    %v3670 = vld [vmem:[%s3649 + $0xa0] sm:$0xff]
    %v3671 = vld [vmem:[%s3649 + $0xa8] sm:$0xff]
    %v3672 = vld [vmem:[%s3649 + $0xb0] sm:$0xff]
    %v3673 = vld [vmem:[%s3649 + $0xb8] sm:$0xff]
    %v3674 = vld [vmem:[%s3649 + $0xc0] sm:$0xff]
    %v3675 = vld [vmem:[%s3649 + $0xc8] sm:$0xff]
    %v3676 = vld [vmem:[%s3649 + $0xd0] sm:$0xff]
    %v3677 = vld [vmem:[%s3649 + $0xd8] sm:$0xff]
    %v3678 = vld [vmem:[%s3649 + $0xe0] sm:$0xff]
    %v3679 = vld [vmem:[%s3649 + $0xe8] sm:$0xff]
    %v3680 = vld [vmem:[%s3649 + $0xf0] sm:$0xff]
    %v3681 = vld [vmem:[%s3649 + $0xf8] sm:$0xff]
    %v3682 = vld [vmem:[%s3649 + $0x100] sm:$0xff]
    %v3683 = vld [vmem:[%s3649 + $0x108] sm:$0xff]
    %v3684 = vld [vmem:[%s3649 + $0x110] sm:$0xff]
    %v3685 = vld [vmem:[%s3649 + $0x118] sm:$0xff]
    %v3686 = vld [vmem:[%s3649 + $0x120] sm:$0xff]
    %v3687 = vld [vmem:[%s3649 + $0x128] sm:$0xff]
    %v3688 = vld [vmem:[%s3649 + $0x130] sm:$0xff]
    %v3689 = vld [vmem:[%s3649 + $0x138] sm:$0xff]
    %v3690 = vld [vmem:[%s3649 + $0x140] sm:$0xff]
    %v3691 = vld [vmem:[%s3649 + $0x148] sm:$0xff]
    %v3692 = vld [vmem:[%s3649 + $0x150] sm:$0xff]
    %v3693 = vld [vmem:[%s3649 + $0x158] sm:$0xff]
    %v3694 = vld [vmem:[%s3649 + $0x160] sm:$0xff]
    %v3695 = vld [vmem:[%s3649 + $0x168] sm:$0xff]
    %v3696 = vld [vmem:[%s3649 + $0x170] sm:$0xff]
    %v3697 = vld [vmem:[%s3649 + $0x178] sm:$0xff]
    %v3698 = vld [vmem:[%s3649 + $0x180] sm:$0xff]
    %v3699 = vld [vmem:[%s3649 + $0x188] sm:$0xff]
    %v3700 = vld [vmem:[%s3649 + $0x190] sm:$0xff]
    %v3701 = vld [vmem:[%s3649 + $0x198] sm:$0xff]
    %v3702 = vld [vmem:[%s3649 + $0x1a0] sm:$0xff]
    %v3703 = vld [vmem:[%s3649 + $0x1a8] sm:$0xff]
    %v3704 = vld [vmem:[%s3649 + $0x1b0] sm:$0xff]
    %v3705 = vld [vmem:[%s3649 + $0x1b8] sm:$0xff]
    %v3706 = vld [vmem:[%s3649 + $0x1c0] sm:$0xff]
    %v3707 = vld [vmem:[%s3649 + $0x1c8] sm:$0xff]
    %v3708 = vld [vmem:[%s3649 + $0x1d0] sm:$0xff]
    %v3709 = vld [vmem:[%s3649 + $0x1d8] sm:$0xff]
    %v3710 = vld [vmem:[%s3649 + $0x1e0] sm:$0xff]
    %v3711 = vld [vmem:[%s3649 + $0x1e8] sm:$0xff]
    %v3712 = vld [vmem:[%s3649 + $0x1f0] sm:$0xff]
    %v3713 = vld [vmem:[%s3649 + $0x1f8] sm:$0xff]
    %v3714 = vld [vmem:[%s3649 + $0x200] sm:$0xff]
    %v3715 = vld [vmem:[%s3649 + $0x208] sm:$0xff]
    %v3716 = vld [vmem:[%s3649 + $0x210] sm:$0xff]
    %v3717 = vld [vmem:[%s3649 + $0x218] sm:$0xff]
    %v3718 = vld [vmem:[%s3649 + $0x220] sm:$0xff]
    %v3719 = vld [vmem:[%s3649 + $0x228] sm:$0xff]
    %v3720 = vld [vmem:[%s3649 + $0x230] sm:$0xff]
    %v3721 = vld [vmem:[%s3649 + $0x238] sm:$0xff]
    %v3722 = vld [vmem:[%s3649 + $0x240] sm:$0xff]
    %v3723 = vld [vmem:[%s3649 + $0x248] sm:$0xff]
    %v3724 = vld [vmem:[%s3649 + $0x250] sm:$0xff]
    %v3725 = vld [vmem:[%s3649 + $0x258] sm:$0xff]
    %v3726 = vld [vmem:[%s3649 + $0x260] sm:$0xff]
    %v3727 = vld [vmem:[%s3649 + $0x268] sm:$0xff]
    %v3728 = vld [vmem:[%s3649 + $0x270] sm:$0xff]
    %v3729 = vld [vmem:[%s3649 + $0x278] sm:$0xff]
    %v3730 = vld [vmem:[%s3649 + $0x280] sm:$0xff]
    %v3731 = vld [vmem:[%s3649 + $0x288] sm:$0xff]
    %v3732 = vld [vmem:[%s3649 + $0x290] sm:$0xff]
    %v3733 = vld [vmem:[%s3649 + $0x298] sm:$0xff]
    %v3734 = vld [vmem:[%s3649 + $0x2a0] sm:$0xff]
    %v3735 = vld [vmem:[%s3649 + $0x2a8] sm:$0xff]
    %v3736 = vld [vmem:[%s3649 + $0x2b0] sm:$0xff]
    %v3737 = vld [vmem:[%s3649 + $0x2b8] sm:$0xff]
    %v3738 = vld [vmem:[%s3649 + $0x2c0] sm:$0xff]
    %v3739 = vld [vmem:[%s3649 + $0x2c8] sm:$0xff]
    %v3740 = vld [vmem:[%s3649 + $0x2d0] sm:$0xff]
    %v3741 = vld [vmem:[%s3649 + $0x2d8] sm:$0xff]
    %v3742 = vld [vmem:[%s3649 + $0x2e0] sm:$0xff]
    %v3743 = vld [vmem:[%s3649 + $0x2e8] sm:$0xff]
    %v3744 = vld [vmem:[%s3649 + $0x2f0] sm:$0xff]
    %v3745 = vld [vmem:[%s3649 + $0x2f8] sm:$0xff]
    %v3746 = vld [vmem:[%s3649 + $0x300] sm:$0xff]
    %v3747 = vld [vmem:[%s3649 + $0x308] sm:$0xff]
    %v3748 = vld [vmem:[%s3649 + $0x310] sm:$0xff]
    %v3749 = vld [vmem:[%s3649 + $0x318] sm:$0xff]
    %v3750 = vld [vmem:[%s3649 + $0x320] sm:$0xff]
    %v3751 = vld [vmem:[%s3649 + $0x328] sm:$0xff]
    %v3752 = vld [vmem:[%s3649 + $0x330] sm:$0xff]
    %v3753 = vld [vmem:[%s3649 + $0x338] sm:$0xff]
    %3756 = vst [vmem:[#allocation1] ss:$4 sm:$0xff] %v3647
    %s3757 = scalar_lea.vmem [#allocation1], 32
    %3758 = vst [vmem:[%s3757] ss:$4 sm:$0xff] %v3648
    %v3759 = vld.sshfl [vmem:[#allocation1] sm:$0xff pattern:$0x73625140]
    %v3760 = vld.sshfl [vmem:[#allocation1 + $0x8] sm:$0xff pattern:$0x73625140]
    %v3761 = vld.sshfl [vmem:[#allocation1 + $0x10] sm:$0xff pattern:$0x73625140]
    %v3762 = vld.sshfl [vmem:[#allocation1 + $0x18] sm:$0xff pattern:$0x73625140]
    %v3763 = vld.sshfl [vmem:[#allocation1 + $0x20] sm:$0xff pattern:$0x73625140]
    %v3764 = vld.sshfl [vmem:[#allocation1 + $0x28] sm:$0xff pattern:$0x73625140]
    %v3765 = vld.sshfl [vmem:[#allocation1 + $0x30] sm:$0xff pattern:$0x73625140]
    %v3772 = vsel %vm177, %v3765, 0
    %3774 = vmatpush.msra.mxu0 %v3665
    %3775 = vmatpush.msra.mxu0 %v3664
    %3776 = vmatpush.msra.mxu0 %v3663
    %3777 = vmatpush.msra.mxu0 %v3662
    %3778 = vmatpush.msra.mxu0 %v3661
    %3779 = vmatpush.msra.mxu0 %v3660
    %3780 = vmatpush.msra.mxu0 %v3659
    %3781 = vmatpush.msra.mxu0 %v3658
    %3782 = vmatpush.msra.mxu0 %v3657
    %3783 = vmatpush.msra.mxu0 %v3656
    %3784 = vmatpush.msra.mxu0 %v3655
    %3785 = vmatpush.msra.mxu0 %v3654
    %3786 = vmatpush.msra.mxu0 %v3653
    %3787 = vmatpush.msra.mxu0 %v3652
    %3788 = vmatpush.msra.mxu0 %v3651
    %3789 = vmatpush.msra.mxu0 %v3650
    %3790 = vmatmul.f32.gmra.mxu0 %v3759
    %v3791 = vpop.f32.mrf.mxu0
    %v3792 = vadd.f32 0.0, %v3791
    %3793 = vdwg.mxu0
    %3794 = vmatpush.msra.mxu0 %v3681
    %3795 = vmatpush.msra.mxu0 %v3680
    %3796 = vmatpush.msra.mxu0 %v3679
    %3797 = vmatpush.msra.mxu0 %v3678
    %3798 = vmatpush.msra.mxu0 %v3677
    %3799 = vmatpush.msra.mxu0 %v3676
    %3800 = vmatpush.msra.mxu0 %v3675
    %3801 = vmatpush.msra.mxu0 %v3674
    %3802 = vmatpush.msra.mxu0 %v3673
    %3803 = vmatpush.msra.mxu0 %v3672
    %3804 = vmatpush.msra.mxu0 %v3671
    %3805 = vmatpush.msra.mxu0 %v3670
    %3806 = vmatpush.msra.mxu0 %v3669
    %3807 = vmatpush.msra.mxu0 %v3668
    %3808 = vmatpush.msra.mxu0 %v3667
    %3809 = vmatpush.msra.mxu0 %v3666
    %3810 = vmatmul.f32.gmra.mxu0 %v3760
    %v3811 = vpop.f32.mrf.mxu0
    %v3812 = vadd.f32 %v3792, %v3811
    %3813 = vdwg.mxu0
    %3814 = vmatpush.msra.mxu0 %v3697
    %3815 = vmatpush.msra.mxu0 %v3696
    %3816 = vmatpush.msra.mxu0 %v3695
    %3817 = vmatpush.msra.mxu0 %v3694
    %3818 = vmatpush.msra.mxu0 %v3693
    %3819 = vmatpush.msra.mxu0 %v3692
    %3820 = vmatpush.msra.mxu0 %v3691
    %3821 = vmatpush.msra.mxu0 %v3690
    %3822 = vmatpush.msra.mxu0 %v3689
    %3823 = vmatpush.msra.mxu0 %v3688
    %3824 = vmatpush.msra.mxu0 %v3687
    %3825 = vmatpush.msra.mxu0 %v3686
    %3826 = vmatpush.msra.mxu0 %v3685
    %3827 = vmatpush.msra.mxu0 %v3684
    %3828 = vmatpush.msra.mxu0 %v3683
    %3829 = vmatpush.msra.mxu0 %v3682
    %3830 = vmatmul.f32.gmra.mxu0 %v3761
    %v3831 = vpop.f32.mrf.mxu0
    %v3832 = vadd.f32 %v3812, %v3831
    %3833 = vdwg.mxu0
    %3834 = vmatpush.msra.mxu0 %v3713
    %3835 = vmatpush.msra.mxu0 %v3712
    %3836 = vmatpush.msra.mxu0 %v3711
    %3837 = vmatpush.msra.mxu0 %v3710
    %3838 = vmatpush.msra.mxu0 %v3709
    %3839 = vmatpush.msra.mxu0 %v3708
    %3840 = vmatpush.msra.mxu0 %v3707
    %3841 = vmatpush.msra.mxu0 %v3706
    %3842 = vmatpush.msra.mxu0 %v3705
    %3843 = vmatpush.msra.mxu0 %v3704
    %3844 = vmatpush.msra.mxu0 %v3703
    %3845 = vmatpush.msra.mxu0 %v3702
    %3846 = vmatpush.msra.mxu0 %v3701
    %3847 = vmatpush.msra.mxu0 %v3700
    %3848 = vmatpush.msra.mxu0 %v3699
    %3849 = vmatpush.msra.mxu0 %v3698
    %3850 = vmatmul.f32.gmra.mxu0 %v3762
    %v3851 = vpop.f32.mrf.mxu0
    %v3852 = vadd.f32 %v3832, %v3851
    %3853 = vdwg.mxu0
    %3854 = vmatpush.msra.mxu0 %v3729
    %3855 = vmatpush.msra.mxu0 %v3728
    %3856 = vmatpush.msra.mxu0 %v3727
    %3857 = vmatpush.msra.mxu0 %v3726
    %3858 = vmatpush.msra.mxu0 %v3725
    %3859 = vmatpush.msra.mxu0 %v3724
    %3860 = vmatpush.msra.mxu0 %v3723
    %3861 = vmatpush.msra.mxu0 %v3722
    %3862 = vmatpush.msra.mxu0 %v3721
    %3863 = vmatpush.msra.mxu0 %v3720
    %3864 = vmatpush.msra.mxu0 %v3719
    %3865 = vmatpush.msra.mxu0 %v3718
    %3866 = vmatpush.msra.mxu0 %v3717
    %3867 = vmatpush.msra.mxu0 %v3716
    %3868 = vmatpush.msra.mxu0 %v3715
    %3869 = vmatpush.msra.mxu0 %v3714
    %3870 = vmatmul.f32.gmra.mxu0 %v3763
    %v3871 = vpop.f32.mrf.mxu0
    %v3872 = vadd.f32 %v3852, %v3871
    %3873 = vdwg.mxu0
    %3874 = vmatpush.msra.mxu0 %v3745
    %3875 = vmatpush.msra.mxu0 %v3744
    %3876 = vmatpush.msra.mxu0 %v3743
    %3877 = vmatpush.msra.mxu0 %v3742
    %3878 = vmatpush.msra.mxu0 %v3741
    %3879 = vmatpush.msra.mxu0 %v3740
    %3880 = vmatpush.msra.mxu0 %v3739
    %3881 = vmatpush.msra.mxu0 %v3738
    %3882 = vmatpush.msra.mxu0 %v3737
    %3883 = vmatpush.msra.mxu0 %v3736
    %3884 = vmatpush.msra.mxu0 %v3735
    %3885 = vmatpush.msra.mxu0 %v3734
    %3886 = vmatpush.msra.mxu0 %v3733
    %3887 = vmatpush.msra.mxu0 %v3732
    %3888 = vmatpush.msra.mxu0 %v3731
    %3889 = vmatpush.msra.mxu0 %v3730
    %3890 = vmatmul.f32.gmra.mxu0 %v3764
    %v3891 = vpop.f32.mrf.mxu0
    %v3892 = vadd.f32 %v3872, %v3891
    %3893 = vdwg.mxu0
    %3894 = vmatpush.msra.mxu0 0.0
    %3895 = vmatpush.msra.mxu0 0.0
    %3896 = vmatpush.msra.mxu0 0.0
    %3897 = vmatpush.msra.mxu0 0.0
    %3898 = vmatpush.msra.mxu0 0.0
    %3899 = vmatpush.msra.mxu0 0.0
    %3900 = vmatpush.msra.mxu0 0.0
    %3901 = vmatpush.msra.mxu0 0.0
    %3902 = vmatpush.msra.mxu0 %v3753
    %3903 = vmatpush.msra.mxu0 %v3752
    %3904 = vmatpush.msra.mxu0 %v3751
    %3905 = vmatpush.msra.mxu0 %v3750
    %3906 = vmatpush.msra.mxu0 %v3749
    %3907 = vmatpush.msra.mxu0 %v3748
    %3908 = vmatpush.msra.mxu0 %v3747
    %3909 = vmatpush.msra.mxu0 %v3746
    %3910 = vmatmul.f32.gmra.mxu0 %v3772
    %v3911 = vpop.f32.mrf.mxu0
    %v3912 = vadd.f32 %v3892, %v3911
    %3913 = vdwg.mxu0
    %v3914 = vadd.f32 %v3486, %v3912
    %s3915 = sld [smem:[#allocation5 + $0x9]]
    %s3916 = sld [smem:[#allocation2 + $0x9]]
    %v3917 = vstv %s3916
    %v3918 = vmul.f32 %v3917, %v48
    %v3919 = vmul.f32 %v3917, %v49
    %v3920 = vstv %s3915
    %v3921 = vadd.f32 %v3920, %v3918
    %v3922 = vadd.f32 %v3920, %v3919
    %s3923 = sld [smem:[#allocation2 + $0x89]]
    %v3924 = vstv %s3923
    %v3925 = vmul.f32 %v3924, %v48
    %v3926 = vmul.f32 %v3924, %v49
    %3929 = vrot.lane.b32.xlu0 %v3925, 127
    %v3930 = vpop.permute.xlu0 %3929
    %3931 = vrot.lane.b32.xlu0 %v3926, 127
    %v3932 = vpop.permute.xlu0 %3931
    %v3933 = vrot.slane %v3930, 2
    %v3934 = vrot.slane %v3932, 2
    %v3935 = vsel %vm75, %v3933, %v3934
    %v3936 = vsel %vm77, %v3930, %v3935
    %v3937 = vsel %vm77, %v3932, %v3934
    %v3940 = vadd.f32 %v3921, %v3936
    %v3941 = vadd.f32 %v3922, %v3937
    %s3942 = sld [smem:[#allocation2 + $0x109]]
    %v3943 = vstv %s3942
    %v3944 = vmul.f32 %v3943, %v48
    %v3945 = vmul.f32 %v3943, %v49
    %3948 = vrot.lane.b32.xlu0 %v3944, 126
    %v3949 = vpop.permute.xlu0 %3948
    %3950 = vrot.lane.b32.xlu0 %v3945, 126
    %v3951 = vpop.permute.xlu0 %3950
    %v3952 = vrot.slane %v3949, 2
    %v3953 = vrot.slane %v3951, 2
    %v3954 = vsel %vm75, %v3952, %v3953
    %v3955 = vsel %vm97, %v3949, %v3954
    %v3956 = vsel %vm97, %v3951, %v3953
    %v3959 = vadd.f32 %v3940, %v3955
    %v3960 = vadd.f32 %v3941, %v3956
    %s3961 = sld [smem:[#allocation2 + $0x189]]
    %v3962 = vstv %s3961
    %v3963 = vmul.f32 %v3962, %v48
    %v3964 = vmul.f32 %v3962, %v49
    %3967 = vrot.lane.b32.xlu0 %v3963, 96
    %v3968 = vpop.permute.xlu0 %3967
    %3969 = vrot.lane.b32.xlu0 %v3964, 96
    %v3970 = vpop.permute.xlu0 %3969
    %v3971 = vrot.slane %v3968, 2
    %v3972 = vrot.slane %v3970, 2
    %v3973 = vsel %vm75, %v3971, %v3972
    %v3974 = vsel %vm117, %v3968, %v3973
    %v3975 = vsel %vm117, %v3970, %v3972
    %v3978 = vadd.f32 %v3959, %v3974
    %v3979 = vadd.f32 %v3960, %v3975
    %s3980 = sld [smem:[#allocation2 + $0x209]]
    %v3981 = vstv %s3980
    %v3982 = vmul.f32 %v3981, %v48
    %v3983 = vmul.f32 %v3981, %v49
    %3986 = vrot.lane.b32.xlu0 %v3982, 95
    %v3987 = vpop.permute.xlu0 %3986
    %3988 = vrot.lane.b32.xlu0 %v3983, 95
    %v3989 = vpop.permute.xlu0 %3988
    %v3990 = vrot.slane %v3987, 2
    %v3991 = vrot.slane %v3989, 2
    %v3992 = vsel %vm75, %v3990, %v3991
    %v3993 = vsel %vm137, %v3987, %v3992
    %v3994 = vsel %vm137, %v3989, %v3991
    %v3997 = vadd.f32 %v3978, %v3993
    %v3998 = vadd.f32 %v3979, %v3994
    %s3999 = sld [smem:[#allocation2 + $0x289]]
    %v4000 = vstv %s3999
    %v4001 = vmul.f32 %v4000, %v48
    %v4002 = vmul.f32 %v4000, %v49
    %4005 = vrot.lane.b32.xlu0 %v4001, 94
    %v4006 = vpop.permute.xlu0 %4005
    %4007 = vrot.lane.b32.xlu0 %v4002, 94
    %v4008 = vpop.permute.xlu0 %4007
    %v4009 = vrot.slane %v4006, 2
    %v4010 = vrot.slane %v4008, 2
    %v4011 = vsel %vm75, %v4009, %v4010
    %v4012 = vsel %vm157, %v4006, %v4011
    %v4013 = vsel %vm157, %v4008, %v4010
    %v4016 = vadd.f32 %v3997, %v4012
    %v4017 = vadd.f32 %v3998, %v4013
    %s4018 = sld [smem:[#allocation2 + $0x309]]
    %v4019 = vstv %s4018
    %v4020 = vmul.f32 %v4019, %v48
    %v4021 = vmul.f32 %v4019, %v49
    %4024 = vrot.lane.b32.xlu0 %v4020, 64
    %v4025 = vpop.permute.xlu0 %4024
    %4026 = vrot.lane.b32.xlu0 %v4021, 64
    %v4027 = vpop.permute.xlu0 %4026
    %v4028 = vrot.slane %v4025, 2
    %v4029 = vrot.slane %v4027, 2
    %v4030 = vsel %vm75, %v4028, %v4029
    %v4031 = vsel %vm177, %v4025, %v4030
    %v4032 = vsel %vm177, %v4027, %v4029
    %v4035 = vadd.f32 %v4016, %v4031
    %v4036 = vadd.f32 %v4017, %v4032
    %s4037 = sld [smem:[#allocation2 + $0x389]]
    %v4038 = vstv %s4037
    %v4039 = vmul.f32 %v4038, %v48
    %v4040 = vmul.f32 %v4038, %v50
    %4043 = vrot.lane.b32.xlu0 %v4039, 63
    %v4044 = vpop.permute.xlu0 %4043
    %4045 = vrot.lane.b32.xlu0 %v4040, 63
    %v4046 = vpop.permute.xlu0 %4045
    %v4047 = vrot.slane %v4044, 2
    %v4048 = vrot.slane %v4046, 2
    %v4049 = vsel %vm75, %v4047, %v4048
    %v4050 = vsel %vm197, %v4044, %v4049
    %v4051 = vsel %vm197, %v4046, %v4048
    %v4054 = vadd.f32 %v4035, %v4050
    %v4055 = vadd.f32 %v4036, %v4051
    %s4056 = sld [smem:[#allocation2 + $0x409]]
    %v4057 = vstv %s4056
    %v4058 = vmul.f32 %v4057, %v48
    %v4059 = vmul.f32 %v4057, %v50
    %4062 = vrot.lane.b32.xlu0 %v4058, 62
    %v4063 = vpop.permute.xlu0 %4062
    %4064 = vrot.lane.b32.xlu0 %v4059, 62
    %v4065 = vpop.permute.xlu0 %4064
    %v4066 = vrot.slane %v4063, 2
    %v4067 = vrot.slane %v4065, 2
    %v4068 = vsel %vm75, %v4066, %v4067
    %v4069 = vsel %vm217, %v4063, %v4068
    %v4070 = vsel %vm217, %v4065, %v4067
    %v4073 = vadd.f32 %v4054, %v4069
    %v4074 = vadd.f32 %v4055, %v4070
    %v4075 = vmax.f32 %v4073, 0.0
    %v4076 = vmax.f32 %v4074, 0.0
    %s4077 = scalar_lea.vmem %s3, 7488
    %v4078 = vld [vmem:[%s4077] sm:$0xff]
    %v4079 = vld [vmem:[%s4077 + $0x8] sm:$0xff]
    %v4080 = vld [vmem:[%s4077 + $0x10] sm:$0xff]
    %v4081 = vld [vmem:[%s4077 + $0x18] sm:$0xff]
    %v4082 = vld [vmem:[%s4077 + $0x20] sm:$0xff]
    %v4083 = vld [vmem:[%s4077 + $0x28] sm:$0xff]
    %v4084 = vld [vmem:[%s4077 + $0x30] sm:$0xff]
    %v4085 = vld [vmem:[%s4077 + $0x38] sm:$0xff]
    %v4086 = vld [vmem:[%s4077 + $0x40] sm:$0xff]
    %v4087 = vld [vmem:[%s4077 + $0x48] sm:$0xff]
    %v4088 = vld [vmem:[%s4077 + $0x50] sm:$0xff]
    %v4089 = vld [vmem:[%s4077 + $0x58] sm:$0xff]
    %v4090 = vld [vmem:[%s4077 + $0x60] sm:$0xff]
    %v4091 = vld [vmem:[%s4077 + $0x68] sm:$0xff]
    %v4092 = vld [vmem:[%s4077 + $0x70] sm:$0xff]
    %v4093 = vld [vmem:[%s4077 + $0x78] sm:$0xff]
    %v4094 = vld [vmem:[%s4077 + $0x80] sm:$0xff]
    %v4095 = vld [vmem:[%s4077 + $0x88] sm:$0xff]
    %v4096 = vld [vmem:[%s4077 + $0x90] sm:$0xff]
    %v4097 = vld [vmem:[%s4077 + $0x98] sm:$0xff]
    %v4098 = vld [vmem:[%s4077 + $0xa0] sm:$0xff]
    %v4099 = vld [vmem:[%s4077 + $0xa8] sm:$0xff]
    %v4100 = vld [vmem:[%s4077 + $0xb0] sm:$0xff]
    %v4101 = vld [vmem:[%s4077 + $0xb8] sm:$0xff]
    %v4102 = vld [vmem:[%s4077 + $0xc0] sm:$0xff]
    %v4103 = vld [vmem:[%s4077 + $0xc8] sm:$0xff]
    %v4104 = vld [vmem:[%s4077 + $0xd0] sm:$0xff]
    %v4105 = vld [vmem:[%s4077 + $0xd8] sm:$0xff]
    %v4106 = vld [vmem:[%s4077 + $0xe0] sm:$0xff]
    %v4107 = vld [vmem:[%s4077 + $0xe8] sm:$0xff]
    %v4108 = vld [vmem:[%s4077 + $0xf0] sm:$0xff]
    %v4109 = vld [vmem:[%s4077 + $0xf8] sm:$0xff]
    %v4110 = vld [vmem:[%s4077 + $0x100] sm:$0xff]
    %v4111 = vld [vmem:[%s4077 + $0x108] sm:$0xff]
    %v4112 = vld [vmem:[%s4077 + $0x110] sm:$0xff]
    %v4113 = vld [vmem:[%s4077 + $0x118] sm:$0xff]
    %v4114 = vld [vmem:[%s4077 + $0x120] sm:$0xff]
    %v4115 = vld [vmem:[%s4077 + $0x128] sm:$0xff]
    %v4116 = vld [vmem:[%s4077 + $0x130] sm:$0xff]
    %v4117 = vld [vmem:[%s4077 + $0x138] sm:$0xff]
    %v4118 = vld [vmem:[%s4077 + $0x140] sm:$0xff]
    %v4119 = vld [vmem:[%s4077 + $0x148] sm:$0xff]
    %v4120 = vld [vmem:[%s4077 + $0x150] sm:$0xff]
    %v4121 = vld [vmem:[%s4077 + $0x158] sm:$0xff]
    %v4122 = vld [vmem:[%s4077 + $0x160] sm:$0xff]
    %v4123 = vld [vmem:[%s4077 + $0x168] sm:$0xff]
    %v4124 = vld [vmem:[%s4077 + $0x170] sm:$0xff]
    %v4125 = vld [vmem:[%s4077 + $0x178] sm:$0xff]
    %v4126 = vld [vmem:[%s4077 + $0x180] sm:$0xff]
    %v4127 = vld [vmem:[%s4077 + $0x188] sm:$0xff]
    %v4128 = vld [vmem:[%s4077 + $0x190] sm:$0xff]
    %v4129 = vld [vmem:[%s4077 + $0x198] sm:$0xff]
    %v4130 = vld [vmem:[%s4077 + $0x1a0] sm:$0xff]
    %v4131 = vld [vmem:[%s4077 + $0x1a8] sm:$0xff]
    %v4132 = vld [vmem:[%s4077 + $0x1b0] sm:$0xff]
    %v4133 = vld [vmem:[%s4077 + $0x1b8] sm:$0xff]
    %v4134 = vld [vmem:[%s4077 + $0x1c0] sm:$0xff]
    %v4135 = vld [vmem:[%s4077 + $0x1c8] sm:$0xff]
    %v4136 = vld [vmem:[%s4077 + $0x1d0] sm:$0xff]
    %v4137 = vld [vmem:[%s4077 + $0x1d8] sm:$0xff]
    %v4138 = vld [vmem:[%s4077 + $0x1e0] sm:$0xff]
    %v4139 = vld [vmem:[%s4077 + $0x1e8] sm:$0xff]
    %v4140 = vld [vmem:[%s4077 + $0x1f0] sm:$0xff]
    %v4141 = vld [vmem:[%s4077 + $0x1f8] sm:$0xff]
    %v4142 = vld [vmem:[%s4077 + $0x200] sm:$0xff]
    %v4143 = vld [vmem:[%s4077 + $0x208] sm:$0xff]
    %v4144 = vld [vmem:[%s4077 + $0x210] sm:$0xff]
    %v4145 = vld [vmem:[%s4077 + $0x218] sm:$0xff]
    %v4146 = vld [vmem:[%s4077 + $0x220] sm:$0xff]
    %v4147 = vld [vmem:[%s4077 + $0x228] sm:$0xff]
    %v4148 = vld [vmem:[%s4077 + $0x230] sm:$0xff]
    %v4149 = vld [vmem:[%s4077 + $0x238] sm:$0xff]
    %v4150 = vld [vmem:[%s4077 + $0x240] sm:$0xff]
    %v4151 = vld [vmem:[%s4077 + $0x248] sm:$0xff]
    %v4152 = vld [vmem:[%s4077 + $0x250] sm:$0xff]
    %v4153 = vld [vmem:[%s4077 + $0x258] sm:$0xff]
    %v4154 = vld [vmem:[%s4077 + $0x260] sm:$0xff]
    %v4155 = vld [vmem:[%s4077 + $0x268] sm:$0xff]
    %v4156 = vld [vmem:[%s4077 + $0x270] sm:$0xff]
    %v4157 = vld [vmem:[%s4077 + $0x278] sm:$0xff]
    %v4158 = vld [vmem:[%s4077 + $0x280] sm:$0xff]
    %v4159 = vld [vmem:[%s4077 + $0x288] sm:$0xff]
    %v4160 = vld [vmem:[%s4077 + $0x290] sm:$0xff]
    %v4161 = vld [vmem:[%s4077 + $0x298] sm:$0xff]
    %v4162 = vld [vmem:[%s4077 + $0x2a0] sm:$0xff]
    %v4163 = vld [vmem:[%s4077 + $0x2a8] sm:$0xff]
    %v4164 = vld [vmem:[%s4077 + $0x2b0] sm:$0xff]
    %v4165 = vld [vmem:[%s4077 + $0x2b8] sm:$0xff]
    %v4166 = vld [vmem:[%s4077 + $0x2c0] sm:$0xff]
    %v4167 = vld [vmem:[%s4077 + $0x2c8] sm:$0xff]
    %v4168 = vld [vmem:[%s4077 + $0x2d0] sm:$0xff]
    %v4169 = vld [vmem:[%s4077 + $0x2d8] sm:$0xff]
    %v4170 = vld [vmem:[%s4077 + $0x2e0] sm:$0xff]
    %v4171 = vld [vmem:[%s4077 + $0x2e8] sm:$0xff]
    %v4172 = vld [vmem:[%s4077 + $0x2f0] sm:$0xff]
    %v4173 = vld [vmem:[%s4077 + $0x2f8] sm:$0xff]
    %v4174 = vld [vmem:[%s4077 + $0x300] sm:$0xff]
    %v4175 = vld [vmem:[%s4077 + $0x308] sm:$0xff]
    %v4176 = vld [vmem:[%s4077 + $0x310] sm:$0xff]
    %v4177 = vld [vmem:[%s4077 + $0x318] sm:$0xff]
    %v4178 = vld [vmem:[%s4077 + $0x320] sm:$0xff]
    %v4179 = vld [vmem:[%s4077 + $0x328] sm:$0xff]
    %v4180 = vld [vmem:[%s4077 + $0x330] sm:$0xff]
    %v4181 = vld [vmem:[%s4077 + $0x338] sm:$0xff]
    %4184 = vst [vmem:[#allocation1] ss:$4 sm:$0xff] %v4075
    %s4185 = scalar_lea.vmem [#allocation1], 32
    %4186 = vst [vmem:[%s4185] ss:$4 sm:$0xff] %v4076
    %v4187 = vld.sshfl [vmem:[#allocation1] sm:$0xff pattern:$0x73625140]
    %v4188 = vld.sshfl [vmem:[#allocation1 + $0x8] sm:$0xff pattern:$0x73625140]
    %v4189 = vld.sshfl [vmem:[#allocation1 + $0x10] sm:$0xff pattern:$0x73625140]
    %v4190 = vld.sshfl [vmem:[#allocation1 + $0x18] sm:$0xff pattern:$0x73625140]
    %v4191 = vld.sshfl [vmem:[#allocation1 + $0x20] sm:$0xff pattern:$0x73625140]
    %v4192 = vld.sshfl [vmem:[#allocation1 + $0x28] sm:$0xff pattern:$0x73625140]
    %v4193 = vld.sshfl [vmem:[#allocation1 + $0x30] sm:$0xff pattern:$0x73625140]
    %v4200 = vsel %vm177, %v4193, 0
    %4202 = vmatpush.msra.mxu0 %v4093
    %4203 = vmatpush.msra.mxu0 %v4092
    %4204 = vmatpush.msra.mxu0 %v4091
    %4205 = vmatpush.msra.mxu0 %v4090
    %4206 = vmatpush.msra.mxu0 %v4089
    %4207 = vmatpush.msra.mxu0 %v4088
    %4208 = vmatpush.msra.mxu0 %v4087
    %4209 = vmatpush.msra.mxu0 %v4086
    %4210 = vmatpush.msra.mxu0 %v4085
    %4211 = vmatpush.msra.mxu0 %v4084
    %4212 = vmatpush.msra.mxu0 %v4083
    %4213 = vmatpush.msra.mxu0 %v4082
    %4214 = vmatpush.msra.mxu0 %v4081
    %4215 = vmatpush.msra.mxu0 %v4080
    %4216 = vmatpush.msra.mxu0 %v4079
    %4217 = vmatpush.msra.mxu0 %v4078
    %4218 = vmatmul.f32.gmra.mxu0 %v4187
    %v4219 = vpop.f32.mrf.mxu0
    %v4220 = vadd.f32 0.0, %v4219
    %4221 = vdwg.mxu0
    %4222 = vmatpush.msra.mxu0 %v4109
    %4223 = vmatpush.msra.mxu0 %v4108
    %4224 = vmatpush.msra.mxu0 %v4107
    %4225 = vmatpush.msra.mxu0 %v4106
    %4226 = vmatpush.msra.mxu0 %v4105
    %4227 = vmatpush.msra.mxu0 %v4104
    %4228 = vmatpush.msra.mxu0 %v4103
    %4229 = vmatpush.msra.mxu0 %v4102
    %4230 = vmatpush.msra.mxu0 %v4101
    %4231 = vmatpush.msra.mxu0 %v4100
    %4232 = vmatpush.msra.mxu0 %v4099
    %4233 = vmatpush.msra.mxu0 %v4098
    %4234 = vmatpush.msra.mxu0 %v4097
    %4235 = vmatpush.msra.mxu0 %v4096
    %4236 = vmatpush.msra.mxu0 %v4095
    %4237 = vmatpush.msra.mxu0 %v4094
    %4238 = vmatmul.f32.gmra.mxu0 %v4188
    %v4239 = vpop.f32.mrf.mxu0
    %v4240 = vadd.f32 %v4220, %v4239
    %4241 = vdwg.mxu0
    %4242 = vmatpush.msra.mxu0 %v4125
    %4243 = vmatpush.msra.mxu0 %v4124
    %4244 = vmatpush.msra.mxu0 %v4123
    %4245 = vmatpush.msra.mxu0 %v4122
    %4246 = vmatpush.msra.mxu0 %v4121
    %4247 = vmatpush.msra.mxu0 %v4120
    %4248 = vmatpush.msra.mxu0 %v4119
    %4249 = vmatpush.msra.mxu0 %v4118
    %4250 = vmatpush.msra.mxu0 %v4117
    %4251 = vmatpush.msra.mxu0 %v4116
    %4252 = vmatpush.msra.mxu0 %v4115
    %4253 = vmatpush.msra.mxu0 %v4114
    %4254 = vmatpush.msra.mxu0 %v4113
    %4255 = vmatpush.msra.mxu0 %v4112
    %4256 = vmatpush.msra.mxu0 %v4111
    %4257 = vmatpush.msra.mxu0 %v4110
    %4258 = vmatmul.f32.gmra.mxu0 %v4189
    %v4259 = vpop.f32.mrf.mxu0
    %v4260 = vadd.f32 %v4240, %v4259
    %4261 = vdwg.mxu0
    %4262 = vmatpush.msra.mxu0 %v4141
    %4263 = vmatpush.msra.mxu0 %v4140
    %4264 = vmatpush.msra.mxu0 %v4139
    %4265 = vmatpush.msra.mxu0 %v4138
    %4266 = vmatpush.msra.mxu0 %v4137
    %4267 = vmatpush.msra.mxu0 %v4136
    %4268 = vmatpush.msra.mxu0 %v4135
    %4269 = vmatpush.msra.mxu0 %v4134
    %4270 = vmatpush.msra.mxu0 %v4133
    %4271 = vmatpush.msra.mxu0 %v4132
    %4272 = vmatpush.msra.mxu0 %v4131
    %4273 = vmatpush.msra.mxu0 %v4130
    %4274 = vmatpush.msra.mxu0 %v4129
    %4275 = vmatpush.msra.mxu0 %v4128
    %4276 = vmatpush.msra.mxu0 %v4127
    %4277 = vmatpush.msra.mxu0 %v4126
    %4278 = vmatmul.f32.gmra.mxu0 %v4190
    %v4279 = vpop.f32.mrf.mxu0
    %v4280 = vadd.f32 %v4260, %v4279
    %4281 = vdwg.mxu0
    %4282 = vmatpush.msra.mxu0 %v4157
    %4283 = vmatpush.msra.mxu0 %v4156
    %4284 = vmatpush.msra.mxu0 %v4155
    %4285 = vmatpush.msra.mxu0 %v4154
    %4286 = vmatpush.msra.mxu0 %v4153
    %4287 = vmatpush.msra.mxu0 %v4152
    %4288 = vmatpush.msra.mxu0 %v4151
    %4289 = vmatpush.msra.mxu0 %v4150
    %4290 = vmatpush.msra.mxu0 %v4149
    %4291 = vmatpush.msra.mxu0 %v4148
    %4292 = vmatpush.msra.mxu0 %v4147
    %4293 = vmatpush.msra.mxu0 %v4146
    %4294 = vmatpush.msra.mxu0 %v4145
    %4295 = vmatpush.msra.mxu0 %v4144
    %4296 = vmatpush.msra.mxu0 %v4143
    %4297 = vmatpush.msra.mxu0 %v4142
    %4298 = vmatmul.f32.gmra.mxu0 %v4191
    %v4299 = vpop.f32.mrf.mxu0
    %v4300 = vadd.f32 %v4280, %v4299
    %4301 = vdwg.mxu0
    %4302 = vmatpush.msra.mxu0 %v4173
    %4303 = vmatpush.msra.mxu0 %v4172
    %4304 = vmatpush.msra.mxu0 %v4171
    %4305 = vmatpush.msra.mxu0 %v4170
    %4306 = vmatpush.msra.mxu0 %v4169
    %4307 = vmatpush.msra.mxu0 %v4168
    %4308 = vmatpush.msra.mxu0 %v4167
    %4309 = vmatpush.msra.mxu0 %v4166
    %4310 = vmatpush.msra.mxu0 %v4165
    %4311 = vmatpush.msra.mxu0 %v4164
    %4312 = vmatpush.msra.mxu0 %v4163
    %4313 = vmatpush.msra.mxu0 %v4162
    %4314 = vmatpush.msra.mxu0 %v4161
    %4315 = vmatpush.msra.mxu0 %v4160
    %4316 = vmatpush.msra.mxu0 %v4159
    %4317 = vmatpush.msra.mxu0 %v4158
    %4318 = vmatmul.f32.gmra.mxu0 %v4192
    %v4319 = vpop.f32.mrf.mxu0
    %v4320 = vadd.f32 %v4300, %v4319
    %4321 = vdwg.mxu0
    %4322 = vmatpush.msra.mxu0 0.0
    %4323 = vmatpush.msra.mxu0 0.0
    %4324 = vmatpush.msra.mxu0 0.0
    %4325 = vmatpush.msra.mxu0 0.0
    %4326 = vmatpush.msra.mxu0 0.0
    %4327 = vmatpush.msra.mxu0 0.0
    %4328 = vmatpush.msra.mxu0 0.0
    %4329 = vmatpush.msra.mxu0 0.0
    %4330 = vmatpush.msra.mxu0 %v4181
    %4331 = vmatpush.msra.mxu0 %v4180
    %4332 = vmatpush.msra.mxu0 %v4179
    %4333 = vmatpush.msra.mxu0 %v4178
    %4334 = vmatpush.msra.mxu0 %v4177
    %4335 = vmatpush.msra.mxu0 %v4176
    %4336 = vmatpush.msra.mxu0 %v4175
    %4337 = vmatpush.msra.mxu0 %v4174
    %4338 = vmatmul.f32.gmra.mxu0 %v4200
    %v4339 = vpop.f32.mrf.mxu0
    %v4340 = vadd.f32 %v4320, %v4339
    %4341 = vdwg.mxu0
    %v4342 = vadd.f32 %v3914, %v4340
    %vm4343 = vcmask 74752
    %4344 = vst.msk [vmem:[#allocation7] sm:$0x3] %vm4343, %v4342
    // Predicated region
    $region30: #{my_model1_forward.1} parent=1 // pred_check
      _
    $region31: #{my_model1_forward.1} parent=1 // pred_check_branch
      %4346 = sbr.rel (0) target = $region33
    $region32: #{my_model1_forward.1} parent=1 // pred_region
      %4348 = vsyncadd [#allocation3], 0
      %s4350 = sshll.u32 [#allocation7], 4
      %s4351 = int_to_ptr.vmem [resolvable:$true] %s4350
      %s4352 = sshll.u32 %s5, 4
      %s4353 = int_to_ptr.hbm [resolvable:$true] %s4352
      %4355 = dma.vmem_to_hbm [thread:$0]  %s4351, 32, %s4353, [#allocation3]
    $region33: #{my_model1_forward.1} parent=1 // pred_fallthru
      _
    // Predicated region
    $region34: #{my_model1_forward.1} parent=1 // pred_check
      _
    $region35: #{my_model1_forward.1} parent=1 // pred_check_branch
      %4357 = sbr.rel (0) target = $region37
    $region36: #{my_model1_forward.1} parent=1 // pred_region
      %4359 = dma.done [#allocation3], 32
    $region37: #{my_model1_forward.1} parent=1 // pred_fallthru
      _
    %4360 = vsyncpa [#allocation3], 1
    %4361 = vsyncpa [#allocation4], 1
    %4362 = vsyncpa [#allocation6], 1

</llo_original>
